<compile_context>
chip_gen: v6e
topology: v6e:2x2x1
jax: 0.10.0
libtpu: 0.0.40
codegen_flags: <defaults>
</compile_context>

<pallas_src>
import math
import numpy as np
import jax
import jax.numpy as jnp
from jax.experimental import pallas as pl
from jax.experimental.pallas import tpu as pltpu


# ----------------------------------------------------------------------------------
# Fourier basis matrices (host-side, parameter-sized, batch independent)
# ----------------------------------------------------------------------------------
def _rfft_basis(n_in, modes):
    """Real (Fr, Fi), shape (n_in, modes):  rfft(x)[..., :modes] == x@Fr + 1j*(x@Fi)."""
    t = np.arange(n_in)[:, None]
    k = np.arange(modes)[None, :]
    ang = 2.0 * np.pi * t * k / n_in
    return np.cos(ang).astype(np.float32), (-np.sin(ang)).astype(np.float32)


def _irfft_basis(n_coeff, n_out):
    """Real (Br, Bi), shape (n_coeff, n_out) such that
    irfft(Z, n=n_out) == Zr@Br + Zi@Bi   (backward norm; spectrum trimmed / zero padded;
    imaginary parts of the DC and Nyquist coefficients do not contribute)."""
    k_full = n_out // 2 + 1
    k_eff = min(n_coeff, k_full)
    Br = np.zeros((n_coeff, n_out), np.float32)
    Bi = np.zeros((n_coeff, n_out), np.float32)
    k = np.arange(k_eff)
    c = np.where(k == 0, 1.0, 2.0)
    if n_out % 2 == 0:
        c = np.where(k == n_out // 2, 1.0, c)
    ang = 2.0 * np.pi * k[:, None] * np.arange(n_out)[None, :] / n_out
    Br[:k_eff] = (c[:, None] / n_out) * np.cos(ang)
    Bi[:k_eff] = -(c[:, None] / n_out) * np.sin(ang)
    Bi[0, :] = 0.0
    if n_out % 2 == 0 and k_eff - 1 >= n_out // 2:
        Bi[n_out // 2, :] = 0.0
    return Br, Bi


# ----------------------------------------------------------------------------------
# Host-side exact folding of the Fourier-layer parameters (float64 accumulation).
# Feature flattening convention: f = channel * x_dim + spatial (channel-major).
# ----------------------------------------------------------------------------------
def _fold_fdec_params(params, *, z_dim, x_dim, hidden, width, n_layers, modes, ln):
    assert modes <= x_dim // 2 + 1, "modes must be <= x_dim//2 + 1 (matches FDec.__init__)"
    f64 = np.float64
    Fr, Fi = _rfft_basis(x_dim, modes)           # (x_dim, modes)
    Ar, Ai = _irfft_basis(modes, x_dim)          # (modes, x_dim)
    Br, Bi = _irfft_basis(hidden, x_dim)         # (hidden, x_dim)
    Fr, Fi, Ar, Ai, Br, Bi = (m.astype(f64) for m in (Fr, Fi, Ar, Ai, Br, Bi))

    w0r = np.asarray(params['w0r'], f64)
    w0i = np.asarray(params['w0i'], f64)
    D = w0r @ Br + w0i @ Bi                      # (z_dim, x_dim):  x0 = z @ D

    F_out = width * x_dim
    eye_x = np.eye(x_dim, dtype=f64)

    layer_mats, vec_cols = [], []
    for li in range(n_layers):
        wr, wi, wc, bc, gamma, beta = (np.asarray(a, f64) for a in params['layers'][li])
        c_in = wr.shape[0]
        # SpectralConv1d folded:  M[i,t,o,s] maps x[b,i,t] -> x1[b,o,s]
        M = (np.einsum('tk,iok,ks->itos', Fr, wr, Ar)
             - np.einsum('tk,iok,ks->itos', Fi, wi, Ar)
             + np.einsum('tk,iok,ks->itos', Fr, wi, Ai)
             + np.einsum('tk,iok,ks->itos', Fi, wr, Ai))
        Wt = M.transpose(2, 3, 0, 1).reshape(F_out, c_in * x_dim)         # [(o,s),(i,t)]
        # 1x1 Conv1d (pointwise channel mix): wc[o,i] * delta(s,t)
        Wt = Wt + np.einsum('oi,st->osit', wc, eye_x).reshape(F_out, c_in * x_dim)
        layer_mats.append(Wt)
        if ln:
            # conv bias is a per-channel constant -> cancels exactly in the LayerNorm mean
            vec_cols += [np.tile(gamma, width),      # gamma  g[(o,s)]  = gamma[s]
                         np.tile(beta, width)]       # beta   be[(o,s)] = beta[s]
        else:
            vec_cols += [np.repeat(bc, x_dim)]       # bias   b[(o,s)]  = bc[o]

    # Fold weight0 + first irfft into layer 0:  y0 = W0 @ (D^T @ z^T) = (W0 @ D^T) @ z^T
    C0 = layer_mats[0] @ D.T                                              # (F_out, z_dim)
    Wstack = np.stack(layer_mats[1:], 0) if n_layers > 1 else None        # (n_layers-1,F,F)
    vec = np.stack(vec_cols, axis=1)                                      # (F_out, 2L or L)

    # Raw MLP-head parameters, bias packed into the same array (no zero-padded fold).
    w1 = np.asarray(params['w1'], f64)            # (n_fc1, width)
    b1 = np.asarray(params['b1'], f64)            # (n_fc1,)
    w2 = np.asarray(params['w2'], f64)            # (1, n_fc1)
    b2 = np.asarray(params['b2'], f64)            # (1,)
    w1b = np.concatenate([w1, b1[:, None]], axis=1)          # (n_fc1, width+1)
    w2b = np.concatenate([w2, b2.reshape(1, 1)], axis=1)     # (1, n_fc1+1)

    f32 = np.float32
    packed = [C0.astype(f32)]
    if Wstack is not None:
        packed.append(Wstack.astype(f32))
    packed += [vec.astype(f32), w1b.astype(f32), w2b.astype(f32)]
    return [jnp.asarray(a) for a in packed]


# ----------------------------------------------------------------------------------
# Pallas kernel: one batch tile (TB columns) per grid step.
# Activations are (features, TB): features on sublanes, batch on lanes.
# ----------------------------------------------------------------------------------
def _make_fdec_kernel(n_layers, width, x_dim, n_fc1, ln, eps=1e-5):
    F = width * x_dim

    def kernel(*refs):
        it = iter(refs)
        z_ref = next(it)                              # (z_dim, TB)
        c0_ref = next(it)                             # (F, z_dim)
        ws_ref = next(it) if n_layers > 1 else None   # (n_layers-1, F, F)
        vec_ref = next(it)                            # (F, 2L) [gamma,beta] or (F, L) [bias]
        w1b_ref = next(it)                            # (n_fc1, width+1)   [w1 | b1]
        w2b_ref = next(it)                            # (1, n_fc1+1)       [w2 | b2]
        out_ref = next(it)                            # (x_dim, TB)

        tb = z_ref.shape[-1]

        def layer_tail(y, li):
            # (LayerNorm over x_dim per channel, or bias add) -> ReLU ; y: (F, TB)
            if ln:
                # exact f32 statistics; layout-preserving sublane split (x_dim % 8 == 0 here)
                y3 = y.reshape(width, x_dim, tb)
                mu = jnp.mean(y3, axis=1, keepdims=True)
                d = y3 - mu
                var = jnp.mean(d * d, axis=1, keepdims=True)
                y = (d * jax.lax.rsqrt(var + eps)).reshape(F, tb)
                y = (y * vec_ref[:, 2 * li:2 * li + 1]
                     + vec_ref[:, 2 * li + 1:2 * li + 2])
            else:
                y = y + vec_ref[:, li:li + 1]
            return jnp.maximum(y, 0.0)

        # layer 0 (weight0 + irfft + spectral conv + 1x1 conv folded into C0)
        x = layer_tail(jnp.dot(c0_ref[...], z_ref[...],
                               preferred_element_type=jnp.float32), 0)        # (F, TB)
        # remaining Fourier layers: one MXU matmul each
        for li in range(1, n_layers):
            x = layer_tail(jnp.dot(ws_ref[li - 1], x,
                                   preferred_element_type=jnp.float32), li)

        # MLP head applied per spatial point, with raw (tiny) fc1/fc2 weights.
        # Regroup (width*x_dim, TB) -> (width, x_dim*TB) via explicit, aligned lane slabs
        # (static middle-dim slices + lane concat: avoids an unsupported lane-merge reshape).
        x3 = x.reshape(width, x_dim, tb)                                      # sublane split
        xr = jnp.concatenate([x3[:, s, :] for s in range(x_dim)], axis=1)     # (width, x_dim*tb)

        w1 = w1b_ref[:, :width]
        b1 = w1b_ref[:, width:width + 1]
        h = jnp.maximum(jnp.dot(w1, xr, preferred_element_type=jnp.float32) + b1,
                        0.0)                                                  # (n_fc1, x_dim*tb)
        w2 = w2b_ref[:, :n_fc1]
        b2 = w2b_ref[:, n_fc1:n_fc1 + 1]
        o = jnp.dot(w2, h, preferred_element_type=jnp.float32) + b2           # (1, x_dim*tb)

        # scatter back to the lane-dense (x_dim, TB) output block
        for s in range(x_dim):
            out_ref[s:s + 1, :] = o[:, s * tb:(s + 1) * tb]

    return kernel


# ----------------------------------------------------------------------------------
# Wrapper
# ----------------------------------------------------------------------------------
def _round_up(a, m):
    return (a + m - 1) // m * m


def _pick_batch_tile(B):
    kind = ""
    try:
        kind = jax.devices()[0].device_kind.lower()
    except Exception:
        pass
    flat = kind.replace(" ", "").replace("_", "").replace("-", "")
    is_v7 = ("v7" in flat) or ("tpu7" in flat) or ("7x" in flat)
    is_v6 = ("v6" in flat) or ("trillium" in flat)
    # v5e: 128 matches the 4x128x128 MXU; v6e/v7x: 512 halves grid-step overhead on the
    # 256-wide MXU while staying a few MiB under the scoped-VMEM limits.
    pref = 512 if (is_v6 or is_v7) else 128
    tb = min(pref, _round_up(max(B, 1), 128))
    if is_v7 and tb > 128 and _round_up(B, tb) // tb < 2:
        # keep >= 2 grid steps so both v7x TensorCores get work on the "parallel" axis
        tb = max(128, _round_up((B + 1) // 2, 128))
    return tb


def fdec_forward_pallas(z, params, *, z_dim, x_dim, hidden, width, n_layers, modes,
                        ln=True, batch_tile=None):
    bs = z.shape[:-1]
    B = int(np.prod(bs)) if bs else 1
    TB = batch_tile if batch_tile is not None else _pick_batch_tile(B)
    B_pad = _round_up(B, TB)
    grid = B_pad // TB

    # batch on the lane axis: dense (z_dim, TB) input DMA, lane-dense (x_dim, TB) output store
    z2 = z.reshape(B, z_dim).astype(jnp.float32)
    zt = jnp.pad(z2, ((0, B_pad - B), (0, 0))).T                 # (z_dim, B_pad)

    weights = _fold_fdec_params(params, z_dim=z_dim, x_dim=x_dim, hidden=hidden,
                                width=width, n_layers=n_layers, modes=modes, ln=ln)
    n_fc1 = int(np.asarray(params['w1']).shape[0])

    def _const_spec(a):
        nd = a.ndim
        # NOTE: pipeline_mode=pl.Buffered(1) would halve constant-weight VMEM, but after the
        # head compression the constants total only ~330 KiB padded, so it is not material.
        return pl.BlockSpec(a.shape, lambda g, _nd=nd: (0,) * _nd)

    in_specs = [pl.BlockSpec((z_dim, TB), lambda g: (0, g))]
    in_specs += [_const_spec(w) for w in weights]
    out_spec = pl.BlockSpec((x_dim, TB), lambda g: (0, g))

    kernel = _make_fdec_kernel(n_layers, width, x_dim, n_fc1, ln)

    out = pl.pallas_call(
        kernel,
        out_shape=jax.ShapeDtypeStruct((x_dim, B_pad), jnp.float32),
        grid=(grid,),
        in_specs=in_specs,
        out_specs=out_spec,
        compiler_params=pltpu.CompilerParams(
            dimension_semantics=("parallel",),
            vmem_limit_bytes=32 * 1024 * 1024,   # explicit headroom (v7x has 64 MiB physical)
        ),
    )(zt, *weights)

    return out.T[:B].reshape(*bs, x_dim)


# ----------------------------------------------------------------------------------
# Deterministic parameter init (mirrors FDec.__init__ shapes)
# ----------------------------------------------------------------------------------
def init_params(key, z_dim, x_dim, hidden, width, n_layers, modes):
    ks = iter(jax.random.split(key, 2 + 4 * n_layers + 4))
    p = {}
    s0 = 1.0 / (z_dim * hidden)
    p['w0r'] = s0 * jax.random.uniform(next(ks), (z_dim, hidden), jnp.float32)
    p['w0i'] = s0 * jax.random.uniform(next(ks), (z_dim, hidden), jnp.float32)
    p['layers'] = []
    for i in range(n_layers):
        c_in = 1 if i == 0 else width
        sc = 1.0 / (c_in * width)
        wr = sc * jax.random.uniform(next(ks), (c_in, width, modes), jnp.float32)
        wi = sc * jax.random.uniform(next(ks), (c_in, width, modes), jnp.float32)
        bound = 1.0 / math.sqrt(c_in)
        wc = jax.random.uniform(next(ks), (width, c_in), jnp.float32, -bound, bound)
        bc = jax.random.uniform(next(ks), (width,), jnp.float32, -bound, bound)
        gamma = jnp.ones((x_dim,), jnp.float32)      # LayerNorm defaults
        beta = jnp.zeros((x_dim,), jnp.float32)
        p['layers'].append((wr, wi, wc, bc, gamma, beta))
    b1 = 1.0 / math.sqrt(width)
    p['w1'] = jax.random.uniform(next(ks), (128, width), jnp.float32, -b1, b1)
    p['b1'] = jax.random.uniform(next(ks), (128,), jnp.float32, -b1, b1)
    b2 = 1.0 / math.sqrt(128)
    p['w2'] = jax.random.uniform(next(ks), (1, 128), jnp.float32, -b2, b2)
    p['b2'] = jax.random.uniform(next(ks), (1,), jnp.float32, -b2, b2)
    return p


# ----------------------------------------------------------------------------------
# Pure-JAX reference (mirrors the PyTorch forward, using jnp.fft)
# ----------------------------------------------------------------------------------
def fdec_forward_reference(z, params, *, z_dim, x_dim, hidden, width, n_layers, modes, ln=True):
    bs = z.shape[:-1]
    B = int(np.prod(bs)) if bs else 1
    zf = z.reshape(B, 1, z_dim).astype(jnp.complex64)
    w0 = (params['w0r'] + 1j * params['w0i']).astype(jnp.complex64)
    zc = jnp.matmul(zf, w0[None])                       # (B,1,hidden) complex
    x = jnp.fft.irfft(zc, n=x_dim, axis=-1)             # (B,1,x_dim) real
    for li in range(n_layers):
        wr, wi, wc, bc, g, bt = params['layers'][li]
        xf = jnp.fft.rfft(x, axis=-1)[..., :modes]
        w = (wr + 1j * wi).astype(jnp.complex64)
        out_ft = jnp.zeros((x.shape[0], width, x_dim // 2 + 1), jnp.complex64)
        out_ft = out_ft.at[..., :modes].set(jnp.einsum('bik,iok->bok', xf, w))
        x1 = jnp.fft.irfft(out_ft, n=x_dim, axis=-1)
        x2 = jnp.einsum('oi,bit->bot', wc, x) + bc[None, :, None]
        x = x1 + x2
        if ln:
            mu = x.mean(-1, keepdims=True)
            var = ((x - mu) ** 2).mean(-1, keepdims=True)
            x = (x - mu) / jnp.sqrt(var + 1e-5) * g[None, None, :] + bt[None, None, :]
        x = jnp.maximum(x, 0.0)
    xp = jnp.transpose(x, (0, 2, 1))                    # (B, x_dim, width)
    h = jnp.maximum(xp @ params['w1'].T + params['b1'][None, None, :], 0.0)
    o = h @ params['w2'].T + params['b2'].reshape(1, 1, 1)
    return o.reshape(*bs, x_dim)


# ----------------------------------------------------------------------------------
if __name__ == "__main__":
    Z_DIM, X_DIM, HIDDEN, WIDTH, N_LAYERS = 8, 16, 16, 8, 2
    MODES = min(12, X_DIM // 2 + 1)                     # -> 9 (includes Nyquist mode)

    key = jax.random.PRNGKey(0)
    pkey, zkey, zkey2 = jax.random.split(key, 3)
    params = init_params(pkey, Z_DIM, X_DIM, HIDDEN, WIDTH, N_LAYERS, MODES)

    cfg = dict(z_dim=Z_DIM, x_dim=X_DIM, hidden=HIDDEN, width=WIDTH,
               n_layers=N_LAYERS, modes=MODES, ln=True)

    # Small-shape check (single grid step, heavy lane padding -- see batching note above)
    z = jax.random.normal(zkey, (2, 4, Z_DIM), jnp.float32)
    out = jax.block_until_ready(fdec_forward_pallas(z, params, **cfg))
    assert out.shape == (2, 4, X_DIM) and out.dtype == jnp.float32
    ref = jax.block_until_ready(fdec_forward_reference(z, params, **cfg))
    np.testing.assert_allclose(np.asarray(out), np.asarray(ref), rtol=2e-3, atol=2e-3)

    # Larger batch: exercises multi-step grids / padded tail columns on some chip generations
    z_big = jax.random.normal(zkey2, (3, 100, Z_DIM), jnp.float32)
    out_big = jax.block_until_ready(fdec_forward_pallas(z_big, params, **cfg))
    ref_big = jax.block_until_ready(fdec_forward_reference(z_big, params, **cfg))
    np.testing.assert_allclose(np.asarray(out_big), np.asarray(ref_big), rtol=2e-3, atol=2e-3)

    print("KERNEL_OK")
</pallas_src>

<mosaic_0001>
module attributes {stable_mosaic.version = 11 : i64} {
  func.func @kernel(%arg0: i32, %arg1: memref<8x128xf32, #tpu.memory_space<vmem>>, %arg2: memref<128x8xf32, #tpu.memory_space<vmem>>, %arg3: memref<1x128x128xf32, #tpu.memory_space<vmem>>, %arg4: memref<128x4xf32, #tpu.memory_space<vmem>>, %arg5: memref<128x9xf32, #tpu.memory_space<vmem>>, %arg6: memref<1x129xf32, #tpu.memory_space<vmem>>, %arg7: memref<16x128xf32, #tpu.memory_space<vmem>>) attributes {dimension_semantics = [#tpu.dimension_semantics<parallel>], iteration_bounds = array<i64: 1>, scalar_prefetch = 0 : i64, scratch_operands = 0 : i64, tpu.core_type = #tpu.core_type<tc>, window_params = [{transform_indices = @transform_0, window_bounds = array<i64: 8, 128>}, {pipeline_mode = #tpu.pipeline_mode<synchronous>, transform_indices = @transform_1, window_bounds = array<i64: 128, 8>}, {pipeline_mode = #tpu.pipeline_mode<synchronous>, transform_indices = @transform_2, window_bounds = array<i64: 1, 128, 128>}, {pipeline_mode = #tpu.pipeline_mode<synchronous>, transform_indices = @transform_3, window_bounds = array<i64: 128, 4>}, {pipeline_mode = #tpu.pipeline_mode<synchronous>, transform_indices = @transform_4, window_bounds = array<i64: 128, 9>}, {pipeline_mode = #tpu.pipeline_mode<synchronous>, transform_indices = @transform_5, window_bounds = array<i64: 1, 129>}, {transform_indices = @transform_6, window_bounds = array<i64: 16, 128>}]} {
    %c0 = arith.constant 0 : index
    %c0_0 = arith.constant 0 : index
    %0 = vector.load %arg2[%c0, %c0_0] : memref<128x8xf32, #tpu.memory_space<vmem>>, vector<128x8xf32>
    %c0_1 = arith.constant 0 : index
    %c0_2 = arith.constant 0 : index
    %1 = vector.load %arg1[%c0_1, %c0_2] : memref<8x128xf32, #tpu.memory_space<vmem>>, vector<8x128xf32>
    %cst = arith.constant dense<0.000000e+00> : vector<128x128xf32>
    %2 = tpu.matmul %0, %1, %cst {dimension_numbers = #tpu.dot_dimension_numbers<[1], [0], [0], [1], [0, 0, 1, 1], [], []>} : vector<128x8xf32>, vector<8x128xf32>, vector<128x128xf32> -> vector<128x128xf32>
    %3 = vector.shape_cast %2 : vector<128x128xf32> to vector<8x16x128xf32>
    %cst_3 = arith.constant dense<0.000000e+00> : vector<8x128xf32>
    %4 = vector.multi_reduction <add>, %3, %cst_3 [1] : vector<8x16x128xf32> to vector<8x128xf32>
    %5 = vector.shape_cast %4 : vector<8x128xf32> to vector<8x1x128xf32>
    %cst_4 = arith.constant 1.600000e+01 : f32
    %6 = vector.broadcast %cst_4 : f32 to vector<8x1x128xf32>
    %7 = arith.divf %5, %6 : vector<8x1x128xf32>
    %8 = vector.broadcast %7 : vector<8x1x128xf32> to vector<8x16x128xf32>
    %9 = arith.subf %3, %8 : vector<8x16x128xf32>
    %10 = arith.mulf %9, %9 : vector<8x16x128xf32>
    %cst_5 = arith.constant dense<0.000000e+00> : vector<8x128xf32>
    %11 = vector.multi_reduction <add>, %10, %cst_5 [1] : vector<8x16x128xf32> to vector<8x128xf32>
    %12 = vector.shape_cast %11 : vector<8x128xf32> to vector<8x1x128xf32>
    %cst_6 = arith.constant 1.600000e+01 : f32
    %13 = vector.broadcast %cst_6 : f32 to vector<8x1x128xf32>
    %14 = arith.divf %12, %13 : vector<8x1x128xf32>
    %cst_7 = arith.constant 9.99999974E-6 : f32
    %15 = vector.broadcast %cst_7 : f32 to vector<8x1x128xf32>
    %16 = arith.addf %14, %15 : vector<8x1x128xf32>
    %17 = math.rsqrt %16 : vector<8x1x128xf32>
    %18 = vector.broadcast %17 : vector<8x1x128xf32> to vector<8x16x128xf32>
    %19 = arith.mulf %9, %18 : vector<8x16x128xf32>
    %20 = vector.shape_cast %19 : vector<8x16x128xf32> to vector<128x128xf32>
    %c0_8 = arith.constant 0 : index
    %c0_9 = arith.constant 0 : index
    %21 = vector.load %arg4[%c0_8, %c0_9] : memref<128x4xf32, #tpu.memory_space<vmem>>, vector<128x1xf32>
    %22 = vector.broadcast %21 : vector<128x1xf32> to vector<128x128xf32>
    %23 = arith.mulf %20, %22 : vector<128x128xf32>
    %c0_10 = arith.constant 0 : index
    %c1 = arith.constant 1 : index
    %24 = vector.load %arg4[%c0_10, %c1] : memref<128x4xf32, #tpu.memory_space<vmem>>, vector<128x1xf32>
    %25 = vector.broadcast %24 : vector<128x1xf32> to vector<128x128xf32>
    %26 = arith.addf %23, %25 : vector<128x128xf32>
    %cst_11 = arith.constant 0.000000e+00 : f32
    %27 = vector.broadcast %cst_11 : f32 to vector<128x128xf32>
    %28 = arith.maximumf %26, %27 : vector<128x128xf32>
    %c0_12 = arith.constant 0 : index
    %c0_13 = arith.constant 0 : index
    %c0_14 = arith.constant 0 : index
    %29 = vector.load %arg3[%c0_12, %c0_13, %c0_14] : memref<1x128x128xf32, #tpu.memory_space<vmem>>, vector<1x128x128xf32>
    %30 = vector.shape_cast %29 : vector<1x128x128xf32> to vector<128x128xf32>
    %cst_15 = arith.constant dense<0.000000e+00> : vector<128x128xf32>
    %31 = tpu.matmul %30, %28, %cst_15 {dimension_numbers = #tpu.dot_dimension_numbers<[1], [0], [0], [1], [0, 0, 1, 1], [], []>} : vector<128x128xf32>, vector<128x128xf32>, vector<128x128xf32> -> vector<128x128xf32>
    %32 = vector.shape_cast %31 : vector<128x128xf32> to vector<8x16x128xf32>
    %cst_16 = arith.constant dense<0.000000e+00> : vector<8x128xf32>
    %33 = vector.multi_reduction <add>, %32, %cst_16 [1] : vector<8x16x128xf32> to vector<8x128xf32>
    %34 = vector.shape_cast %33 : vector<8x128xf32> to vector<8x1x128xf32>
    %cst_17 = arith.constant 1.600000e+01 : f32
    %35 = vector.broadcast %cst_17 : f32 to vector<8x1x128xf32>
    %36 = arith.divf %34, %35 : vector<8x1x128xf32>
    %37 = vector.broadcast %36 : vector<8x1x128xf32> to vector<8x16x128xf32>
    %38 = arith.subf %32, %37 : vector<8x16x128xf32>
    %39 = arith.mulf %38, %38 : vector<8x16x128xf32>
    %cst_18 = arith.constant dense<0.000000e+00> : vector<8x128xf32>
    %40 = vector.multi_reduction <add>, %39, %cst_18 [1] : vector<8x16x128xf32> to vector<8x128xf32>
    %41 = vector.shape_cast %40 : vector<8x128xf32> to vector<8x1x128xf32>
    %cst_19 = arith.constant 1.600000e+01 : f32
    %42 = vector.broadcast %cst_19 : f32 to vector<8x1x128xf32>
    %43 = arith.divf %41, %42 : vector<8x1x128xf32>
    %cst_20 = arith.constant 9.99999974E-6 : f32
    %44 = vector.broadcast %cst_20 : f32 to vector<8x1x128xf32>
    %45 = arith.addf %43, %44 : vector<8x1x128xf32>
    %46 = math.rsqrt %45 : vector<8x1x128xf32>
    %47 = vector.broadcast %46 : vector<8x1x128xf32> to vector<8x16x128xf32>
    %48 = arith.mulf %38, %47 : vector<8x16x128xf32>
    %49 = vector.shape_cast %48 : vector<8x16x128xf32> to vector<128x128xf32>
    %c0_21 = arith.constant 0 : index
    %c2 = arith.constant 2 : index
    %50 = vector.load %arg4[%c0_21, %c2] : memref<128x4xf32, #tpu.memory_space<vmem>>, vector<128x1xf32>
    %51 = vector.broadcast %50 : vector<128x1xf32> to vector<128x128xf32>
    %52 = arith.mulf %49, %51 : vector<128x128xf32>
    %c0_22 = arith.constant 0 : index
    %c3 = arith.constant 3 : index
    %53 = vector.load %arg4[%c0_22, %c3] : memref<128x4xf32, #tpu.memory_space<vmem>>, vector<128x1xf32>
    %54 = vector.broadcast %53 : vector<128x1xf32> to vector<128x128xf32>
    %55 = arith.addf %52, %54 : vector<128x128xf32>
    %cst_23 = arith.constant 0.000000e+00 : f32
    %56 = vector.broadcast %cst_23 : f32 to vector<128x128xf32>
    %57 = arith.maximumf %55, %56 : vector<128x128xf32>
    %58 = vector.shape_cast %57 : vector<128x128xf32> to vector<8x16x128xf32>
    %59 = vector.extract_strided_slice %58 {offsets = [0, 0, 0], sizes = [8, 1, 128], strides = [1, 1, 1]} : vector<8x16x128xf32> to vector<8x1x128xf32>
    %60 = vector.shape_cast %59 : vector<8x1x128xf32> to vector<8x128xf32>
    %61 = vector.extract_strided_slice %58 {offsets = [0, 1, 0], sizes = [8, 1, 128], strides = [1, 1, 1]} : vector<8x16x128xf32> to vector<8x1x128xf32>
    %62 = vector.shape_cast %61 : vector<8x1x128xf32> to vector<8x128xf32>
    %63 = vector.extract_strided_slice %58 {offsets = [0, 2, 0], sizes = [8, 1, 128], strides = [1, 1, 1]} : vector<8x16x128xf32> to vector<8x1x128xf32>
    %64 = vector.shape_cast %63 : vector<8x1x128xf32> to vector<8x128xf32>
    %65 = vector.extract_strided_slice %58 {offsets = [0, 3, 0], sizes = [8, 1, 128], strides = [1, 1, 1]} : vector<8x16x128xf32> to vector<8x1x128xf32>
    %66 = vector.shape_cast %65 : vector<8x1x128xf32> to vector<8x128xf32>
    %67 = vector.extract_strided_slice %58 {offsets = [0, 4, 0], sizes = [8, 1, 128], strides = [1, 1, 1]} : vector<8x16x128xf32> to vector<8x1x128xf32>
    %68 = vector.shape_cast %67 : vector<8x1x128xf32> to vector<8x128xf32>
    %69 = vector.extract_strided_slice %58 {offsets = [0, 5, 0], sizes = [8, 1, 128], strides = [1, 1, 1]} : vector<8x16x128xf32> to vector<8x1x128xf32>
    %70 = vector.shape_cast %69 : vector<8x1x128xf32> to vector<8x128xf32>
    %71 = vector.extract_strided_slice %58 {offsets = [0, 6, 0], sizes = [8, 1, 128], strides = [1, 1, 1]} : vector<8x16x128xf32> to vector<8x1x128xf32>
    %72 = vector.shape_cast %71 : vector<8x1x128xf32> to vector<8x128xf32>
    %73 = vector.extract_strided_slice %58 {offsets = [0, 7, 0], sizes = [8, 1, 128], strides = [1, 1, 1]} : vector<8x16x128xf32> to vector<8x1x128xf32>
    %74 = vector.shape_cast %73 : vector<8x1x128xf32> to vector<8x128xf32>
    %75 = vector.extract_strided_slice %58 {offsets = [0, 8, 0], sizes = [8, 1, 128], strides = [1, 1, 1]} : vector<8x16x128xf32> to vector<8x1x128xf32>
    %76 = vector.shape_cast %75 : vector<8x1x128xf32> to vector<8x128xf32>
    %77 = vector.extract_strided_slice %58 {offsets = [0, 9, 0], sizes = [8, 1, 128], strides = [1, 1, 1]} : vector<8x16x128xf32> to vector<8x1x128xf32>
    %78 = vector.shape_cast %77 : vector<8x1x128xf32> to vector<8x128xf32>
    %79 = vector.extract_strided_slice %58 {offsets = [0, 10, 0], sizes = [8, 1, 128], strides = [1, 1, 1]} : vector<8x16x128xf32> to vector<8x1x128xf32>
    %80 = vector.shape_cast %79 : vector<8x1x128xf32> to vector<8x128xf32>
    %81 = vector.extract_strided_slice %58 {offsets = [0, 11, 0], sizes = [8, 1, 128], strides = [1, 1, 1]} : vector<8x16x128xf32> to vector<8x1x128xf32>
    %82 = vector.shape_cast %81 : vector<8x1x128xf32> to vector<8x128xf32>
    %83 = vector.extract_strided_slice %58 {offsets = [0, 12, 0], sizes = [8, 1, 128], strides = [1, 1, 1]} : vector<8x16x128xf32> to vector<8x1x128xf32>
    %84 = vector.shape_cast %83 : vector<8x1x128xf32> to vector<8x128xf32>
    %85 = vector.extract_strided_slice %58 {offsets = [0, 13, 0], sizes = [8, 1, 128], strides = [1, 1, 1]} : vector<8x16x128xf32> to vector<8x1x128xf32>
    %86 = vector.shape_cast %85 : vector<8x1x128xf32> to vector<8x128xf32>
    %87 = vector.extract_strided_slice %58 {offsets = [0, 14, 0], sizes = [8, 1, 128], strides = [1, 1, 1]} : vector<8x16x128xf32> to vector<8x1x128xf32>
    %88 = vector.shape_cast %87 : vector<8x1x128xf32> to vector<8x128xf32>
    %89 = vector.extract_strided_slice %58 {offsets = [0, 15, 0], sizes = [8, 1, 128], strides = [1, 1, 1]} : vector<8x16x128xf32> to vector<8x1x128xf32>
    %90 = vector.shape_cast %89 : vector<8x1x128xf32> to vector<8x128xf32>
    %91 = tpu.concatenate %60, %62, %64, %66, %68, %70, %72, %74, %76, %78, %80, %82, %84, %86, %88, %90 in 1 : vector<8x128xf32>, vector<8x128xf32>, vector<8x128xf32>, vector<8x128xf32>, vector<8x128xf32>, vector<8x128xf32>, vector<8x128xf32>, vector<8x128xf32>, vector<8x128xf32>, vector<8x128xf32>, vector<8x128xf32>, vector<8x128xf32>, vector<8x128xf32>, vector<8x128xf32>, vector<8x128xf32>, vector<8x128xf32> -> vector<8x2048xf32>
    %c0_24 = arith.constant 0 : index
    %c0_25 = arith.constant 0 : index
    %92 = vector.load %arg5[%c0_24, %c0_25] : memref<128x9xf32, #tpu.memory_space<vmem>>, vector<128x8xf32>
    %c0_26 = arith.constant 0 : index
    %c8 = arith.constant 8 : index
    %93 = vector.load %arg5[%c0_26, %c8] : memref<128x9xf32, #tpu.memory_space<vmem>>, vector<128x1xf32>
    %cst_27 = arith.constant dense<0.000000e+00> : vector<128x2048xf32>
    %94 = tpu.matmul %92, %91, %cst_27 {dimension_numbers = #tpu.dot_dimension_numbers<[1], [0], [0], [1], [0, 0, 1, 1], [], []>} : vector<128x8xf32>, vector<8x2048xf32>, vector<128x2048xf32> -> vector<128x2048xf32>
    %95 = vector.broadcast %93 : vector<128x1xf32> to vector<128x2048xf32>
    %96 = arith.addf %94, %95 : vector<128x2048xf32>
    %cst_28 = arith.constant 0.000000e+00 : f32
    %97 = vector.broadcast %cst_28 : f32 to vector<128x2048xf32>
    %98 = arith.maximumf %96, %97 : vector<128x2048xf32>
    %c0_29 = arith.constant 0 : index
    %c0_30 = arith.constant 0 : index
    %99 = vector.load %arg6[%c0_29, %c0_30] : memref<1x129xf32, #tpu.memory_space<vmem>>, vector<1x128xf32>
    %c0_31 = arith.constant 0 : index
    %c128 = arith.constant 128 : index
    %100 = vector.load %arg6[%c0_31, %c128] : memref<1x129xf32, #tpu.memory_space<vmem>>, vector<1x1xf32>
    %cst_32 = arith.constant dense<0.000000e+00> : vector<1x2048xf32>
    %101 = tpu.matmul %99, %98, %cst_32 {dimension_numbers = #tpu.dot_dimension_numbers<[1], [0], [0], [1], [0, 0, 1, 1], [], []>} : vector<1x128xf32>, vector<128x2048xf32>, vector<1x2048xf32> -> vector<1x2048xf32>
    %102 = vector.broadcast %100 : vector<1x1xf32> to vector<1x2048xf32>
    %103 = arith.addf %101, %102 : vector<1x2048xf32>
    %104 = vector.extract_strided_slice %103 {offsets = [0, 0], sizes = [1, 128], strides = [1, 1]} : vector<1x2048xf32> to vector<1x128xf32>
    %c0_33 = arith.constant 0 : index
    %c0_34 = arith.constant 0 : index
    %105 = vector.load %arg7[%c0_33, %c0_34] : memref<16x128xf32, #tpu.memory_space<vmem>>, vector<1x128xf32>
    tpu.vector_store %arg7[%c0_33, %c0_34], %104 {strides = array<i32>} : memref<16x128xf32, #tpu.memory_space<vmem>>, vector<1x128xf32>,
    %106 = vector.extract_strided_slice %103 {offsets = [0, 128], sizes = [1, 128], strides = [1, 1]} : vector<1x2048xf32> to vector<1x128xf32>
    %c1_35 = arith.constant 1 : index
    %c0_36 = arith.constant 0 : index
    %107 = vector.load %arg7[%c1_35, %c0_36] : memref<16x128xf32, #tpu.memory_space<vmem>>, vector<1x128xf32>
    tpu.vector_store %arg7[%c1_35, %c0_36], %106 {strides = array<i32>} : memref<16x128xf32, #tpu.memory_space<vmem>>, vector<1x128xf32>,
    %108 = vector.extract_strided_slice %103 {offsets = [0, 256], sizes = [1, 128], strides = [1, 1]} : vector<1x2048xf32> to vector<1x128xf32>
    %c2_37 = arith.constant 2 : index
    %c0_38 = arith.constant 0 : index
    %109 = vector.load %arg7[%c2_37, %c0_38] : memref<16x128xf32, #tpu.memory_space<vmem>>, vector<1x128xf32>
    tpu.vector_store %arg7[%c2_37, %c0_38], %108 {strides = array<i32>} : memref<16x128xf32, #tpu.memory_space<vmem>>, vector<1x128xf32>,
    %110 = vector.extract_strided_slice %103 {offsets = [0, 384], sizes = [1, 128], strides = [1, 1]} : vector<1x2048xf32> to vector<1x128xf32>
    %c3_39 = arith.constant 3 : index
    %c0_40 = arith.constant 0 : index
    %111 = vector.load %arg7[%c3_39, %c0_40] : memref<16x128xf32, #tpu.memory_space<vmem>>, vector<1x128xf32>
    tpu.vector_store %arg7[%c3_39, %c0_40], %110 {strides = array<i32>} : memref<16x128xf32, #tpu.memory_space<vmem>>, vector<1x128xf32>,
    %112 = vector.extract_strided_slice %103 {offsets = [0, 512], sizes = [1, 128], strides = [1, 1]} : vector<1x2048xf32> to vector<1x128xf32>
    %c4 = arith.constant 4 : index
    %c0_41 = arith.constant 0 : index
    %113 = vector.load %arg7[%c4, %c0_41] : memref<16x128xf32, #tpu.memory_space<vmem>>, vector<1x128xf32>
    tpu.vector_store %arg7[%c4, %c0_41], %112 {strides = array<i32>} : memref<16x128xf32, #tpu.memory_space<vmem>>, vector<1x128xf32>,
    %114 = vector.extract_strided_slice %103 {offsets = [0, 640], sizes = [1, 128], strides = [1, 1]} : vector<1x2048xf32> to vector<1x128xf32>
    %c5 = arith.constant 5 : index
    %c0_42 = arith.constant 0 : index
    %115 = vector.load %arg7[%c5, %c0_42] : memref<16x128xf32, #tpu.memory_space<vmem>>, vector<1x128xf32>
    tpu.vector_store %arg7[%c5, %c0_42], %114 {strides = array<i32>} : memref<16x128xf32, #tpu.memory_space<vmem>>, vector<1x128xf32>,
    %116 = vector.extract_strided_slice %103 {offsets = [0, 768], sizes = [1, 128], strides = [1, 1]} : vector<1x2048xf32> to vector<1x128xf32>
    %c6 = arith.constant 6 : index
    %c0_43 = arith.constant 0 : index
    %117 = vector.load %arg7[%c6, %c0_43] : memref<16x128xf32, #tpu.memory_space<vmem>>, vector<1x128xf32>
    tpu.vector_store %arg7[%c6, %c0_43], %116 {strides = array<i32>} : memref<16x128xf32, #tpu.memory_space<vmem>>, vector<1x128xf32>,
    %118 = vector.extract_strided_slice %103 {offsets = [0, 896], sizes = [1, 128], strides = [1, 1]} : vector<1x2048xf32> to vector<1x128xf32>
    %c7 = arith.constant 7 : index
    %c0_44 = arith.constant 0 : index
    %119 = vector.load %arg7[%c7, %c0_44] : memref<16x128xf32, #tpu.memory_space<vmem>>, vector<1x128xf32>
    tpu.vector_store %arg7[%c7, %c0_44], %118 {strides = array<i32>} : memref<16x128xf32, #tpu.memory_space<vmem>>, vector<1x128xf32>,
    %120 = vector.extract_strided_slice %103 {offsets = [0, 1024], sizes = [1, 128], strides = [1, 1]} : vector<1x2048xf32> to vector<1x128xf32>
    %c8_45 = arith.constant 8 : index
    %c0_46 = arith.constant 0 : index
    %121 = vector.load %arg7[%c8_45, %c0_46] : memref<16x128xf32, #tpu.memory_space<vmem>>, vector<1x128xf32>
    tpu.vector_store %arg7[%c8_45, %c0_46], %120 {strides = array<i32>} : memref<16x128xf32, #tpu.memory_space<vmem>>, vector<1x128xf32>,
    %122 = vector.extract_strided_slice %103 {offsets = [0, 1152], sizes = [1, 128], strides = [1, 1]} : vector<1x2048xf32> to vector<1x128xf32>
    %c9 = arith.constant 9 : index
    %c0_47 = arith.constant 0 : index
    %123 = vector.load %arg7[%c9, %c0_47] : memref<16x128xf32, #tpu.memory_space<vmem>>, vector<1x128xf32>
    tpu.vector_store %arg7[%c9, %c0_47], %122 {strides = array<i32>} : memref<16x128xf32, #tpu.memory_space<vmem>>, vector<1x128xf32>,
    %124 = vector.extract_strided_slice %103 {offsets = [0, 1280], sizes = [1, 128], strides = [1, 1]} : vector<1x2048xf32> to vector<1x128xf32>
    %c10 = arith.constant 10 : index
    %c0_48 = arith.constant 0 : index
    %125 = vector.load %arg7[%c10, %c0_48] : memref<16x128xf32, #tpu.memory_space<vmem>>, vector<1x128xf32>
    tpu.vector_store %arg7[%c10, %c0_48], %124 {strides = array<i32>} : memref<16x128xf32, #tpu.memory_space<vmem>>, vector<1x128xf32>,
    %126 = vector.extract_strided_slice %103 {offsets = [0, 1408], sizes = [1, 128], strides = [1, 1]} : vector<1x2048xf32> to vector<1x128xf32>
    %c11 = arith.constant 11 : index
    %c0_49 = arith.constant 0 : index
    %127 = vector.load %arg7[%c11, %c0_49] : memref<16x128xf32, #tpu.memory_space<vmem>>, vector<1x128xf32>
    tpu.vector_store %arg7[%c11, %c0_49], %126 {strides = array<i32>} : memref<16x128xf32, #tpu.memory_space<vmem>>, vector<1x128xf32>,
    %128 = vector.extract_strided_slice %103 {offsets = [0, 1536], sizes = [1, 128], strides = [1, 1]} : vector<1x2048xf32> to vector<1x128xf32>
    %c12 = arith.constant 12 : index
    %c0_50 = arith.constant 0 : index
    %129 = vector.load %arg7[%c12, %c0_50] : memref<16x128xf32, #tpu.memory_space<vmem>>, vector<1x128xf32>
    tpu.vector_store %arg7[%c12, %c0_50], %128 {strides = array<i32>} : memref<16x128xf32, #tpu.memory_space<vmem>>, vector<1x128xf32>,
    %130 = vector.extract_strided_slice %103 {offsets = [0, 1664], sizes = [1, 128], strides = [1, 1]} : vector<1x2048xf32> to vector<1x128xf32>
    %c13 = arith.constant 13 : index
    %c0_51 = arith.constant 0 : index
    %131 = vector.load %arg7[%c13, %c0_51] : memref<16x128xf32, #tpu.memory_space<vmem>>, vector<1x128xf32>
    tpu.vector_store %arg7[%c13, %c0_51], %130 {strides = array<i32>} : memref<16x128xf32, #tpu.memory_space<vmem>>, vector<1x128xf32>,
    %132 = vector.extract_strided_slice %103 {offsets = [0, 1792], sizes = [1, 128], strides = [1, 1]} : vector<1x2048xf32> to vector<1x128xf32>
    %c14 = arith.constant 14 : index
    %c0_52 = arith.constant 0 : index
    %133 = vector.load %arg7[%c14, %c0_52] : memref<16x128xf32, #tpu.memory_space<vmem>>, vector<1x128xf32>
    tpu.vector_store %arg7[%c14, %c0_52], %132 {strides = array<i32>} : memref<16x128xf32, #tpu.memory_space<vmem>>, vector<1x128xf32>,
    %134 = vector.extract_strided_slice %103 {offsets = [0, 1920], sizes = [1, 128], strides = [1, 1]} : vector<1x2048xf32> to vector<1x128xf32>
    %c15 = arith.constant 15 : index
    %c0_53 = arith.constant 0 : index
    %135 = vector.load %arg7[%c15, %c0_53] : memref<16x128xf32, #tpu.memory_space<vmem>>, vector<1x128xf32>
    tpu.vector_store %arg7[%c15, %c0_53], %134 {strides = array<i32>} : memref<16x128xf32, #tpu.memory_space<vmem>>, vector<1x128xf32>,
    return
  }
  func.func @transform_0(%arg0: i32) -> (i32, i32) {
    %c0_i32 = arith.constant 0 : i32
    %c0_i32_0 = arith.constant 0 : i32
    return %c0_i32, %arg0 : i32, i32
  }
  func.func @transform_1(%arg0: i32) -> (i32, i32) {
    %c0_i32 = arith.constant 0 : i32
    %c0_i32_0 = arith.constant 0 : i32
    %c0_i32_1 = arith.constant 0 : i32
    return %c0_i32, %c0_i32_0 : i32, i32
  }
  func.func @transform_2(%arg0: i32) -> (i32, i32, i32) {
    %c0_i32 = arith.constant 0 : i32
    %c0_i32_0 = arith.constant 0 : i32
    %c0_i32_1 = arith.constant 0 : i32
    %c0_i32_2 = arith.constant 0 : i32
    return %c0_i32, %c0_i32_0, %c0_i32_1 : i32, i32, i32
  }
  func.func @transform_3(%arg0: i32) -> (i32, i32) {
    %c0_i32 = arith.constant 0 : i32
    %c0_i32_0 = arith.constant 0 : i32
    %c0_i32_1 = arith.constant 0 : i32
    return %c0_i32, %c0_i32_0 : i32, i32
  }
  func.func @transform_4(%arg0: i32) -> (i32, i32) {
    %c0_i32 = arith.constant 0 : i32
    %c0_i32_0 = arith.constant 0 : i32
    %c0_i32_1 = arith.constant 0 : i32
    return %c0_i32, %c0_i32_0 : i32, i32
  }
  func.func @transform_5(%arg0: i32) -> (i32, i32) {
    %c0_i32 = arith.constant 0 : i32
    %c0_i32_0 = arith.constant 0 : i32
    %c0_i32_1 = arith.constant 0 : i32
    return %c0_i32, %c0_i32_0 : i32, i32
  }
  func.func @transform_6(%arg0: i32) -> (i32, i32) {
    %c0_i32 = arith.constant 0 : i32
    %c0_i32_0 = arith.constant 0 : i32
    return %c0_i32, %arg0 : i32, i32
  }
}

</mosaic_0001>

<llo_original>
// kernel: tpu_custom_call.1
$region0: #{tpu_custom_call.1}
  #allocation0 [shape = 'u32[]', space=smem, size = 0x4, offset = 0x4, fixed_abs, tag = 'smem constant byte address 0x4 - core index']
  #allocation1 [shape = 'u32[144,128]{1,0:T(1,128)}', space=vmem, size = 0x12000, scoped, tag = 'internal scratch']
  %s0 = inlined_call_operand.vmem [shape: f32[8,128], index: 0, kind: input, shape index: {}]
  %s1 = inlined_call_operand.vmem [shape: f32[128,8], index: 1, kind: input, shape index: {}]
  %s2 = inlined_call_operand.vmem [shape: f32[1,128,128], index: 2, kind: input, shape index: {}]
  %s3 = inlined_call_operand.vmem [shape: f32[128,4], index: 3, kind: input, shape index: {}]
  %s4 = inlined_call_operand.vmem [shape: f32[128,9], index: 4, kind: input, shape index: {}]
  %s5 = inlined_call_operand.vmem [shape: f32[1,129], index: 5, kind: input, shape index: {}]
  %s6 = inlined_call_operand.hbm [shape: f32[16,128], index: 6, kind: output, shape index: {}]
  %s7 = sld [smem:[#allocation0]]
  $region34: #{tpu_custom_call.1} parent=0
    _
  %s9 = ssub.s32 1, %s7
  %s10 = scalar_select 0, %s9, %s7
  $region1: #{tpu_custom_call.1} parent=0
    #allocation2 [shape = 'u8[8192]{0}', space=vmem, size = 0x2000, scoped, tag = 'output window, operand 0, single buffered']
    #allocation3 [shape = 's32[1]{0}', space=sflag, size = 0x4, scoped, tag = 'scoped memory for tpu_custom_call.1']
    %11 = vsyncpa [#allocation3], 0
    // Predicated region
    $region2: #{tpu_custom_call.1} parent=1 // pred_check
      _
    $region3: #{tpu_custom_call.1} parent=1 // pred_check_branch
      %13 = sbr.rel (0) target = $region5
    $region4: #{tpu_custom_call.1} parent=1 // pred_region
      _
    $region5: #{tpu_custom_call.1} parent=1 // pred_fallthru
      _
    // Predicated region
    $region6: #{tpu_custom_call.1} parent=1 // pred_check
      _
    $region7: #{tpu_custom_call.1} parent=1 // pred_check_branch
      %15 = sbr.rel (0) target = $region9
    $region8: #{tpu_custom_call.1} parent=1 // pred_region
      _
    $region9: #{tpu_custom_call.1} parent=1 // pred_fallthru
      _
    // Predicated region
    $region10: #{tpu_custom_call.1} parent=1 // pred_check
      _
    $region11: #{tpu_custom_call.1} parent=1 // pred_check_branch
      %17 = sbr.rel (0) target = $region13
    $region12: #{tpu_custom_call.1} parent=1 // pred_region
      _
    $region13: #{tpu_custom_call.1} parent=1 // pred_fallthru
      _
    // Predicated region
    $region14: #{tpu_custom_call.1} parent=1 // pred_check
      _
    $region15: #{tpu_custom_call.1} parent=1 // pred_check_branch
      %19 = sbr.rel (0) target = $region17
    $region16: #{tpu_custom_call.1} parent=1 // pred_region
      _
    $region17: #{tpu_custom_call.1} parent=1 // pred_fallthru
      _
    // Predicated region
    $region18: #{tpu_custom_call.1} parent=1 // pred_check
      _
    $region19: #{tpu_custom_call.1} parent=1 // pred_check_branch
      %21 = sbr.rel (0) target = $region21
    $region20: #{tpu_custom_call.1} parent=1 // pred_region
      _
    $region21: #{tpu_custom_call.1} parent=1 // pred_fallthru
      _
    // Predicated region
    $region22: #{tpu_custom_call.1} parent=1 // pred_check
      _
    $region23: #{tpu_custom_call.1} parent=1 // pred_check_branch
      %23 = sbr.rel (0) target = $region25
    $region24: #{tpu_custom_call.1} parent=1 // pred_region
      _
    $region25: #{tpu_custom_call.1} parent=1 // pred_fallthru
      _
    %v24 = vld [vmem:[%s1] sm:$0xff]
    %v25 = vld [vmem:[%s1 + $0x8] sm:$0xff]
    %v26 = vld [vmem:[%s1 + $0x10] sm:$0xff]
    %v27 = vld [vmem:[%s1 + $0x18] sm:$0xff]
    %v28 = vld [vmem:[%s1 + $0x20] sm:$0xff]
    %v29 = vld [vmem:[%s1 + $0x28] sm:$0xff]
    %v30 = vld [vmem:[%s1 + $0x30] sm:$0xff]
    %v31 = vld [vmem:[%s1 + $0x38] sm:$0xff]
    %v32 = vld [vmem:[%s1 + $0x40] sm:$0xff]
    %v33 = vld [vmem:[%s1 + $0x48] sm:$0xff]
    %v34 = vld [vmem:[%s1 + $0x50] sm:$0xff]
    %v35 = vld [vmem:[%s1 + $0x58] sm:$0xff]
    %v36 = vld [vmem:[%s1 + $0x60] sm:$0xff]
    %v37 = vld [vmem:[%s1 + $0x68] sm:$0xff]
    %v38 = vld [vmem:[%s1 + $0x70] sm:$0xff]
    %v39 = vld [vmem:[%s1 + $0x78] sm:$0xff]
    %v40 = vld [vmem:[%s0] sm:$0xff]
    %vm41 = vcmask 64512
    %v43 = vsel %vm41, %v24, 0
    %v46 = vsel %vm41, %v25, 0
    %v49 = vsel %vm41, %v26, 0
    %v52 = vsel %vm41, %v27, 0
    %v55 = vsel %vm41, %v28, 0
    %v58 = vsel %vm41, %v29, 0
    %v61 = vsel %vm41, %v30, 0
    %v64 = vsel %vm41, %v31, 0
    %v67 = vsel %vm41, %v32, 0
    %v70 = vsel %vm41, %v33, 0
    %v73 = vsel %vm41, %v34, 0
    %v76 = vsel %vm41, %v35, 0
    %v79 = vsel %vm41, %v36, 0
    %v82 = vsel %vm41, %v37, 0
    %v85 = vsel %vm41, %v38, 0
    %v88 = vsel %vm41, %v39, 0
    %90 = vmatprep.subr.mxu0 0.0
    %91 = vmatpush1.msra.mxu0 0.0
    %92 = vmatprep.subr.mxu0 0.0
    %93 = vmatpush1.msra.mxu0 0.0
    %94 = vmatprep.subr.mxu0 0.0
    %95 = vmatpush1.msra.mxu0 0.0
    %96 = vmatprep.subr.mxu0 0.0
    %97 = vmatpush1.msra.mxu0 0.0
    %98 = vmatprep.subr.mxu0 0.0
    %99 = vmatpush1.msra.mxu0 0.0
    %100 = vmatprep.subr.mxu0 0.0
    %101 = vmatpush1.msra.mxu0 0.0
    %102 = vmatprep.subr.mxu0 0.0
    %103 = vmatpush1.msra.mxu0 0.0
    %104 = vmatprep.subr.mxu0 0.0
    %105 = vmatpush1.msra.mxu0 0.0
    %106 = vmatprep.subr.mxu0 0.0
    %107 = vmatpush1.msra.mxu0 0.0
    %108 = vmatprep.subr.mxu0 0.0
    %109 = vmatpush1.msra.mxu0 0.0
    %110 = vmatprep.subr.mxu0 0.0
    %111 = vmatpush1.msra.mxu0 0.0
    %112 = vmatprep.subr.mxu0 0.0
    %113 = vmatpush1.msra.mxu0 0.0
    %114 = vmatprep.subr.mxu0 0.0
    %115 = vmatpush1.msra.mxu0 0.0
    %116 = vmatprep.subr.mxu0 0.0
    %117 = vmatpush1.msra.mxu0 0.0
    %118 = vmatprep.subr.mxu0 0.0
    %119 = vmatpush1.msra.mxu0 0.0
    %120 = vmatprep.subr.mxu0 0.0
    %121 = vmatpush1.msra.mxu0 %v40
    %122 = vmatprep.subr.mxu0 0.0
    %123 = vmatpush2.msra.mxu0 0.0
    %124 = vmatprep.subr.mxu0 0.0
    %125 = vmatpush2.msra.mxu0 0.0
    %126 = vmatprep.subr.mxu0 0.0
    %127 = vmatpush2.msra.mxu0 0.0
    %128 = vmatprep.subr.mxu0 0.0
    %129 = vmatpush2.msra.mxu0 0.0
    %130 = vmatprep.subr.mxu0 0.0
    %131 = vmatpush2.msra.mxu0 0.0
    %132 = vmatprep.subr.mxu0 0.0
    %133 = vmatpush2.msra.mxu0 0.0
    %134 = vmatprep.subr.mxu0 0.0
    %135 = vmatpush2.msra.mxu0 0.0
    %136 = vmatprep.subr.mxu0 0.0
    %137 = vmatpush2.msra.mxu0 0.0
    %138 = vmatprep.subr.mxu0 0.0
    %139 = vmatpush2.msra.mxu0 0.0
    %140 = vmatprep.subr.mxu0 0.0
    %141 = vmatpush2.msra.mxu0 0.0
    %142 = vmatprep.subr.mxu0 0.0
    %143 = vmatpush2.msra.mxu0 0.0
    %144 = vmatprep.subr.mxu0 0.0
    %145 = vmatpush2.msra.mxu0 0.0
    %146 = vmatprep.subr.mxu0 0.0
    %147 = vmatpush2.msra.mxu0 0.0
    %148 = vmatprep.subr.mxu0 0.0
    %149 = vmatpush2.msra.mxu0 0.0
    %150 = vmatprep.subr.mxu0 0.0
    %151 = vmatpush2.msra.mxu0 0.0
    %152 = vmatprep.subr.mxu0 0.0
    %153 = vmatpush2.msra.mxu0 0.0
    %154 = vmatprep.mubr.f32.mxu0 0.0
    %155 = vmatmul.mubr.f32.gmra.mxu0 %v43
    %v156 = vpop.f32.mrf.mxu0
    %v157 = vadd.f32 0.0, %v156
    %v158 = vpop.f32.mrf.mxu0
    %159 = vmatprep.mubr.f32.mxu0 0.0
    %160 = vmatmul.mubr.f32.gmra.mxu0 %v46
    %v161 = vpop.f32.mrf.mxu0
    %v162 = vadd.f32 0.0, %v161
    %v163 = vpop.f32.mrf.mxu0
    %164 = vmatprep.mubr.f32.mxu0 0.0
    %165 = vmatmul.mubr.f32.gmra.mxu0 %v49
    %v166 = vpop.f32.mrf.mxu0
    %v167 = vadd.f32 0.0, %v166
    %v168 = vpop.f32.mrf.mxu0
    %169 = vmatprep.mubr.f32.mxu0 0.0
    %170 = vmatmul.mubr.f32.gmra.mxu0 %v52
    %v171 = vpop.f32.mrf.mxu0
    %v172 = vadd.f32 0.0, %v171
    %v173 = vpop.f32.mrf.mxu0
    %174 = vmatprep.mubr.f32.mxu0 0.0
    %175 = vmatmul.mubr.f32.gmra.mxu0 %v55
    %v176 = vpop.f32.mrf.mxu0
    %v177 = vadd.f32 0.0, %v176
    %v178 = vpop.f32.mrf.mxu0
    %179 = vmatprep.mubr.f32.mxu0 0.0
    %180 = vmatmul.mubr.f32.gmra.mxu0 %v58
    %v181 = vpop.f32.mrf.mxu0
    %v182 = vadd.f32 0.0, %v181
    %v183 = vpop.f32.mrf.mxu0
    %184 = vmatprep.mubr.f32.mxu0 0.0
    %185 = vmatmul.mubr.f32.gmra.mxu0 %v61
    %v186 = vpop.f32.mrf.mxu0
    %v187 = vadd.f32 0.0, %v186
    %v188 = vpop.f32.mrf.mxu0
    %189 = vmatprep.mubr.f32.mxu0 0.0
    %190 = vmatmul.mubr.f32.gmra.mxu0 %v64
    %v191 = vpop.f32.mrf.mxu0
    %v192 = vadd.f32 0.0, %v191
    %v193 = vpop.f32.mrf.mxu0
    %194 = vmatprep.mubr.f32.mxu0 0.0
    %195 = vmatmul.mubr.f32.gmra.mxu0 %v67
    %v196 = vpop.f32.mrf.mxu0
    %v197 = vadd.f32 0.0, %v196
    %v198 = vpop.f32.mrf.mxu0
    %199 = vmatprep.mubr.f32.mxu0 0.0
    %200 = vmatmul.mubr.f32.gmra.mxu0 %v70
    %v201 = vpop.f32.mrf.mxu0
    %v202 = vadd.f32 0.0, %v201
    %v203 = vpop.f32.mrf.mxu0
    %204 = vmatprep.mubr.f32.mxu0 0.0
    %205 = vmatmul.mubr.f32.gmra.mxu0 %v73
    %v206 = vpop.f32.mrf.mxu0
    %v207 = vadd.f32 0.0, %v206
    %v208 = vpop.f32.mrf.mxu0
    %209 = vmatprep.mubr.f32.mxu0 0.0
    %210 = vmatmul.mubr.f32.gmra.mxu0 %v76
    %v211 = vpop.f32.mrf.mxu0
    %v212 = vadd.f32 0.0, %v211
    %v213 = vpop.f32.mrf.mxu0
    %214 = vmatprep.mubr.f32.mxu0 0.0
    %215 = vmatmul.mubr.f32.gmra.mxu0 %v79
    %v216 = vpop.f32.mrf.mxu0
    %v217 = vadd.f32 0.0, %v216
    %v218 = vpop.f32.mrf.mxu0
    %219 = vmatprep.mubr.f32.mxu0 0.0
    %220 = vmatmul.mubr.f32.gmra.mxu0 %v82
    %v221 = vpop.f32.mrf.mxu0
    %v222 = vadd.f32 0.0, %v221
    %v223 = vpop.f32.mrf.mxu0
    %224 = vmatprep.mubr.f32.mxu0 0.0
    %225 = vmatmul.mubr.f32.gmra.mxu0 %v85
    %v226 = vpop.f32.mrf.mxu0
    %v227 = vadd.f32 0.0, %v226
    %v228 = vpop.f32.mrf.mxu0
    %229 = vmatprep.mubr.f32.mxu0 0.0
    %230 = vmatmul.mubr.f32.gmra.mxu0 %v88
    %v231 = vpop.f32.mrf.mxu0
    %v232 = vadd.f32 0.0, %v231
    %v233 = vpop.f32.mrf.mxu0
    %234 = vdwg.mxu0
    %v235 = vadd.f32 %v157, %v162
    %v236 = vrot.slane %v235, 4
    %v237 = vadd.f32 %v235, %v236
    %v238 = vrot.slane %v237, 2
    %v239 = vadd.f32 %v237, %v238
    %v240 = vrot.slane %v239, 1
    %v241 = vadd.f32 %v239, %v240
    %v242 = vadd.f32 %v167, %v172
    %v243 = vrot.slane %v242, 4
    %v244 = vadd.f32 %v242, %v243
    %v245 = vrot.slane %v244, 2
    %v246 = vadd.f32 %v244, %v245
    %v247 = vrot.slane %v246, 1
    %v248 = vadd.f32 %v246, %v247
    %v249 = vadd.f32 %v177, %v182
    %v250 = vrot.slane %v249, 4
    %v251 = vadd.f32 %v249, %v250
    %v252 = vrot.slane %v251, 2
    %v253 = vadd.f32 %v251, %v252
    %v254 = vrot.slane %v253, 1
    %v255 = vadd.f32 %v253, %v254
    %v256 = vadd.f32 %v187, %v192
    %v257 = vrot.slane %v256, 4
    %v258 = vadd.f32 %v256, %v257
    %v259 = vrot.slane %v258, 2
    %v260 = vadd.f32 %v258, %v259
    %v261 = vrot.slane %v260, 1
    %v262 = vadd.f32 %v260, %v261
    %v263 = vadd.f32 %v197, %v202
    %v264 = vrot.slane %v263, 4
    %v265 = vadd.f32 %v263, %v264
    %v266 = vrot.slane %v265, 2
    %v267 = vadd.f32 %v265, %v266
    %v268 = vrot.slane %v267, 1
    %v269 = vadd.f32 %v267, %v268
    %v270 = vadd.f32 %v207, %v212
    %v271 = vrot.slane %v270, 4
    %v272 = vadd.f32 %v270, %v271
    %v273 = vrot.slane %v272, 2
    %v274 = vadd.f32 %v272, %v273
    %v275 = vrot.slane %v274, 1
    %v276 = vadd.f32 %v274, %v275
    %v277 = vadd.f32 %v217, %v222
    %v278 = vrot.slane %v277, 4
    %v279 = vadd.f32 %v277, %v278
    %v280 = vrot.slane %v279, 2
    %v281 = vadd.f32 %v279, %v280
    %v282 = vrot.slane %v281, 1
    %v283 = vadd.f32 %v281, %v282
    %v284 = vadd.f32 %v227, %v232
    %v285 = vrot.slane %v284, 4
    %v286 = vadd.f32 %v284, %v285
    %v287 = vrot.slane %v286, 2
    %v288 = vadd.f32 %v286, %v287
    %v289 = vrot.slane %v288, 1
    %v290 = vadd.f32 %v288, %v289
    %v291 = vrcp.pop 16.0
    %v292 = vmul.f32 %v241, %v291
    %v293 = vmul.f32 %v248, %v291
    %v294 = vmul.f32 %v255, %v291
    %v295 = vmul.f32 %v262, %v291
    %v296 = vmul.f32 %v269, %v291
    %v297 = vmul.f32 %v276, %v291
    %v298 = vmul.f32 %v283, %v291
    %v299 = vmul.f32 %v290, %v291
    %v300 = vsub.f32 %v157, %v292
    %v301 = vsub.f32 %v162, %v292
    %v302 = vsub.f32 %v167, %v293
    %v303 = vsub.f32 %v172, %v293
    %v304 = vsub.f32 %v177, %v294
    %v305 = vsub.f32 %v182, %v294
    %v306 = vsub.f32 %v187, %v295
    %v307 = vsub.f32 %v192, %v295
    %v308 = vsub.f32 %v197, %v296
    %v309 = vsub.f32 %v202, %v296
    %v310 = vsub.f32 %v207, %v297
    %v311 = vsub.f32 %v212, %v297
    %v312 = vsub.f32 %v217, %v298
    %v313 = vsub.f32 %v222, %v298
    %v314 = vsub.f32 %v227, %v299
    %v315 = vsub.f32 %v232, %v299
    %v316 = vmul.f32 %v300, %v300
    %v317 = vmul.f32 %v301, %v301
    %v318 = vmul.f32 %v302, %v302
    %v319 = vmul.f32 %v303, %v303
    %v320 = vmul.f32 %v304, %v304
    %v321 = vmul.f32 %v305, %v305
    %v322 = vmul.f32 %v306, %v306
    %v323 = vmul.f32 %v307, %v307
    %v324 = vmul.f32 %v308, %v308
    %v325 = vmul.f32 %v309, %v309
    %v326 = vmul.f32 %v310, %v310
    %v327 = vmul.f32 %v311, %v311
    %v328 = vmul.f32 %v312, %v312
    %v329 = vmul.f32 %v313, %v313
    %v330 = vmul.f32 %v314, %v314
    %v331 = vmul.f32 %v315, %v315
    %v332 = vadd.f32 %v316, %v317
    %v333 = vrot.slane %v332, 4
    %v334 = vadd.f32 %v332, %v333
    %v335 = vrot.slane %v334, 2
    %v336 = vadd.f32 %v334, %v335
    %v337 = vrot.slane %v336, 1
    %v338 = vadd.f32 %v336, %v337
    %v339 = vadd.f32 %v318, %v319
    %v340 = vrot.slane %v339, 4
    %v341 = vadd.f32 %v339, %v340
    %v342 = vrot.slane %v341, 2
    %v343 = vadd.f32 %v341, %v342
    %v344 = vrot.slane %v343, 1
    %v345 = vadd.f32 %v343, %v344
    %v346 = vadd.f32 %v320, %v321
    %v347 = vrot.slane %v346, 4
    %v348 = vadd.f32 %v346, %v347
    %v349 = vrot.slane %v348, 2
    %v350 = vadd.f32 %v348, %v349
    %v351 = vrot.slane %v350, 1
    %v352 = vadd.f32 %v350, %v351
    %v353 = vadd.f32 %v322, %v323
    %v354 = vrot.slane %v353, 4
    %v355 = vadd.f32 %v353, %v354
    %v356 = vrot.slane %v355, 2
    %v357 = vadd.f32 %v355, %v356
    %v358 = vrot.slane %v357, 1
    %v359 = vadd.f32 %v357, %v358
    %v360 = vadd.f32 %v324, %v325
    %v361 = vrot.slane %v360, 4
    %v362 = vadd.f32 %v360, %v361
    %v363 = vrot.slane %v362, 2
    %v364 = vadd.f32 %v362, %v363
    %v365 = vrot.slane %v364, 1
    %v366 = vadd.f32 %v364, %v365
    %v367 = vadd.f32 %v326, %v327
    %v368 = vrot.slane %v367, 4
    %v369 = vadd.f32 %v367, %v368
    %v370 = vrot.slane %v369, 2
    %v371 = vadd.f32 %v369, %v370
    %v372 = vrot.slane %v371, 1
    %v373 = vadd.f32 %v371, %v372
    %v374 = vadd.f32 %v328, %v329
    %v375 = vrot.slane %v374, 4
    %v376 = vadd.f32 %v374, %v375
    %v377 = vrot.slane %v376, 2
    %v378 = vadd.f32 %v376, %v377
    %v379 = vrot.slane %v378, 1
    %v380 = vadd.f32 %v378, %v379
    %v381 = vadd.f32 %v330, %v331
    %v382 = vrot.slane %v381, 4
    %v383 = vadd.f32 %v381, %v382
    %v384 = vrot.slane %v383, 2
    %v385 = vadd.f32 %v383, %v384
    %v386 = vrot.slane %v385, 1
    %v387 = vadd.f32 %v385, %v386
    %v388 = vmul.f32 %v338, %v291
    %v389 = vmul.f32 %v345, %v291
    %v390 = vmul.f32 %v352, %v291
    %v391 = vmul.f32 %v359, %v291
    %v392 = vmul.f32 %v366, %v291
    %v393 = vmul.f32 %v373, %v291
    %v394 = vmul.f32 %v380, %v291
    %v395 = vmul.f32 %v387, %v291
    %v396 = vadd.f32 %v388, 1e-05
    %v397 = vadd.f32 %v389, 1e-05
    %v398 = vadd.f32 %v390, 1e-05
    %v399 = vadd.f32 %v391, 1e-05
    %v400 = vadd.f32 %v392, 1e-05
    %v401 = vadd.f32 %v393, 1e-05
    %v402 = vadd.f32 %v394, 1e-05
    %v403 = vadd.f32 %v395, 1e-05
    %v404 = vrsqrt.pop %v396
    %v405 = vrsqrt.pop %v397
    %v406 = vrsqrt.pop %v398
    %v407 = vrsqrt.pop %v399
    %v408 = vrsqrt.pop %v400
    %v409 = vrsqrt.pop %v401
    %v410 = vrsqrt.pop %v402
    %v411 = vrsqrt.pop %v403
    %v412 = vmul.f32 %v300, %v404
    %v413 = vmul.f32 %v301, %v404
    %v414 = vmul.f32 %v302, %v405
    %v415 = vmul.f32 %v303, %v405
    %v416 = vmul.f32 %v304, %v406
    %v417 = vmul.f32 %v305, %v406
    %v418 = vmul.f32 %v306, %v407
    %v419 = vmul.f32 %v307, %v407
    %v420 = vmul.f32 %v308, %v408
    %v421 = vmul.f32 %v309, %v408
    %v422 = vmul.f32 %v310, %v409
    %v423 = vmul.f32 %v311, %v409
    %v424 = vmul.f32 %v312, %v410
    %v425 = vmul.f32 %v313, %v410
    %v426 = vmul.f32 %v314, %v411
    %v427 = vmul.f32 %v315, %v411
    %v428 = vld [vmem:[%s3] sm:$0xff]
    %v429 = vld [vmem:[%s3 + $0x8] sm:$0xff]
    %v430 = vld [vmem:[%s3 + $0x10] sm:$0xff]
    %v431 = vld [vmem:[%s3 + $0x18] sm:$0xff]
    %v432 = vld [vmem:[%s3 + $0x20] sm:$0xff]
    %v433 = vld [vmem:[%s3 + $0x28] sm:$0xff]
    %v434 = vld [vmem:[%s3 + $0x30] sm:$0xff]
    %v435 = vld [vmem:[%s3 + $0x38] sm:$0xff]
    %v436 = vld [vmem:[%s3 + $0x40] sm:$0xff]
    %v437 = vld [vmem:[%s3 + $0x48] sm:$0xff]
    %v438 = vld [vmem:[%s3 + $0x50] sm:$0xff]
    %v439 = vld [vmem:[%s3 + $0x58] sm:$0xff]
    %v440 = vld [vmem:[%s3 + $0x60] sm:$0xff]
    %v441 = vld [vmem:[%s3 + $0x68] sm:$0xff]
    %v442 = vld [vmem:[%s3 + $0x70] sm:$0xff]
    %v443 = vld [vmem:[%s3 + $0x78] sm:$0xff]
    %445 = vset.pattern.permute.xlu0 0
    %446 = vperm.xlu0 %445, %v428
    %v447 = vpop.permute.xlu0 %446
    %450 = vset.pattern.permute.xlu0 0
    %451 = vperm.xlu0 %450, %v429
    %v452 = vpop.permute.xlu0 %451
    %455 = vset.pattern.permute.xlu0 0
    %456 = vperm.xlu0 %455, %v430
    %v457 = vpop.permute.xlu0 %456
    %460 = vset.pattern.permute.xlu0 0
    %461 = vperm.xlu0 %460, %v431
    %v462 = vpop.permute.xlu0 %461
    %465 = vset.pattern.permute.xlu0 0
    %466 = vperm.xlu0 %465, %v432
    %v467 = vpop.permute.xlu0 %466
    %470 = vset.pattern.permute.xlu0 0
    %471 = vperm.xlu0 %470, %v433
    %v472 = vpop.permute.xlu0 %471
    %475 = vset.pattern.permute.xlu0 0
    %476 = vperm.xlu0 %475, %v434
    %v477 = vpop.permute.xlu0 %476
    %480 = vset.pattern.permute.xlu0 0
    %481 = vperm.xlu0 %480, %v435
    %v482 = vpop.permute.xlu0 %481
    %485 = vset.pattern.permute.xlu0 0
    %486 = vperm.xlu0 %485, %v436
    %v487 = vpop.permute.xlu0 %486
    %490 = vset.pattern.permute.xlu0 0
    %491 = vperm.xlu0 %490, %v437
    %v492 = vpop.permute.xlu0 %491
    %495 = vset.pattern.permute.xlu0 0
    %496 = vperm.xlu0 %495, %v438
    %v497 = vpop.permute.xlu0 %496
    %500 = vset.pattern.permute.xlu0 0
    %501 = vperm.xlu0 %500, %v439
    %v502 = vpop.permute.xlu0 %501
    %505 = vset.pattern.permute.xlu0 0
    %506 = vperm.xlu0 %505, %v440
    %v507 = vpop.permute.xlu0 %506
    %510 = vset.pattern.permute.xlu0 0
    %511 = vperm.xlu0 %510, %v441
    %v512 = vpop.permute.xlu0 %511
    %515 = vset.pattern.permute.xlu0 0
    %516 = vperm.xlu0 %515, %v442
    %v517 = vpop.permute.xlu0 %516
    %520 = vset.pattern.permute.xlu0 0
    %521 = vperm.xlu0 %520, %v443
    %v522 = vpop.permute.xlu0 %521
    %v524 = vmul.f32 %v412, %v447
    %v525 = vmul.f32 %v413, %v452
    %v526 = vmul.f32 %v414, %v457
    %v527 = vmul.f32 %v415, %v462
    %v528 = vmul.f32 %v416, %v467
    %v529 = vmul.f32 %v417, %v472
    %v530 = vmul.f32 %v418, %v477
    %v531 = vmul.f32 %v419, %v482
    %v532 = vmul.f32 %v420, %v487
    %v533 = vmul.f32 %v421, %v492
    %v534 = vmul.f32 %v422, %v497
    %v535 = vmul.f32 %v423, %v502
    %v536 = vmul.f32 %v424, %v507
    %v537 = vmul.f32 %v425, %v512
    %v538 = vmul.f32 %v426, %v517
    %v539 = vmul.f32 %v427, %v522
    %540 = vset.pattern.permute.xlu0 1
    %541 = vperm.xlu0 %540, %v428
    %v542 = vpop.permute.xlu0 %541
    %544 = vset.pattern.permute.xlu0 1
    %545 = vperm.xlu0 %544, %v429
    %v546 = vpop.permute.xlu0 %545
    %548 = vset.pattern.permute.xlu0 1
    %549 = vperm.xlu0 %548, %v430
    %v550 = vpop.permute.xlu0 %549
    %552 = vset.pattern.permute.xlu0 1
    %553 = vperm.xlu0 %552, %v431
    %v554 = vpop.permute.xlu0 %553
    %556 = vset.pattern.permute.xlu0 1
    %557 = vperm.xlu0 %556, %v432
    %v558 = vpop.permute.xlu0 %557
    %560 = vset.pattern.permute.xlu0 1
    %561 = vperm.xlu0 %560, %v433
    %v562 = vpop.permute.xlu0 %561
    %564 = vset.pattern.permute.xlu0 1
    %565 = vperm.xlu0 %564, %v434
    %v566 = vpop.permute.xlu0 %565
    %568 = vset.pattern.permute.xlu0 1
    %569 = vperm.xlu0 %568, %v435
    %v570 = vpop.permute.xlu0 %569
    %572 = vset.pattern.permute.xlu0 1
    %573 = vperm.xlu0 %572, %v436
    %v574 = vpop.permute.xlu0 %573
    %576 = vset.pattern.permute.xlu0 1
    %577 = vperm.xlu0 %576, %v437
    %v578 = vpop.permute.xlu0 %577
    %580 = vset.pattern.permute.xlu0 1
    %581 = vperm.xlu0 %580, %v438
    %v582 = vpop.permute.xlu0 %581
    %584 = vset.pattern.permute.xlu0 1
    %585 = vperm.xlu0 %584, %v439
    %v586 = vpop.permute.xlu0 %585
    %588 = vset.pattern.permute.xlu0 1
    %589 = vperm.xlu0 %588, %v440
    %v590 = vpop.permute.xlu0 %589
    %592 = vset.pattern.permute.xlu0 1
    %593 = vperm.xlu0 %592, %v441
    %v594 = vpop.permute.xlu0 %593
    %596 = vset.pattern.permute.xlu0 1
    %597 = vperm.xlu0 %596, %v442
    %v598 = vpop.permute.xlu0 %597
    %600 = vset.pattern.permute.xlu0 1
    %601 = vperm.xlu0 %600, %v443
    %v602 = vpop.permute.xlu0 %601
    %v604 = vadd.f32 %v524, %v542
    %v605 = vadd.f32 %v525, %v546
    %v606 = vadd.f32 %v526, %v550
    %v607 = vadd.f32 %v527, %v554
    %v608 = vadd.f32 %v528, %v558
    %v609 = vadd.f32 %v529, %v562
    %v610 = vadd.f32 %v530, %v566
    %v611 = vadd.f32 %v531, %v570
    %v612 = vadd.f32 %v532, %v574
    %v613 = vadd.f32 %v533, %v578
    %v614 = vadd.f32 %v534, %v582
    %v615 = vadd.f32 %v535, %v586
    %v616 = vadd.f32 %v536, %v590
    %v617 = vadd.f32 %v537, %v594
    %v618 = vadd.f32 %v538, %v598
    %v619 = vadd.f32 %v539, %v602
    %v620 = vmax.f32 %v604, 0.0
    %v621 = vmax.f32 %v605, 0.0
    %v622 = vmax.f32 %v606, 0.0
    %v623 = vmax.f32 %v607, 0.0
    %v624 = vmax.f32 %v608, 0.0
    %v625 = vmax.f32 %v609, 0.0
    %v626 = vmax.f32 %v610, 0.0
    %v627 = vmax.f32 %v611, 0.0
    %v628 = vmax.f32 %v612, 0.0
    %v629 = vmax.f32 %v613, 0.0
    %v630 = vmax.f32 %v614, 0.0
    %v631 = vmax.f32 %v615, 0.0
    %v632 = vmax.f32 %v616, 0.0
    %v633 = vmax.f32 %v617, 0.0
    %v634 = vmax.f32 %v618, 0.0
    %v635 = vmax.f32 %v619, 0.0
    %v636 = vld [vmem:[%s2] sm:$0xff]
    %v637 = vld [vmem:[%s2 + $0x8] sm:$0xff]
    %v638 = vld [vmem:[%s2 + $0x10] sm:$0xff]
    %v639 = vld [vmem:[%s2 + $0x18] sm:$0xff]
    %v640 = vld [vmem:[%s2 + $0x20] sm:$0xff]
    %v641 = vld [vmem:[%s2 + $0x28] sm:$0xff]
    %v642 = vld [vmem:[%s2 + $0x30] sm:$0xff]
    %v643 = vld [vmem:[%s2 + $0x38] sm:$0xff]
    %v644 = vld [vmem:[%s2 + $0x40] sm:$0xff]
    %v645 = vld [vmem:[%s2 + $0x48] sm:$0xff]
    %v646 = vld [vmem:[%s2 + $0x50] sm:$0xff]
    %v647 = vld [vmem:[%s2 + $0x58] sm:$0xff]
    %v648 = vld [vmem:[%s2 + $0x60] sm:$0xff]
    %v649 = vld [vmem:[%s2 + $0x68] sm:$0xff]
    %v650 = vld [vmem:[%s2 + $0x70] sm:$0xff]
    %v651 = vld [vmem:[%s2 + $0x78] sm:$0xff]
    %652 = vmatprep.subr.mxu0 0.0
    %653 = vmatpush1.msra.mxu0 %v635
    %654 = vmatprep.subr.mxu0 0.0
    %655 = vmatpush1.msra.mxu0 %v634
    %656 = vmatprep.subr.mxu0 0.0
    %657 = vmatpush1.msra.mxu0 %v633
    %658 = vmatprep.subr.mxu0 0.0
    %659 = vmatpush1.msra.mxu0 %v632
    %660 = vmatprep.subr.mxu0 0.0
    %661 = vmatpush1.msra.mxu0 %v631
    %662 = vmatprep.subr.mxu0 0.0
    %663 = vmatpush1.msra.mxu0 %v630
    %664 = vmatprep.subr.mxu0 0.0
    %665 = vmatpush1.msra.mxu0 %v629
    %666 = vmatprep.subr.mxu0 0.0
    %667 = vmatpush1.msra.mxu0 %v628
    %668 = vmatprep.subr.mxu0 0.0
    %669 = vmatpush1.msra.mxu0 %v627
    %670 = vmatprep.subr.mxu0 0.0
    %671 = vmatpush1.msra.mxu0 %v626
    %672 = vmatprep.subr.mxu0 0.0
    %673 = vmatpush1.msra.mxu0 %v625
    %674 = vmatprep.subr.mxu0 0.0
    %675 = vmatpush1.msra.mxu0 %v624
    %676 = vmatprep.subr.mxu0 0.0
    %677 = vmatpush1.msra.mxu0 %v623
    %678 = vmatprep.subr.mxu0 0.0
    %679 = vmatpush1.msra.mxu0 %v622
    %680 = vmatprep.subr.mxu0 0.0
    %681 = vmatpush1.msra.mxu0 %v621
    %682 = vmatprep.subr.mxu0 0.0
    %683 = vmatpush1.msra.mxu0 %v620
    %684 = vmatprep.subr.mxu0 0.0
    %685 = vmatpush2.msra.mxu0 0.0
    %686 = vmatprep.subr.mxu0 0.0
    %687 = vmatpush2.msra.mxu0 0.0
    %688 = vmatprep.subr.mxu0 0.0
    %689 = vmatpush2.msra.mxu0 0.0
    %690 = vmatprep.subr.mxu0 0.0
    %691 = vmatpush2.msra.mxu0 0.0
    %692 = vmatprep.subr.mxu0 0.0
    %693 = vmatpush2.msra.mxu0 0.0
    %694 = vmatprep.subr.mxu0 0.0
    %695 = vmatpush2.msra.mxu0 0.0
    %696 = vmatprep.subr.mxu0 0.0
    %697 = vmatpush2.msra.mxu0 0.0
    %698 = vmatprep.subr.mxu0 0.0
    %699 = vmatpush2.msra.mxu0 0.0
    %700 = vmatprep.subr.mxu0 0.0
    %701 = vmatpush2.msra.mxu0 0.0
    %702 = vmatprep.subr.mxu0 0.0
    %703 = vmatpush2.msra.mxu0 0.0
    %704 = vmatprep.subr.mxu0 0.0
    %705 = vmatpush2.msra.mxu0 0.0
    %706 = vmatprep.subr.mxu0 0.0
    %707 = vmatpush2.msra.mxu0 0.0
    %708 = vmatprep.subr.mxu0 0.0
    %709 = vmatpush2.msra.mxu0 0.0
    %710 = vmatprep.subr.mxu0 0.0
    %711 = vmatpush2.msra.mxu0 0.0
    %712 = vmatprep.subr.mxu0 0.0
    %713 = vmatpush2.msra.mxu0 0.0
    %714 = vmatprep.subr.mxu0 0.0
    %715 = vmatpush2.msra.mxu0 0.0
    %716 = vmatprep.mubr.f32.mxu0 0.0
    %717 = vmatmul.mubr.f32.gmra.mxu0 %v636
    %v718 = vpop.f32.mrf.mxu0
    %v719 = vadd.f32 0.0, %v718
    %v720 = vpop.f32.mrf.mxu0
    %721 = vmatprep.mubr.f32.mxu0 0.0
    %722 = vmatmul.mubr.f32.gmra.mxu0 %v637
    %v723 = vpop.f32.mrf.mxu0
    %v724 = vadd.f32 0.0, %v723
    %v725 = vpop.f32.mrf.mxu0
    %726 = vmatprep.mubr.f32.mxu0 0.0
    %727 = vmatmul.mubr.f32.gmra.mxu0 %v638
    %v728 = vpop.f32.mrf.mxu0
    %v729 = vadd.f32 0.0, %v728
    %v730 = vpop.f32.mrf.mxu0
    %731 = vmatprep.mubr.f32.mxu0 0.0
    %732 = vmatmul.mubr.f32.gmra.mxu0 %v639
    %v733 = vpop.f32.mrf.mxu0
    %v734 = vadd.f32 0.0, %v733
    %v735 = vpop.f32.mrf.mxu0
    %736 = vmatprep.mubr.f32.mxu0 0.0
    %737 = vmatmul.mubr.f32.gmra.mxu0 %v640
    %v738 = vpop.f32.mrf.mxu0
    %v739 = vadd.f32 0.0, %v738
    %v740 = vpop.f32.mrf.mxu0
    %741 = vmatprep.mubr.f32.mxu0 0.0
    %742 = vmatmul.mubr.f32.gmra.mxu0 %v641
    %v743 = vpop.f32.mrf.mxu0
    %v744 = vadd.f32 0.0, %v743
    %v745 = vpop.f32.mrf.mxu0
    %746 = vmatprep.mubr.f32.mxu0 0.0
    %747 = vmatmul.mubr.f32.gmra.mxu0 %v642
    %v748 = vpop.f32.mrf.mxu0
    %v749 = vadd.f32 0.0, %v748
    %v750 = vpop.f32.mrf.mxu0
    %751 = vmatprep.mubr.f32.mxu0 0.0
    %752 = vmatmul.mubr.f32.gmra.mxu0 %v643
    %v753 = vpop.f32.mrf.mxu0
    %v754 = vadd.f32 0.0, %v753
    %v755 = vpop.f32.mrf.mxu0
    %756 = vmatprep.mubr.f32.mxu0 0.0
    %757 = vmatmul.mubr.f32.gmra.mxu0 %v644
    %v758 = vpop.f32.mrf.mxu0
    %v759 = vadd.f32 0.0, %v758
    %v760 = vpop.f32.mrf.mxu0
    %761 = vmatprep.mubr.f32.mxu0 0.0
    %762 = vmatmul.mubr.f32.gmra.mxu0 %v645
    %v763 = vpop.f32.mrf.mxu0
    %v764 = vadd.f32 0.0, %v763
    %v765 = vpop.f32.mrf.mxu0
    %766 = vmatprep.mubr.f32.mxu0 0.0
    %767 = vmatmul.mubr.f32.gmra.mxu0 %v646
    %v768 = vpop.f32.mrf.mxu0
    %v769 = vadd.f32 0.0, %v768
    %v770 = vpop.f32.mrf.mxu0
    %771 = vmatprep.mubr.f32.mxu0 0.0
    %772 = vmatmul.mubr.f32.gmra.mxu0 %v647
    %v773 = vpop.f32.mrf.mxu0
    %v774 = vadd.f32 0.0, %v773
    %v775 = vpop.f32.mrf.mxu0
    %776 = vmatprep.mubr.f32.mxu0 0.0
    %777 = vmatmul.mubr.f32.gmra.mxu0 %v648
    %v778 = vpop.f32.mrf.mxu0
    %v779 = vadd.f32 0.0, %v778
    %v780 = vpop.f32.mrf.mxu0
    %781 = vmatprep.mubr.f32.mxu0 0.0
    %782 = vmatmul.mubr.f32.gmra.mxu0 %v649
    %v783 = vpop.f32.mrf.mxu0
    %v784 = vadd.f32 0.0, %v783
    %v785 = vpop.f32.mrf.mxu0
    %786 = vmatprep.mubr.f32.mxu0 0.0
    %787 = vmatmul.mubr.f32.gmra.mxu0 %v650
    %v788 = vpop.f32.mrf.mxu0
    %v789 = vadd.f32 0.0, %v788
    %v790 = vpop.f32.mrf.mxu0
    %791 = vmatprep.mubr.f32.mxu0 0.0
    %792 = vmatmul.mubr.f32.gmra.mxu0 %v651
    %v793 = vpop.f32.mrf.mxu0
    %v794 = vadd.f32 0.0, %v793
    %v795 = vpop.f32.mrf.mxu0
    %796 = vdwg.mxu0
    %v797 = vadd.f32 %v719, %v724
    %v798 = vrot.slane %v797, 4
    %v799 = vadd.f32 %v797, %v798
    %v800 = vrot.slane %v799, 2
    %v801 = vadd.f32 %v799, %v800
    %v802 = vrot.slane %v801, 1
    %v803 = vadd.f32 %v801, %v802
    %v804 = vadd.f32 %v729, %v734
    %v805 = vrot.slane %v804, 4
    %v806 = vadd.f32 %v804, %v805
    %v807 = vrot.slane %v806, 2
    %v808 = vadd.f32 %v806, %v807
    %v809 = vrot.slane %v808, 1
    %v810 = vadd.f32 %v808, %v809
    %v811 = vadd.f32 %v739, %v744
    %v812 = vrot.slane %v811, 4
    %v813 = vadd.f32 %v811, %v812
    %v814 = vrot.slane %v813, 2
    %v815 = vadd.f32 %v813, %v814
    %v816 = vrot.slane %v815, 1
    %v817 = vadd.f32 %v815, %v816
    %v818 = vadd.f32 %v749, %v754
    %v819 = vrot.slane %v818, 4
    %v820 = vadd.f32 %v818, %v819
    %v821 = vrot.slane %v820, 2
    %v822 = vadd.f32 %v820, %v821
    %v823 = vrot.slane %v822, 1
    %v824 = vadd.f32 %v822, %v823
    %v825 = vadd.f32 %v759, %v764
    %v826 = vrot.slane %v825, 4
    %v827 = vadd.f32 %v825, %v826
    %v828 = vrot.slane %v827, 2
    %v829 = vadd.f32 %v827, %v828
    %v830 = vrot.slane %v829, 1
    %v831 = vadd.f32 %v829, %v830
    %v832 = vadd.f32 %v769, %v774
    %v833 = vrot.slane %v832, 4
    %v834 = vadd.f32 %v832, %v833
    %v835 = vrot.slane %v834, 2
    %v836 = vadd.f32 %v834, %v835
    %v837 = vrot.slane %v836, 1
    %v838 = vadd.f32 %v836, %v837
    %v839 = vadd.f32 %v779, %v784
    %v840 = vrot.slane %v839, 4
    %v841 = vadd.f32 %v839, %v840
    %v842 = vrot.slane %v841, 2
    %v843 = vadd.f32 %v841, %v842
    %v844 = vrot.slane %v843, 1
    %v845 = vadd.f32 %v843, %v844
    %v846 = vadd.f32 %v789, %v794
    %v847 = vrot.slane %v846, 4
    %v848 = vadd.f32 %v846, %v847
    %v849 = vrot.slane %v848, 2
    %v850 = vadd.f32 %v848, %v849
    %v851 = vrot.slane %v850, 1
    %v852 = vadd.f32 %v850, %v851
    %v853 = vmul.f32 %v803, %v291
    %v854 = vmul.f32 %v810, %v291
    %v855 = vmul.f32 %v817, %v291
    %v856 = vmul.f32 %v824, %v291
    %v857 = vmul.f32 %v831, %v291
    %v858 = vmul.f32 %v838, %v291
    %v859 = vmul.f32 %v845, %v291
    %v860 = vmul.f32 %v852, %v291
    %v861 = vsub.f32 %v719, %v853
    %v862 = vsub.f32 %v724, %v853
    %v863 = vsub.f32 %v729, %v854
    %v864 = vsub.f32 %v734, %v854
    %v865 = vsub.f32 %v739, %v855
    %v866 = vsub.f32 %v744, %v855
    %v867 = vsub.f32 %v749, %v856
    %v868 = vsub.f32 %v754, %v856
    %v869 = vsub.f32 %v759, %v857
    %v870 = vsub.f32 %v764, %v857
    %v871 = vsub.f32 %v769, %v858
    %v872 = vsub.f32 %v774, %v858
    %v873 = vsub.f32 %v779, %v859
    %v874 = vsub.f32 %v784, %v859
    %v875 = vsub.f32 %v789, %v860
    %v876 = vsub.f32 %v794, %v860
    %v877 = vmul.f32 %v861, %v861
    %v878 = vmul.f32 %v862, %v862
    %v879 = vmul.f32 %v863, %v863
    %v880 = vmul.f32 %v864, %v864
    %v881 = vmul.f32 %v865, %v865
    %v882 = vmul.f32 %v866, %v866
    %v883 = vmul.f32 %v867, %v867
    %v884 = vmul.f32 %v868, %v868
    %v885 = vmul.f32 %v869, %v869
    %v886 = vmul.f32 %v870, %v870
    %v887 = vmul.f32 %v871, %v871
    %v888 = vmul.f32 %v872, %v872
    %v889 = vmul.f32 %v873, %v873
    %v890 = vmul.f32 %v874, %v874
    %v891 = vmul.f32 %v875, %v875
    %v892 = vmul.f32 %v876, %v876
    %v893 = vadd.f32 %v877, %v878
    %v894 = vrot.slane %v893, 4
    %v895 = vadd.f32 %v893, %v894
    %v896 = vrot.slane %v895, 2
    %v897 = vadd.f32 %v895, %v896
    %v898 = vrot.slane %v897, 1
    %v899 = vadd.f32 %v897, %v898
    %v900 = vadd.f32 %v879, %v880
    %v901 = vrot.slane %v900, 4
    %v902 = vadd.f32 %v900, %v901
    %v903 = vrot.slane %v902, 2
    %v904 = vadd.f32 %v902, %v903
    %v905 = vrot.slane %v904, 1
    %v906 = vadd.f32 %v904, %v905
    %v907 = vadd.f32 %v881, %v882
    %v908 = vrot.slane %v907, 4
    %v909 = vadd.f32 %v907, %v908
    %v910 = vrot.slane %v909, 2
    %v911 = vadd.f32 %v909, %v910
    %v912 = vrot.slane %v911, 1
    %v913 = vadd.f32 %v911, %v912
    %v914 = vadd.f32 %v883, %v884
    %v915 = vrot.slane %v914, 4
    %v916 = vadd.f32 %v914, %v915
    %v917 = vrot.slane %v916, 2
    %v918 = vadd.f32 %v916, %v917
    %v919 = vrot.slane %v918, 1
    %v920 = vadd.f32 %v918, %v919
    %v921 = vadd.f32 %v885, %v886
    %v922 = vrot.slane %v921, 4
    %v923 = vadd.f32 %v921, %v922
    %v924 = vrot.slane %v923, 2
    %v925 = vadd.f32 %v923, %v924
    %v926 = vrot.slane %v925, 1
    %v927 = vadd.f32 %v925, %v926
    %v928 = vadd.f32 %v887, %v888
    %v929 = vrot.slane %v928, 4
    %v930 = vadd.f32 %v928, %v929
    %v931 = vrot.slane %v930, 2
    %v932 = vadd.f32 %v930, %v931
    %v933 = vrot.slane %v932, 1
    %v934 = vadd.f32 %v932, %v933
    %v935 = vadd.f32 %v889, %v890
    %v936 = vrot.slane %v935, 4
    %v937 = vadd.f32 %v935, %v936
    %v938 = vrot.slane %v937, 2
    %v939 = vadd.f32 %v937, %v938
    %v940 = vrot.slane %v939, 1
    %v941 = vadd.f32 %v939, %v940
    %v942 = vadd.f32 %v891, %v892
    %v943 = vrot.slane %v942, 4
    %v944 = vadd.f32 %v942, %v943
    %v945 = vrot.slane %v944, 2
    %v946 = vadd.f32 %v944, %v945
    %v947 = vrot.slane %v946, 1
    %v948 = vadd.f32 %v946, %v947
    %v949 = vmul.f32 %v899, %v291
    %v950 = vmul.f32 %v906, %v291
    %v951 = vmul.f32 %v913, %v291
    %v952 = vmul.f32 %v920, %v291
    %v953 = vmul.f32 %v927, %v291
    %v954 = vmul.f32 %v934, %v291
    %v955 = vmul.f32 %v941, %v291
    %v956 = vmul.f32 %v948, %v291
    %v957 = vadd.f32 %v949, 1e-05
    %v958 = vadd.f32 %v950, 1e-05
    %v959 = vadd.f32 %v951, 1e-05
    %v960 = vadd.f32 %v952, 1e-05
    %v961 = vadd.f32 %v953, 1e-05
    %v962 = vadd.f32 %v954, 1e-05
    %v963 = vadd.f32 %v955, 1e-05
    %v964 = vadd.f32 %v956, 1e-05
    %v965 = vrsqrt.pop %v957
    %v966 = vrsqrt.pop %v958
    %v967 = vrsqrt.pop %v959
    %v968 = vrsqrt.pop %v960
    %v969 = vrsqrt.pop %v961
    %v970 = vrsqrt.pop %v962
    %v971 = vrsqrt.pop %v963
    %v972 = vrsqrt.pop %v964
    %v973 = vmul.f32 %v861, %v965
    %v974 = vmul.f32 %v862, %v965
    %v975 = vmul.f32 %v863, %v966
    %v976 = vmul.f32 %v864, %v966
    %v977 = vmul.f32 %v865, %v967
    %v978 = vmul.f32 %v866, %v967
    %v979 = vmul.f32 %v867, %v968
    %v980 = vmul.f32 %v868, %v968
    %v981 = vmul.f32 %v869, %v969
    %v982 = vmul.f32 %v870, %v969
    %v983 = vmul.f32 %v871, %v970
    %v984 = vmul.f32 %v872, %v970
    %v985 = vmul.f32 %v873, %v971
    %v986 = vmul.f32 %v874, %v971
    %v987 = vmul.f32 %v875, %v972
    %v988 = vmul.f32 %v876, %v972
    %989 = vset.pattern.permute.xlu0 2
    %990 = vperm.xlu0 %989, %v428
    %v991 = vpop.permute.xlu0 %990
    %993 = vset.pattern.permute.xlu0 2
    %994 = vperm.xlu0 %993, %v429
    %v995 = vpop.permute.xlu0 %994
    %997 = vset.pattern.permute.xlu0 2
    %998 = vperm.xlu0 %997, %v430
    %v999 = vpop.permute.xlu0 %998
    %1001 = vset.pattern.permute.xlu0 2
    %1002 = vperm.xlu0 %1001, %v431
    %v1003 = vpop.permute.xlu0 %1002
    %1005 = vset.pattern.permute.xlu0 2
    %1006 = vperm.xlu0 %1005, %v432
    %v1007 = vpop.permute.xlu0 %1006
    %1009 = vset.pattern.permute.xlu0 2
    %1010 = vperm.xlu0 %1009, %v433
    %v1011 = vpop.permute.xlu0 %1010
    %1013 = vset.pattern.permute.xlu0 2
    %1014 = vperm.xlu0 %1013, %v434
    %v1015 = vpop.permute.xlu0 %1014
    %1017 = vset.pattern.permute.xlu0 2
    %1018 = vperm.xlu0 %1017, %v435
    %v1019 = vpop.permute.xlu0 %1018
    %1021 = vset.pattern.permute.xlu0 2
    %1022 = vperm.xlu0 %1021, %v436
    %v1023 = vpop.permute.xlu0 %1022
    %1025 = vset.pattern.permute.xlu0 2
    %1026 = vperm.xlu0 %1025, %v437
    %v1027 = vpop.permute.xlu0 %1026
    %1029 = vset.pattern.permute.xlu0 2
    %1030 = vperm.xlu0 %1029, %v438
    %v1031 = vpop.permute.xlu0 %1030
    %1033 = vset.pattern.permute.xlu0 2
    %1034 = vperm.xlu0 %1033, %v439
    %v1035 = vpop.permute.xlu0 %1034
    %1037 = vset.pattern.permute.xlu0 2
    %1038 = vperm.xlu0 %1037, %v440
    %v1039 = vpop.permute.xlu0 %1038
    %1041 = vset.pattern.permute.xlu0 2
    %1042 = vperm.xlu0 %1041, %v441
    %v1043 = vpop.permute.xlu0 %1042
    %1045 = vset.pattern.permute.xlu0 2
    %1046 = vperm.xlu0 %1045, %v442
    %v1047 = vpop.permute.xlu0 %1046
    %1049 = vset.pattern.permute.xlu0 2
    %1050 = vperm.xlu0 %1049, %v443
    %v1051 = vpop.permute.xlu0 %1050
    %v1053 = vmul.f32 %v973, %v991
    %v1054 = vmul.f32 %v974, %v995
    %v1055 = vmul.f32 %v975, %v999
    %v1056 = vmul.f32 %v976, %v1003
    %v1057 = vmul.f32 %v977, %v1007
    %v1058 = vmul.f32 %v978, %v1011
    %v1059 = vmul.f32 %v979, %v1015
    %v1060 = vmul.f32 %v980, %v1019
    %v1061 = vmul.f32 %v981, %v1023
    %v1062 = vmul.f32 %v982, %v1027
    %v1063 = vmul.f32 %v983, %v1031
    %v1064 = vmul.f32 %v984, %v1035
    %v1065 = vmul.f32 %v985, %v1039
    %v1066 = vmul.f32 %v986, %v1043
    %v1067 = vmul.f32 %v987, %v1047
    %v1068 = vmul.f32 %v988, %v1051
    %1069 = vset.pattern.permute.xlu0 3
    %1070 = vperm.xlu0 %1069, %v428
    %v1071 = vpop.permute.xlu0 %1070
    %1073 = vset.pattern.permute.xlu0 3
    %1074 = vperm.xlu0 %1073, %v429
    %v1075 = vpop.permute.xlu0 %1074
    %1077 = vset.pattern.permute.xlu0 3
    %1078 = vperm.xlu0 %1077, %v430
    %v1079 = vpop.permute.xlu0 %1078
    %1081 = vset.pattern.permute.xlu0 3
    %1082 = vperm.xlu0 %1081, %v431
    %v1083 = vpop.permute.xlu0 %1082
    %1085 = vset.pattern.permute.xlu0 3
    %1086 = vperm.xlu0 %1085, %v432
    %v1087 = vpop.permute.xlu0 %1086
    %1089 = vset.pattern.permute.xlu0 3
    %1090 = vperm.xlu0 %1089, %v433
    %v1091 = vpop.permute.xlu0 %1090
    %1093 = vset.pattern.permute.xlu0 3
    %1094 = vperm.xlu0 %1093, %v434
    %v1095 = vpop.permute.xlu0 %1094
    %1097 = vset.pattern.permute.xlu0 3
    %1098 = vperm.xlu0 %1097, %v435
    %v1099 = vpop.permute.xlu0 %1098
    %1101 = vset.pattern.permute.xlu0 3
    %1102 = vperm.xlu0 %1101, %v436
    %v1103 = vpop.permute.xlu0 %1102
    %1105 = vset.pattern.permute.xlu0 3
    %1106 = vperm.xlu0 %1105, %v437
    %v1107 = vpop.permute.xlu0 %1106
    %1109 = vset.pattern.permute.xlu0 3
    %1110 = vperm.xlu0 %1109, %v438
    %v1111 = vpop.permute.xlu0 %1110
    %1113 = vset.pattern.permute.xlu0 3
    %1114 = vperm.xlu0 %1113, %v439
    %v1115 = vpop.permute.xlu0 %1114
    %1117 = vset.pattern.permute.xlu0 3
    %1118 = vperm.xlu0 %1117, %v440
    %v1119 = vpop.permute.xlu0 %1118
    %1121 = vset.pattern.permute.xlu0 3
    %1122 = vperm.xlu0 %1121, %v441
    %v1123 = vpop.permute.xlu0 %1122
    %1125 = vset.pattern.permute.xlu0 3
    %1126 = vperm.xlu0 %1125, %v442
    %v1127 = vpop.permute.xlu0 %1126
    %1129 = vset.pattern.permute.xlu0 3
    %1130 = vperm.xlu0 %1129, %v443
    %v1131 = vpop.permute.xlu0 %1130
    %v1133 = vadd.f32 %v1053, %v1071
    %v1134 = vadd.f32 %v1054, %v1075
    %v1135 = vadd.f32 %v1055, %v1079
    %v1136 = vadd.f32 %v1056, %v1083
    %v1137 = vadd.f32 %v1057, %v1087
    %v1138 = vadd.f32 %v1058, %v1091
    %v1139 = vadd.f32 %v1059, %v1095
    %v1140 = vadd.f32 %v1060, %v1099
    %v1141 = vadd.f32 %v1061, %v1103
    %v1142 = vadd.f32 %v1062, %v1107
    %v1143 = vadd.f32 %v1063, %v1111
    %v1144 = vadd.f32 %v1064, %v1115
    %v1145 = vadd.f32 %v1065, %v1119
    %v1146 = vadd.f32 %v1066, %v1123
    %v1147 = vadd.f32 %v1067, %v1127
    %v1148 = vadd.f32 %v1068, %v1131
    %v1149 = vmax.f32 %v1133, 0.0
    %v1150 = vmax.f32 %v1134, 0.0
    %v1151 = vmax.f32 %v1135, 0.0
    %v1152 = vmax.f32 %v1136, 0.0
    %v1153 = vmax.f32 %v1137, 0.0
    %v1154 = vmax.f32 %v1138, 0.0
    %v1155 = vmax.f32 %v1139, 0.0
    %v1156 = vmax.f32 %v1140, 0.0
    %v1157 = vmax.f32 %v1141, 0.0
    %v1158 = vmax.f32 %v1142, 0.0
    %v1159 = vmax.f32 %v1143, 0.0
    %v1160 = vmax.f32 %v1144, 0.0
    %v1161 = vmax.f32 %v1145, 0.0
    %v1162 = vmax.f32 %v1146, 0.0
    %v1163 = vmax.f32 %v1147, 0.0
    %v1164 = vmax.f32 %v1148, 0.0
    %v1173 = vrot.slane %v1151, 7
    %vm1174 = vcmask 1041409
    %v1175 = vsel %vm1174, %v1173, %v1149
    %v1176 = vrot.slane %v1153, 6
    %vm1177 = vcmask 1042434
    %v1178 = vsel %vm1177, %v1176, %v1175
    %v1179 = vrot.slane %v1155, 5
    %vm1180 = vcmask 1043459
    %v1181 = vsel %vm1180, %v1179, %v1178
    %v1182 = vrot.slane %v1157, 4
    %vm1183 = vcmask 1044484
    %v1184 = vsel %vm1183, %v1182, %v1181
    %v1185 = vrot.slane %v1159, 3
    %vm1186 = vcmask 1045509
    %v1187 = vsel %vm1186, %v1185, %v1184
    %v1188 = vrot.slane %v1161, 2
    %vm1189 = vcmask 1046534
    %v1190 = vsel %vm1189, %v1188, %v1187
    %v1191 = vrot.slane %v1163, 1
    %vm1192 = vcmask 1047559
    %v1193 = vsel %vm1192, %v1191, %v1190
    %v1195 = vrot.slane %v1149, 1
    %v1196 = vsel %vm1174, %v1151, %v1195
    %v1197 = vrot.slane %v1153, 7
    %v1198 = vsel %vm1177, %v1197, %v1196
    %v1199 = vrot.slane %v1155, 6
    %v1200 = vsel %vm1180, %v1199, %v1198
    %v1201 = vrot.slane %v1157, 5
    %v1202 = vsel %vm1183, %v1201, %v1200
    %v1203 = vrot.slane %v1159, 4
    %v1204 = vsel %vm1186, %v1203, %v1202
    %v1205 = vrot.slane %v1161, 3
    %v1206 = vsel %vm1189, %v1205, %v1204
    %v1207 = vrot.slane %v1163, 2
    %v1208 = vsel %vm1192, %v1207, %v1206
    %v1210 = vrot.slane %v1149, 2
    %v1211 = vrot.slane %v1151, 1
    %v1212 = vsel %vm1174, %v1211, %v1210
    %v1213 = vsel %vm1177, %v1153, %v1212
    %v1214 = vrot.slane %v1155, 7
    %v1215 = vsel %vm1180, %v1214, %v1213
    %v1216 = vrot.slane %v1157, 6
    %v1217 = vsel %vm1183, %v1216, %v1215
    %v1218 = vrot.slane %v1159, 5
    %v1219 = vsel %vm1186, %v1218, %v1217
    %v1220 = vrot.slane %v1161, 4
    %v1221 = vsel %vm1189, %v1220, %v1219
    %v1222 = vrot.slane %v1163, 3
    %v1223 = vsel %vm1192, %v1222, %v1221
    %v1225 = vrot.slane %v1149, 3
    %v1226 = vrot.slane %v1151, 2
    %v1227 = vsel %vm1174, %v1226, %v1225
    %v1228 = vrot.slane %v1153, 1
    %v1229 = vsel %vm1177, %v1228, %v1227
    %v1230 = vsel %vm1180, %v1155, %v1229
    %v1231 = vrot.slane %v1157, 7
    %v1232 = vsel %vm1183, %v1231, %v1230
    %v1233 = vrot.slane %v1159, 6
    %v1234 = vsel %vm1186, %v1233, %v1232
    %v1235 = vrot.slane %v1161, 5
    %v1236 = vsel %vm1189, %v1235, %v1234
    %v1237 = vrot.slane %v1163, 4
    %v1238 = vsel %vm1192, %v1237, %v1236
    %v1240 = vrot.slane %v1149, 4
    %v1241 = vrot.slane %v1151, 3
    %v1242 = vsel %vm1174, %v1241, %v1240
    %v1243 = vrot.slane %v1153, 2
    %v1244 = vsel %vm1177, %v1243, %v1242
    %v1245 = vrot.slane %v1155, 1
    %v1246 = vsel %vm1180, %v1245, %v1244
    %v1247 = vsel %vm1183, %v1157, %v1246
    %v1248 = vrot.slane %v1159, 7
    %v1249 = vsel %vm1186, %v1248, %v1247
    %v1250 = vrot.slane %v1161, 6
    %v1251 = vsel %vm1189, %v1250, %v1249
    %v1252 = vrot.slane %v1163, 5
    %v1253 = vsel %vm1192, %v1252, %v1251
    %v1255 = vrot.slane %v1149, 5
    %v1256 = vrot.slane %v1151, 4
    %v1257 = vsel %vm1174, %v1256, %v1255
    %v1258 = vrot.slane %v1153, 3
    %v1259 = vsel %vm1177, %v1258, %v1257
    %v1260 = vrot.slane %v1155, 2
    %v1261 = vsel %vm1180, %v1260, %v1259
    %v1262 = vrot.slane %v1157, 1
    %v1263 = vsel %vm1183, %v1262, %v1261
    %v1264 = vsel %vm1186, %v1159, %v1263
    %v1265 = vrot.slane %v1161, 7
    %v1266 = vsel %vm1189, %v1265, %v1264
    %v1267 = vrot.slane %v1163, 6
    %v1268 = vsel %vm1192, %v1267, %v1266
    %v1270 = vrot.slane %v1149, 6
    %v1271 = vrot.slane %v1151, 5
    %v1272 = vsel %vm1174, %v1271, %v1270
    %v1273 = vrot.slane %v1153, 4
    %v1274 = vsel %vm1177, %v1273, %v1272
    %v1275 = vrot.slane %v1155, 3
    %v1276 = vsel %vm1180, %v1275, %v1274
    %v1277 = vrot.slane %v1157, 2
    %v1278 = vsel %vm1183, %v1277, %v1276
    %v1279 = vrot.slane %v1159, 1
    %v1280 = vsel %vm1186, %v1279, %v1278
    %v1281 = vsel %vm1189, %v1161, %v1280
    %v1282 = vrot.slane %v1163, 7
    %v1283 = vsel %vm1192, %v1282, %v1281
    %v1285 = vrot.slane %v1149, 7
    %v1286 = vrot.slane %v1151, 6
    %v1287 = vsel %vm1174, %v1286, %v1285
    %v1288 = vrot.slane %v1153, 5
    %v1289 = vsel %vm1177, %v1288, %v1287
    %v1290 = vrot.slane %v1155, 4
    %v1291 = vsel %vm1180, %v1290, %v1289
    %v1292 = vrot.slane %v1157, 3
    %v1293 = vsel %vm1183, %v1292, %v1291
    %v1294 = vrot.slane %v1159, 2
    %v1295 = vsel %vm1186, %v1294, %v1293
    %v1296 = vrot.slane %v1161, 1
    %v1297 = vsel %vm1189, %v1296, %v1295
    %v1298 = vsel %vm1192, %v1163, %v1297
    %v1308 = vrot.slane %v1152, 7
    %v1309 = vsel %vm1174, %v1308, %v1150
    %v1310 = vrot.slane %v1154, 6
    %v1311 = vsel %vm1177, %v1310, %v1309
    %v1312 = vrot.slane %v1156, 5
    %v1313 = vsel %vm1180, %v1312, %v1311
    %v1314 = vrot.slane %v1158, 4
    %v1315 = vsel %vm1183, %v1314, %v1313
    %v1316 = vrot.slane %v1160, 3
    %v1317 = vsel %vm1186, %v1316, %v1315
    %v1318 = vrot.slane %v1162, 2
    %v1319 = vsel %vm1189, %v1318, %v1317
    %v1320 = vrot.slane %v1164, 1
    %v1321 = vsel %vm1192, %v1320, %v1319
    %v1323 = vrot.slane %v1150, 1
    %v1324 = vsel %vm1174, %v1152, %v1323
    %v1325 = vrot.slane %v1154, 7
    %v1326 = vsel %vm1177, %v1325, %v1324
    %v1327 = vrot.slane %v1156, 6
    %v1328 = vsel %vm1180, %v1327, %v1326
    %v1329 = vrot.slane %v1158, 5
    %v1330 = vsel %vm1183, %v1329, %v1328
    %v1331 = vrot.slane %v1160, 4
    %v1332 = vsel %vm1186, %v1331, %v1330
    %v1333 = vrot.slane %v1162, 3
    %v1334 = vsel %vm1189, %v1333, %v1332
    %v1335 = vrot.slane %v1164, 2
    %v1336 = vsel %vm1192, %v1335, %v1334
    %v1338 = vrot.slane %v1150, 2
    %v1339 = vrot.slane %v1152, 1
    %v1340 = vsel %vm1174, %v1339, %v1338
    %v1341 = vsel %vm1177, %v1154, %v1340
    %v1342 = vrot.slane %v1156, 7
    %v1343 = vsel %vm1180, %v1342, %v1341
    %v1344 = vrot.slane %v1158, 6
    %v1345 = vsel %vm1183, %v1344, %v1343
    %v1346 = vrot.slane %v1160, 5
    %v1347 = vsel %vm1186, %v1346, %v1345
    %v1348 = vrot.slane %v1162, 4
    %v1349 = vsel %vm1189, %v1348, %v1347
    %v1350 = vrot.slane %v1164, 3
    %v1351 = vsel %vm1192, %v1350, %v1349
    %v1353 = vrot.slane %v1150, 3
    %v1354 = vrot.slane %v1152, 2
    %v1355 = vsel %vm1174, %v1354, %v1353
    %v1356 = vrot.slane %v1154, 1
    %v1357 = vsel %vm1177, %v1356, %v1355
    %v1358 = vsel %vm1180, %v1156, %v1357
    %v1359 = vrot.slane %v1158, 7
    %v1360 = vsel %vm1183, %v1359, %v1358
    %v1361 = vrot.slane %v1160, 6
    %v1362 = vsel %vm1186, %v1361, %v1360
    %v1363 = vrot.slane %v1162, 5
    %v1364 = vsel %vm1189, %v1363, %v1362
    %v1365 = vrot.slane %v1164, 4
    %v1366 = vsel %vm1192, %v1365, %v1364
    %v1368 = vrot.slane %v1150, 4
    %v1369 = vrot.slane %v1152, 3
    %v1370 = vsel %vm1174, %v1369, %v1368
    %v1371 = vrot.slane %v1154, 2
    %v1372 = vsel %vm1177, %v1371, %v1370
    %v1373 = vrot.slane %v1156, 1
    %v1374 = vsel %vm1180, %v1373, %v1372
    %v1375 = vsel %vm1183, %v1158, %v1374
    %v1376 = vrot.slane %v1160, 7
    %v1377 = vsel %vm1186, %v1376, %v1375
    %v1378 = vrot.slane %v1162, 6
    %v1379 = vsel %vm1189, %v1378, %v1377
    %v1380 = vrot.slane %v1164, 5
    %v1381 = vsel %vm1192, %v1380, %v1379
    %v1383 = vrot.slane %v1150, 5
    %v1384 = vrot.slane %v1152, 4
    %v1385 = vsel %vm1174, %v1384, %v1383
    %v1386 = vrot.slane %v1154, 3
    %v1387 = vsel %vm1177, %v1386, %v1385
    %v1388 = vrot.slane %v1156, 2
    %v1389 = vsel %vm1180, %v1388, %v1387
    %v1390 = vrot.slane %v1158, 1
    %v1391 = vsel %vm1183, %v1390, %v1389
    %v1392 = vsel %vm1186, %v1160, %v1391
    %v1393 = vrot.slane %v1162, 7
    %v1394 = vsel %vm1189, %v1393, %v1392
    %v1395 = vrot.slane %v1164, 6
    %v1396 = vsel %vm1192, %v1395, %v1394
    %v1398 = vrot.slane %v1150, 6
    %v1399 = vrot.slane %v1152, 5
    %v1400 = vsel %vm1174, %v1399, %v1398
    %v1401 = vrot.slane %v1154, 4
    %v1402 = vsel %vm1177, %v1401, %v1400
    %v1403 = vrot.slane %v1156, 3
    %v1404 = vsel %vm1180, %v1403, %v1402
    %v1405 = vrot.slane %v1158, 2
    %v1406 = vsel %vm1183, %v1405, %v1404
    %v1407 = vrot.slane %v1160, 1
    %v1408 = vsel %vm1186, %v1407, %v1406
    %v1409 = vsel %vm1189, %v1162, %v1408
    %v1410 = vrot.slane %v1164, 7
    %v1411 = vsel %vm1192, %v1410, %v1409
    %v1413 = vrot.slane %v1150, 7
    %v1414 = vrot.slane %v1152, 6
    %v1415 = vsel %vm1174, %v1414, %v1413
    %v1416 = vrot.slane %v1154, 5
    %v1417 = vsel %vm1177, %v1416, %v1415
    %v1418 = vrot.slane %v1156, 4
    %v1419 = vsel %vm1180, %v1418, %v1417
    %v1420 = vrot.slane %v1158, 3
    %v1421 = vsel %vm1183, %v1420, %v1419
    %v1422 = vrot.slane %v1160, 2
    %v1423 = vsel %vm1186, %v1422, %v1421
    %v1424 = vrot.slane %v1162, 1
    %v1425 = vsel %vm1189, %v1424, %v1423
    %v1426 = vsel %vm1192, %v1164, %v1425
    %v1428 = vld [vmem:[%s4] sm:$0xff]
    %v1429 = vld [vmem:[%s4 + $0x8] sm:$0xff]
    %v1430 = vld [vmem:[%s4 + $0x10] sm:$0xff]
    %v1431 = vld [vmem:[%s4 + $0x18] sm:$0xff]
    %v1432 = vld [vmem:[%s4 + $0x20] sm:$0xff]
    %v1433 = vld [vmem:[%s4 + $0x28] sm:$0xff]
    %v1434 = vld [vmem:[%s4 + $0x30] sm:$0xff]
    %v1435 = vld [vmem:[%s4 + $0x38] sm:$0xff]
    %v1436 = vld [vmem:[%s4 + $0x40] sm:$0xff]
    %v1437 = vld [vmem:[%s4 + $0x48] sm:$0xff]
    %v1438 = vld [vmem:[%s4 + $0x50] sm:$0xff]
    %v1439 = vld [vmem:[%s4 + $0x58] sm:$0xff]
    %v1440 = vld [vmem:[%s4 + $0x60] sm:$0xff]
    %v1441 = vld [vmem:[%s4 + $0x68] sm:$0xff]
    %v1442 = vld [vmem:[%s4 + $0x70] sm:$0xff]
    %v1443 = vld [vmem:[%s4 + $0x78] sm:$0xff]
    %1445 = vset.pattern.permute.xlu0 8
    %1446 = vperm.xlu0 %1445, %v1428
    %v1447 = vpop.permute.xlu0 %1446
    %1450 = vset.pattern.permute.xlu0 8
    %1451 = vperm.xlu0 %1450, %v1429
    %v1452 = vpop.permute.xlu0 %1451
    %1455 = vset.pattern.permute.xlu0 8
    %1456 = vperm.xlu0 %1455, %v1430
    %v1457 = vpop.permute.xlu0 %1456
    %1460 = vset.pattern.permute.xlu0 8
    %1461 = vperm.xlu0 %1460, %v1431
    %v1462 = vpop.permute.xlu0 %1461
    %1465 = vset.pattern.permute.xlu0 8
    %1466 = vperm.xlu0 %1465, %v1432
    %v1467 = vpop.permute.xlu0 %1466
    %1470 = vset.pattern.permute.xlu0 8
    %1471 = vperm.xlu0 %1470, %v1433
    %v1472 = vpop.permute.xlu0 %1471
    %1475 = vset.pattern.permute.xlu0 8
    %1476 = vperm.xlu0 %1475, %v1434
    %v1477 = vpop.permute.xlu0 %1476
    %1480 = vset.pattern.permute.xlu0 8
    %1481 = vperm.xlu0 %1480, %v1435
    %v1482 = vpop.permute.xlu0 %1481
    %1485 = vset.pattern.permute.xlu0 8
    %1486 = vperm.xlu0 %1485, %v1436
    %v1487 = vpop.permute.xlu0 %1486
    %1490 = vset.pattern.permute.xlu0 8
    %1491 = vperm.xlu0 %1490, %v1437
    %v1492 = vpop.permute.xlu0 %1491
    %1495 = vset.pattern.permute.xlu0 8
    %1496 = vperm.xlu0 %1495, %v1438
    %v1497 = vpop.permute.xlu0 %1496
    %1500 = vset.pattern.permute.xlu0 8
    %1501 = vperm.xlu0 %1500, %v1439
    %v1502 = vpop.permute.xlu0 %1501
    %1505 = vset.pattern.permute.xlu0 8
    %1506 = vperm.xlu0 %1505, %v1440
    %v1507 = vpop.permute.xlu0 %1506
    %1510 = vset.pattern.permute.xlu0 8
    %1511 = vperm.xlu0 %1510, %v1441
    %v1512 = vpop.permute.xlu0 %1511
    %1515 = vset.pattern.permute.xlu0 8
    %1516 = vperm.xlu0 %1515, %v1442
    %v1517 = vpop.permute.xlu0 %1516
    %1520 = vset.pattern.permute.xlu0 8
    %1521 = vperm.xlu0 %1520, %v1443
    %v1522 = vpop.permute.xlu0 %1521
    %v1524 = vsel %vm41, %v1428, 0
    %v1526 = vsel %vm41, %v1429, 0
    %v1528 = vsel %vm41, %v1430, 0
    %v1530 = vsel %vm41, %v1431, 0
    %v1532 = vsel %vm41, %v1432, 0
    %v1534 = vsel %vm41, %v1433, 0
    %v1536 = vsel %vm41, %v1434, 0
    %v1538 = vsel %vm41, %v1435, 0
    %v1540 = vsel %vm41, %v1436, 0
    %v1542 = vsel %vm41, %v1437, 0
    %v1544 = vsel %vm41, %v1438, 0
    %v1546 = vsel %vm41, %v1439, 0
    %v1548 = vsel %vm41, %v1440, 0
    %v1550 = vsel %vm41, %v1441, 0
    %v1552 = vsel %vm41, %v1442, 0
    %v1554 = vsel %vm41, %v1443, 0
    %1556 = vmatprep.subr.mxu0 0.0
    %1557 = vmatpush1.msra.mxu0 0.0
    %1558 = vmatprep.subr.mxu0 0.0
    %1559 = vmatpush1.msra.mxu0 0.0
    %1560 = vmatprep.subr.mxu0 0.0
    %1561 = vmatpush1.msra.mxu0 0.0
    %1562 = vmatprep.subr.mxu0 0.0
    %1563 = vmatpush1.msra.mxu0 0.0
    %1564 = vmatprep.subr.mxu0 0.0
    %1565 = vmatpush1.msra.mxu0 0.0
    %1566 = vmatprep.subr.mxu0 0.0
    %1567 = vmatpush1.msra.mxu0 0.0
    %1568 = vmatprep.subr.mxu0 0.0
    %1569 = vmatpush1.msra.mxu0 0.0
    %1570 = vmatprep.subr.mxu0 0.0
    %1571 = vmatpush1.msra.mxu0 0.0
    %1572 = vmatprep.subr.mxu0 0.0
    %1573 = vmatpush1.msra.mxu0 0.0
    %1574 = vmatprep.subr.mxu0 0.0
    %1575 = vmatpush1.msra.mxu0 0.0
    %1576 = vmatprep.subr.mxu0 0.0
    %1577 = vmatpush1.msra.mxu0 0.0
    %1578 = vmatprep.subr.mxu0 0.0
    %1579 = vmatpush1.msra.mxu0 0.0
    %1580 = vmatprep.subr.mxu0 0.0
    %1581 = vmatpush1.msra.mxu0 0.0
    %1582 = vmatprep.subr.mxu0 0.0
    %1583 = vmatpush1.msra.mxu0 0.0
    %1584 = vmatprep.subr.mxu0 0.0
    %1585 = vmatpush1.msra.mxu0 0.0
    %1586 = vmatprep.subr.mxu0 %v1208
    %1587 = vmatpush1.msra.mxu0 %v1193
    %1588 = vmatprep.subr.mxu0 0.0
    %1589 = vmatpush2.msra.mxu0 0.0
    %1590 = vmatprep.subr.mxu0 0.0
    %1591 = vmatpush2.msra.mxu0 0.0
    %1592 = vmatprep.subr.mxu0 0.0
    %1593 = vmatpush2.msra.mxu0 0.0
    %1594 = vmatprep.subr.mxu0 0.0
    %1595 = vmatpush2.msra.mxu0 0.0
    %1596 = vmatprep.subr.mxu0 0.0
    %1597 = vmatpush2.msra.mxu0 0.0
    %1598 = vmatprep.subr.mxu0 0.0
    %1599 = vmatpush2.msra.mxu0 0.0
    %1600 = vmatprep.subr.mxu0 0.0
    %1601 = vmatpush2.msra.mxu0 0.0
    %1602 = vmatprep.subr.mxu0 0.0
    %1603 = vmatpush2.msra.mxu0 0.0
    %1604 = vmatprep.subr.mxu0 0.0
    %1605 = vmatpush2.msra.mxu0 0.0
    %1606 = vmatprep.subr.mxu0 0.0
    %1607 = vmatpush2.msra.mxu0 0.0
    %1608 = vmatprep.subr.mxu0 0.0
    %1609 = vmatpush2.msra.mxu0 0.0
    %1610 = vmatprep.subr.mxu0 0.0
    %1611 = vmatpush2.msra.mxu0 0.0
    %1612 = vmatprep.subr.mxu0 0.0
    %1613 = vmatpush2.msra.mxu0 0.0
    %1614 = vmatprep.subr.mxu0 0.0
    %1615 = vmatpush2.msra.mxu0 0.0
    %1616 = vmatprep.subr.mxu0 0.0
    %1617 = vmatpush2.msra.mxu0 0.0
    %1618 = vmatprep.subr.mxu0 0.0
    %1619 = vmatpush2.msra.mxu0 0.0
    %1620 = vmatprep.mubr.f32.mxu0 0.0
    %1621 = vmatmul.mubr.f32.gmra.mxu0 %v1524
    %v1622 = vpop.f32.mrf.mxu0
    %v1623 = vadd.f32 %v1447, %v1622
    %v1624 = vpop.f32.mrf.mxu0
    %v1625 = vadd.f32 %v1447, %v1624
    %1626 = vmatprep.mubr.f32.mxu0 0.0
    %1627 = vmatmul.mubr.f32.gmra.mxu0 %v1526
    %v1628 = vpop.f32.mrf.mxu0
    %v1629 = vadd.f32 %v1452, %v1628
    %v1630 = vpop.f32.mrf.mxu0
    %v1631 = vadd.f32 %v1452, %v1630
    %1632 = vmatprep.mubr.f32.mxu0 0.0
    %1633 = vmatmul.mubr.f32.gmra.mxu0 %v1528
    %v1634 = vpop.f32.mrf.mxu0
    %v1635 = vadd.f32 %v1457, %v1634
    %v1636 = vpop.f32.mrf.mxu0
    %v1637 = vadd.f32 %v1457, %v1636
    %1638 = vmatprep.mubr.f32.mxu0 0.0
    %1639 = vmatmul.mubr.f32.gmra.mxu0 %v1530
    %v1640 = vpop.f32.mrf.mxu0
    %v1641 = vadd.f32 %v1462, %v1640
    %v1642 = vpop.f32.mrf.mxu0
    %v1643 = vadd.f32 %v1462, %v1642
    %1644 = vmatprep.mubr.f32.mxu0 0.0
    %1645 = vmatmul.mubr.f32.gmra.mxu0 %v1532
    %v1646 = vpop.f32.mrf.mxu0
    %v1647 = vadd.f32 %v1467, %v1646
    %v1648 = vpop.f32.mrf.mxu0
    %v1649 = vadd.f32 %v1467, %v1648
    %1650 = vmatprep.mubr.f32.mxu0 0.0
    %1651 = vmatmul.mubr.f32.gmra.mxu0 %v1534
    %v1652 = vpop.f32.mrf.mxu0
    %v1653 = vadd.f32 %v1472, %v1652
    %v1654 = vpop.f32.mrf.mxu0
    %v1655 = vadd.f32 %v1472, %v1654
    %1656 = vmatprep.mubr.f32.mxu0 0.0
    %1657 = vmatmul.mubr.f32.gmra.mxu0 %v1536
    %v1658 = vpop.f32.mrf.mxu0
    %v1659 = vadd.f32 %v1477, %v1658
    %v1660 = vpop.f32.mrf.mxu0
    %v1661 = vadd.f32 %v1477, %v1660
    %1662 = vmatprep.mubr.f32.mxu0 0.0
    %1663 = vmatmul.mubr.f32.gmra.mxu0 %v1538
    %v1664 = vpop.f32.mrf.mxu0
    %v1665 = vadd.f32 %v1482, %v1664
    %v1666 = vpop.f32.mrf.mxu0
    %v1667 = vadd.f32 %v1482, %v1666
    %1668 = vmatprep.mubr.f32.mxu0 0.0
    %1669 = vmatmul.mubr.f32.gmra.mxu0 %v1540
    %v1670 = vpop.f32.mrf.mxu0
    %v1671 = vadd.f32 %v1487, %v1670
    %v1672 = vpop.f32.mrf.mxu0
    %v1673 = vadd.f32 %v1487, %v1672
    %1674 = vmatprep.mubr.f32.mxu0 0.0
    %1675 = vmatmul.mubr.f32.gmra.mxu0 %v1542
    %v1676 = vpop.f32.mrf.mxu0
    %v1677 = vadd.f32 %v1492, %v1676
    %v1678 = vpop.f32.mrf.mxu0
    %v1679 = vadd.f32 %v1492, %v1678
    %1680 = vmatprep.mubr.f32.mxu0 0.0
    %1681 = vmatmul.mubr.f32.gmra.mxu0 %v1544
    %v1682 = vpop.f32.mrf.mxu0
    %v1683 = vadd.f32 %v1497, %v1682
    %v1684 = vpop.f32.mrf.mxu0
    %v1685 = vadd.f32 %v1497, %v1684
    %1686 = vmatprep.mubr.f32.mxu0 0.0
    %1687 = vmatmul.mubr.f32.gmra.mxu0 %v1546
    %v1688 = vpop.f32.mrf.mxu0
    %v1689 = vadd.f32 %v1502, %v1688
    %v1690 = vpop.f32.mrf.mxu0
    %v1691 = vadd.f32 %v1502, %v1690
    %1692 = vmatprep.mubr.f32.mxu0 0.0
    %1693 = vmatmul.mubr.f32.gmra.mxu0 %v1548
    %v1694 = vpop.f32.mrf.mxu0
    %v1695 = vadd.f32 %v1507, %v1694
    %v1696 = vpop.f32.mrf.mxu0
    %v1697 = vadd.f32 %v1507, %v1696
    %1698 = vmatprep.mubr.f32.mxu0 0.0
    %1699 = vmatmul.mubr.f32.gmra.mxu0 %v1550
    %v1700 = vpop.f32.mrf.mxu0
    %v1701 = vadd.f32 %v1512, %v1700
    %v1702 = vpop.f32.mrf.mxu0
    %v1703 = vadd.f32 %v1512, %v1702
    %1704 = vmatprep.mubr.f32.mxu0 0.0
    %1705 = vmatmul.mubr.f32.gmra.mxu0 %v1552
    %v1706 = vpop.f32.mrf.mxu0
    %v1707 = vadd.f32 %v1517, %v1706
    %v1708 = vpop.f32.mrf.mxu0
    %v1709 = vadd.f32 %v1517, %v1708
    %1710 = vmatprep.mubr.f32.mxu0 0.0
    %1711 = vmatmul.mubr.f32.gmra.mxu0 %v1554
    %v1712 = vpop.f32.mrf.mxu0
    %v1713 = vadd.f32 %v1522, %v1712
    %v1714 = vpop.f32.mrf.mxu0
    %v1715 = vadd.f32 %v1522, %v1714
    %1716 = vdwg.mxu0
    %1717 = vmatprep.subr.mxu0 0.0
    %1718 = vmatpush1.msra.mxu0 0.0
    %1719 = vmatprep.subr.mxu0 0.0
    %1720 = vmatpush1.msra.mxu0 0.0
    %1721 = vmatprep.subr.mxu0 0.0
    %1722 = vmatpush1.msra.mxu0 0.0
    %1723 = vmatprep.subr.mxu0 0.0
    %1724 = vmatpush1.msra.mxu0 0.0
    %1725 = vmatprep.subr.mxu0 0.0
    %1726 = vmatpush1.msra.mxu0 0.0
    %1727 = vmatprep.subr.mxu0 0.0
    %1728 = vmatpush1.msra.mxu0 0.0
    %1729 = vmatprep.subr.mxu0 0.0
    %1730 = vmatpush1.msra.mxu0 0.0
    %1731 = vmatprep.subr.mxu0 0.0
    %1732 = vmatpush1.msra.mxu0 0.0
    %1733 = vmatprep.subr.mxu0 0.0
    %1734 = vmatpush1.msra.mxu0 0.0
    %1735 = vmatprep.subr.mxu0 0.0
    %1736 = vmatpush1.msra.mxu0 0.0
    %1737 = vmatprep.subr.mxu0 0.0
    %1738 = vmatpush1.msra.mxu0 0.0
    %1739 = vmatprep.subr.mxu0 0.0
    %1740 = vmatpush1.msra.mxu0 0.0
    %1741 = vmatprep.subr.mxu0 0.0
    %1742 = vmatpush1.msra.mxu0 0.0
    %1743 = vmatprep.subr.mxu0 0.0
    %1744 = vmatpush1.msra.mxu0 0.0
    %1745 = vmatprep.subr.mxu0 0.0
    %1746 = vmatpush1.msra.mxu0 0.0
    %1747 = vmatprep.subr.mxu0 %v1238
    %1748 = vmatpush1.msra.mxu0 %v1223
    %1749 = vmatprep.subr.mxu0 0.0
    %1750 = vmatpush2.msra.mxu0 0.0
    %1751 = vmatprep.subr.mxu0 0.0
    %1752 = vmatpush2.msra.mxu0 0.0
    %1753 = vmatprep.subr.mxu0 0.0
    %1754 = vmatpush2.msra.mxu0 0.0
    %1755 = vmatprep.subr.mxu0 0.0
    %1756 = vmatpush2.msra.mxu0 0.0
    %1757 = vmatprep.subr.mxu0 0.0
    %1758 = vmatpush2.msra.mxu0 0.0
    %1759 = vmatprep.subr.mxu0 0.0
    %1760 = vmatpush2.msra.mxu0 0.0
    %1761 = vmatprep.subr.mxu0 0.0
    %1762 = vmatpush2.msra.mxu0 0.0
    %1763 = vmatprep.subr.mxu0 0.0
    %1764 = vmatpush2.msra.mxu0 0.0
    %1765 = vmatprep.subr.mxu0 0.0
    %1766 = vmatpush2.msra.mxu0 0.0
    %1767 = vmatprep.subr.mxu0 0.0
    %1768 = vmatpush2.msra.mxu0 0.0
    %1769 = vmatprep.subr.mxu0 0.0
    %1770 = vmatpush2.msra.mxu0 0.0
    %1771 = vmatprep.subr.mxu0 0.0
    %1772 = vmatpush2.msra.mxu0 0.0
    %1773 = vmatprep.subr.mxu0 0.0
    %1774 = vmatpush2.msra.mxu0 0.0
    %1775 = vmatprep.subr.mxu0 0.0
    %1776 = vmatpush2.msra.mxu0 0.0
    %1777 = vmatprep.subr.mxu0 0.0
    %1778 = vmatpush2.msra.mxu0 0.0
    %1779 = vmatprep.subr.mxu0 0.0
    %1780 = vmatpush2.msra.mxu0 0.0
    %1781 = vmatprep.mubr.f32.mxu0 0.0
    %1782 = vmatmul.mubr.f32.gmra.mxu0 %v1524
    %v1783 = vpop.f32.mrf.mxu0
    %v1784 = vadd.f32 %v1447, %v1783
    %v1785 = vpop.f32.mrf.mxu0
    %v1786 = vadd.f32 %v1447, %v1785
    %1787 = vmatprep.mubr.f32.mxu0 0.0
    %1788 = vmatmul.mubr.f32.gmra.mxu0 %v1526
    %v1789 = vpop.f32.mrf.mxu0
    %v1790 = vadd.f32 %v1452, %v1789
    %v1791 = vpop.f32.mrf.mxu0
    %v1792 = vadd.f32 %v1452, %v1791
    %1793 = vmatprep.mubr.f32.mxu0 0.0
    %1794 = vmatmul.mubr.f32.gmra.mxu0 %v1528
    %v1795 = vpop.f32.mrf.mxu0
    %v1796 = vadd.f32 %v1457, %v1795
    %v1797 = vpop.f32.mrf.mxu0
    %v1798 = vadd.f32 %v1457, %v1797
    %1799 = vmatprep.mubr.f32.mxu0 0.0
    %1800 = vmatmul.mubr.f32.gmra.mxu0 %v1530
    %v1801 = vpop.f32.mrf.mxu0
    %v1802 = vadd.f32 %v1462, %v1801
    %v1803 = vpop.f32.mrf.mxu0
    %v1804 = vadd.f32 %v1462, %v1803
    %1805 = vmatprep.mubr.f32.mxu0 0.0
    %1806 = vmatmul.mubr.f32.gmra.mxu0 %v1532
    %v1807 = vpop.f32.mrf.mxu0
    %v1808 = vadd.f32 %v1467, %v1807
    %v1809 = vpop.f32.mrf.mxu0
    %v1810 = vadd.f32 %v1467, %v1809
    %1811 = vmatprep.mubr.f32.mxu0 0.0
    %1812 = vmatmul.mubr.f32.gmra.mxu0 %v1534
    %v1813 = vpop.f32.mrf.mxu0
    %v1814 = vadd.f32 %v1472, %v1813
    %v1815 = vpop.f32.mrf.mxu0
    %v1816 = vadd.f32 %v1472, %v1815
    %1817 = vmatprep.mubr.f32.mxu0 0.0
    %1818 = vmatmul.mubr.f32.gmra.mxu0 %v1536
    %v1819 = vpop.f32.mrf.mxu0
    %v1820 = vadd.f32 %v1477, %v1819
    %v1821 = vpop.f32.mrf.mxu0
    %v1822 = vadd.f32 %v1477, %v1821
    %1823 = vmatprep.mubr.f32.mxu0 0.0
    %1824 = vmatmul.mubr.f32.gmra.mxu0 %v1538
    %v1825 = vpop.f32.mrf.mxu0
    %v1826 = vadd.f32 %v1482, %v1825
    %v1827 = vpop.f32.mrf.mxu0
    %v1828 = vadd.f32 %v1482, %v1827
    %1829 = vmatprep.mubr.f32.mxu0 0.0
    %1830 = vmatmul.mubr.f32.gmra.mxu0 %v1540
    %v1831 = vpop.f32.mrf.mxu0
    %v1832 = vadd.f32 %v1487, %v1831
    %v1833 = vpop.f32.mrf.mxu0
    %v1834 = vadd.f32 %v1487, %v1833
    %1835 = vmatprep.mubr.f32.mxu0 0.0
    %1836 = vmatmul.mubr.f32.gmra.mxu0 %v1542
    %v1837 = vpop.f32.mrf.mxu0
    %v1838 = vadd.f32 %v1492, %v1837
    %v1839 = vpop.f32.mrf.mxu0
    %v1840 = vadd.f32 %v1492, %v1839
    %1841 = vmatprep.mubr.f32.mxu0 0.0
    %1842 = vmatmul.mubr.f32.gmra.mxu0 %v1544
    %v1843 = vpop.f32.mrf.mxu0
    %v1844 = vadd.f32 %v1497, %v1843
    %v1845 = vpop.f32.mrf.mxu0
    %v1846 = vadd.f32 %v1497, %v1845
    %1847 = vmatprep.mubr.f32.mxu0 0.0
    %1848 = vmatmul.mubr.f32.gmra.mxu0 %v1546
    %v1849 = vpop.f32.mrf.mxu0
    %v1850 = vadd.f32 %v1502, %v1849
    %v1851 = vpop.f32.mrf.mxu0
    %v1852 = vadd.f32 %v1502, %v1851
    %1853 = vmatprep.mubr.f32.mxu0 0.0
    %1854 = vmatmul.mubr.f32.gmra.mxu0 %v1548
    %v1855 = vpop.f32.mrf.mxu0
    %v1856 = vadd.f32 %v1507, %v1855
    %v1857 = vpop.f32.mrf.mxu0
    %v1858 = vadd.f32 %v1507, %v1857
    %1859 = vmatprep.mubr.f32.mxu0 0.0
    %1860 = vmatmul.mubr.f32.gmra.mxu0 %v1550
    %v1861 = vpop.f32.mrf.mxu0
    %v1862 = vadd.f32 %v1512, %v1861
    %v1863 = vpop.f32.mrf.mxu0
    %v1864 = vadd.f32 %v1512, %v1863
    %1865 = vmatprep.mubr.f32.mxu0 0.0
    %1866 = vmatmul.mubr.f32.gmra.mxu0 %v1552
    %v1867 = vpop.f32.mrf.mxu0
    %v1868 = vadd.f32 %v1517, %v1867
    %v1869 = vpop.f32.mrf.mxu0
    %v1870 = vadd.f32 %v1517, %v1869
    %1871 = vmatprep.mubr.f32.mxu0 0.0
    %1872 = vmatmul.mubr.f32.gmra.mxu0 %v1554
    %v1873 = vpop.f32.mrf.mxu0
    %v1874 = vadd.f32 %v1522, %v1873
    %v1875 = vpop.f32.mrf.mxu0
    %v1876 = vadd.f32 %v1522, %v1875
    %1877 = vdwg.mxu0
    %1878 = vmatprep.subr.mxu0 0.0
    %1879 = vmatpush1.msra.mxu0 0.0
    %1880 = vmatprep.subr.mxu0 0.0
    %1881 = vmatpush1.msra.mxu0 0.0
    %1882 = vmatprep.subr.mxu0 0.0
    %1883 = vmatpush1.msra.mxu0 0.0
    %1884 = vmatprep.subr.mxu0 0.0
    %1885 = vmatpush1.msra.mxu0 0.0
    %1886 = vmatprep.subr.mxu0 0.0
    %1887 = vmatpush1.msra.mxu0 0.0
    %1888 = vmatprep.subr.mxu0 0.0
    %1889 = vmatpush1.msra.mxu0 0.0
    %1890 = vmatprep.subr.mxu0 0.0
    %1891 = vmatpush1.msra.mxu0 0.0
    %1892 = vmatprep.subr.mxu0 0.0
    %1893 = vmatpush1.msra.mxu0 0.0
    %1894 = vmatprep.subr.mxu0 0.0
    %1895 = vmatpush1.msra.mxu0 0.0
    %1896 = vmatprep.subr.mxu0 0.0
    %1897 = vmatpush1.msra.mxu0 0.0
    %1898 = vmatprep.subr.mxu0 0.0
    %1899 = vmatpush1.msra.mxu0 0.0
    %1900 = vmatprep.subr.mxu0 0.0
    %1901 = vmatpush1.msra.mxu0 0.0
    %1902 = vmatprep.subr.mxu0 0.0
    %1903 = vmatpush1.msra.mxu0 0.0
    %1904 = vmatprep.subr.mxu0 0.0
    %1905 = vmatpush1.msra.mxu0 0.0
    %1906 = vmatprep.subr.mxu0 0.0
    %1907 = vmatpush1.msra.mxu0 0.0
    %1908 = vmatprep.subr.mxu0 %v1268
    %1909 = vmatpush1.msra.mxu0 %v1253
    %1910 = vmatprep.subr.mxu0 0.0
    %1911 = vmatpush2.msra.mxu0 0.0
    %1912 = vmatprep.subr.mxu0 0.0
    %1913 = vmatpush2.msra.mxu0 0.0
    %1914 = vmatprep.subr.mxu0 0.0
    %1915 = vmatpush2.msra.mxu0 0.0
    %1916 = vmatprep.subr.mxu0 0.0
    %1917 = vmatpush2.msra.mxu0 0.0
    %1918 = vmatprep.subr.mxu0 0.0
    %1919 = vmatpush2.msra.mxu0 0.0
    %1920 = vmatprep.subr.mxu0 0.0
    %1921 = vmatpush2.msra.mxu0 0.0
    %1922 = vmatprep.subr.mxu0 0.0
    %1923 = vmatpush2.msra.mxu0 0.0
    %1924 = vmatprep.subr.mxu0 0.0
    %1925 = vmatpush2.msra.mxu0 0.0
    %1926 = vmatprep.subr.mxu0 0.0
    %1927 = vmatpush2.msra.mxu0 0.0
    %1928 = vmatprep.subr.mxu0 0.0
    %1929 = vmatpush2.msra.mxu0 0.0
    %1930 = vmatprep.subr.mxu0 0.0
    %1931 = vmatpush2.msra.mxu0 0.0
    %1932 = vmatprep.subr.mxu0 0.0
    %1933 = vmatpush2.msra.mxu0 0.0
    %1934 = vmatprep.subr.mxu0 0.0
    %1935 = vmatpush2.msra.mxu0 0.0
    %1936 = vmatprep.subr.mxu0 0.0
    %1937 = vmatpush2.msra.mxu0 0.0
    %1938 = vmatprep.subr.mxu0 0.0
    %1939 = vmatpush2.msra.mxu0 0.0
    %1940 = vmatprep.subr.mxu0 0.0
    %1941 = vmatpush2.msra.mxu0 0.0
    %1942 = vmatprep.mubr.f32.mxu0 0.0
    %1943 = vmatmul.mubr.f32.gmra.mxu0 %v1524
    %v1944 = vpop.f32.mrf.mxu0
    %v1945 = vadd.f32 %v1447, %v1944
    %v1946 = vpop.f32.mrf.mxu0
    %v1947 = vadd.f32 %v1447, %v1946
    %1948 = vmatprep.mubr.f32.mxu0 0.0
    %1949 = vmatmul.mubr.f32.gmra.mxu0 %v1526
    %v1950 = vpop.f32.mrf.mxu0
    %v1951 = vadd.f32 %v1452, %v1950
    %v1952 = vpop.f32.mrf.mxu0
    %v1953 = vadd.f32 %v1452, %v1952
    %1954 = vmatprep.mubr.f32.mxu0 0.0
    %1955 = vmatmul.mubr.f32.gmra.mxu0 %v1528
    %v1956 = vpop.f32.mrf.mxu0
    %v1957 = vadd.f32 %v1457, %v1956
    %v1958 = vpop.f32.mrf.mxu0
    %v1959 = vadd.f32 %v1457, %v1958
    %1960 = vmatprep.mubr.f32.mxu0 0.0
    %1961 = vmatmul.mubr.f32.gmra.mxu0 %v1530
    %v1962 = vpop.f32.mrf.mxu0
    %v1963 = vadd.f32 %v1462, %v1962
    %v1964 = vpop.f32.mrf.mxu0
    %v1965 = vadd.f32 %v1462, %v1964
    %1966 = vmatprep.mubr.f32.mxu0 0.0
    %1967 = vmatmul.mubr.f32.gmra.mxu0 %v1532
    %v1968 = vpop.f32.mrf.mxu0
    %v1969 = vadd.f32 %v1467, %v1968
    %v1970 = vpop.f32.mrf.mxu0
    %v1971 = vadd.f32 %v1467, %v1970
    %1972 = vmatprep.mubr.f32.mxu0 0.0
    %1973 = vmatmul.mubr.f32.gmra.mxu0 %v1534
    %v1974 = vpop.f32.mrf.mxu0
    %v1975 = vadd.f32 %v1472, %v1974
    %v1976 = vpop.f32.mrf.mxu0
    %v1977 = vadd.f32 %v1472, %v1976
    %1978 = vmatprep.mubr.f32.mxu0 0.0
    %1979 = vmatmul.mubr.f32.gmra.mxu0 %v1536
    %v1980 = vpop.f32.mrf.mxu0
    %v1981 = vadd.f32 %v1477, %v1980
    %v1982 = vpop.f32.mrf.mxu0
    %v1983 = vadd.f32 %v1477, %v1982
    %1984 = vmatprep.mubr.f32.mxu0 0.0
    %1985 = vmatmul.mubr.f32.gmra.mxu0 %v1538
    %v1986 = vpop.f32.mrf.mxu0
    %v1987 = vadd.f32 %v1482, %v1986
    %v1988 = vpop.f32.mrf.mxu0
    %v1989 = vadd.f32 %v1482, %v1988
    %1990 = vmatprep.mubr.f32.mxu0 0.0
    %1991 = vmatmul.mubr.f32.gmra.mxu0 %v1540
    %v1992 = vpop.f32.mrf.mxu0
    %v1993 = vadd.f32 %v1487, %v1992
    %v1994 = vpop.f32.mrf.mxu0
    %v1995 = vadd.f32 %v1487, %v1994
    %1996 = vmatprep.mubr.f32.mxu0 0.0
    %1997 = vmatmul.mubr.f32.gmra.mxu0 %v1542
    %v1998 = vpop.f32.mrf.mxu0
    %v1999 = vadd.f32 %v1492, %v1998
    %v2000 = vpop.f32.mrf.mxu0
    %v2001 = vadd.f32 %v1492, %v2000
    %2002 = vmatprep.mubr.f32.mxu0 0.0
    %2003 = vmatmul.mubr.f32.gmra.mxu0 %v1544
    %v2004 = vpop.f32.mrf.mxu0
    %v2005 = vadd.f32 %v1497, %v2004
    %v2006 = vpop.f32.mrf.mxu0
    %v2007 = vadd.f32 %v1497, %v2006
    %2008 = vmatprep.mubr.f32.mxu0 0.0
    %2009 = vmatmul.mubr.f32.gmra.mxu0 %v1546
    %v2010 = vpop.f32.mrf.mxu0
    %v2011 = vadd.f32 %v1502, %v2010
    %v2012 = vpop.f32.mrf.mxu0
    %v2013 = vadd.f32 %v1502, %v2012
    %2014 = vmatprep.mubr.f32.mxu0 0.0
    %2015 = vmatmul.mubr.f32.gmra.mxu0 %v1548
    %v2016 = vpop.f32.mrf.mxu0
    %v2017 = vadd.f32 %v1507, %v2016
    %v2018 = vpop.f32.mrf.mxu0
    %v2019 = vadd.f32 %v1507, %v2018
    %2020 = vmatprep.mubr.f32.mxu0 0.0
    %2021 = vmatmul.mubr.f32.gmra.mxu0 %v1550
    %v2022 = vpop.f32.mrf.mxu0
    %v2023 = vadd.f32 %v1512, %v2022
    %v2024 = vpop.f32.mrf.mxu0
    %v2025 = vadd.f32 %v1512, %v2024
    %2026 = vmatprep.mubr.f32.mxu0 0.0
    %2027 = vmatmul.mubr.f32.gmra.mxu0 %v1552
    %v2028 = vpop.f32.mrf.mxu0
    %v2029 = vadd.f32 %v1517, %v2028
    %v2030 = vpop.f32.mrf.mxu0
    %v2031 = vadd.f32 %v1517, %v2030
    %2032 = vmatprep.mubr.f32.mxu0 0.0
    %2033 = vmatmul.mubr.f32.gmra.mxu0 %v1554
    %v2034 = vpop.f32.mrf.mxu0
    %v2035 = vadd.f32 %v1522, %v2034
    %v2036 = vpop.f32.mrf.mxu0
    %v2037 = vadd.f32 %v1522, %v2036
    %2038 = vdwg.mxu0
    %2039 = vmatprep.subr.mxu0 0.0
    %2040 = vmatpush1.msra.mxu0 0.0
    %2041 = vmatprep.subr.mxu0 0.0
    %2042 = vmatpush1.msra.mxu0 0.0
    %2043 = vmatprep.subr.mxu0 0.0
    %2044 = vmatpush1.msra.mxu0 0.0
    %2045 = vmatprep.subr.mxu0 0.0
    %2046 = vmatpush1.msra.mxu0 0.0
    %2047 = vmatprep.subr.mxu0 0.0
    %2048 = vmatpush1.msra.mxu0 0.0
    %2049 = vmatprep.subr.mxu0 0.0
    %2050 = vmatpush1.msra.mxu0 0.0
    %2051 = vmatprep.subr.mxu0 0.0
    %2052 = vmatpush1.msra.mxu0 0.0
    %2053 = vmatprep.subr.mxu0 0.0
    %2054 = vmatpush1.msra.mxu0 0.0
    %2055 = vmatprep.subr.mxu0 0.0
    %2056 = vmatpush1.msra.mxu0 0.0
    %2057 = vmatprep.subr.mxu0 0.0
    %2058 = vmatpush1.msra.mxu0 0.0
    %2059 = vmatprep.subr.mxu0 0.0
    %2060 = vmatpush1.msra.mxu0 0.0
    %2061 = vmatprep.subr.mxu0 0.0
    %2062 = vmatpush1.msra.mxu0 0.0
    %2063 = vmatprep.subr.mxu0 0.0
    %2064 = vmatpush1.msra.mxu0 0.0
    %2065 = vmatprep.subr.mxu0 0.0
    %2066 = vmatpush1.msra.mxu0 0.0
    %2067 = vmatprep.subr.mxu0 0.0
    %2068 = vmatpush1.msra.mxu0 0.0
    %2069 = vmatprep.subr.mxu0 %v1298
    %2070 = vmatpush1.msra.mxu0 %v1283
    %2071 = vmatprep.subr.mxu0 0.0
    %2072 = vmatpush2.msra.mxu0 0.0
    %2073 = vmatprep.subr.mxu0 0.0
    %2074 = vmatpush2.msra.mxu0 0.0
    %2075 = vmatprep.subr.mxu0 0.0
    %2076 = vmatpush2.msra.mxu0 0.0
    %2077 = vmatprep.subr.mxu0 0.0
    %2078 = vmatpush2.msra.mxu0 0.0
    %2079 = vmatprep.subr.mxu0 0.0
    %2080 = vmatpush2.msra.mxu0 0.0
    %2081 = vmatprep.subr.mxu0 0.0
    %2082 = vmatpush2.msra.mxu0 0.0
    %2083 = vmatprep.subr.mxu0 0.0
    %2084 = vmatpush2.msra.mxu0 0.0
    %2085 = vmatprep.subr.mxu0 0.0
    %2086 = vmatpush2.msra.mxu0 0.0
    %2087 = vmatprep.subr.mxu0 0.0
    %2088 = vmatpush2.msra.mxu0 0.0
    %2089 = vmatprep.subr.mxu0 0.0
    %2090 = vmatpush2.msra.mxu0 0.0
    %2091 = vmatprep.subr.mxu0 0.0
    %2092 = vmatpush2.msra.mxu0 0.0
    %2093 = vmatprep.subr.mxu0 0.0
    %2094 = vmatpush2.msra.mxu0 0.0
    %2095 = vmatprep.subr.mxu0 0.0
    %2096 = vmatpush2.msra.mxu0 0.0
    %2097 = vmatprep.subr.mxu0 0.0
    %2098 = vmatpush2.msra.mxu0 0.0
    %2099 = vmatprep.subr.mxu0 0.0
    %2100 = vmatpush2.msra.mxu0 0.0
    %2101 = vmatprep.subr.mxu0 0.0
    %2102 = vmatpush2.msra.mxu0 0.0
    %2103 = vmatprep.mubr.f32.mxu0 0.0
    %2104 = vmatmul.mubr.f32.gmra.mxu0 %v1524
    %v2105 = vpop.f32.mrf.mxu0
    %v2106 = vadd.f32 %v1447, %v2105
    %v2107 = vpop.f32.mrf.mxu0
    %v2108 = vadd.f32 %v1447, %v2107
    %2109 = vmatprep.mubr.f32.mxu0 0.0
    %2110 = vmatmul.mubr.f32.gmra.mxu0 %v1526
    %v2111 = vpop.f32.mrf.mxu0
    %v2112 = vadd.f32 %v1452, %v2111
    %v2113 = vpop.f32.mrf.mxu0
    %v2114 = vadd.f32 %v1452, %v2113
    %2115 = vmatprep.mubr.f32.mxu0 0.0
    %2116 = vmatmul.mubr.f32.gmra.mxu0 %v1528
    %v2117 = vpop.f32.mrf.mxu0
    %v2118 = vadd.f32 %v1457, %v2117
    %v2119 = vpop.f32.mrf.mxu0
    %v2120 = vadd.f32 %v1457, %v2119
    %2121 = vmatprep.mubr.f32.mxu0 0.0
    %2122 = vmatmul.mubr.f32.gmra.mxu0 %v1530
    %v2123 = vpop.f32.mrf.mxu0
    %v2124 = vadd.f32 %v1462, %v2123
    %v2125 = vpop.f32.mrf.mxu0
    %v2126 = vadd.f32 %v1462, %v2125
    %2127 = vmatprep.mubr.f32.mxu0 0.0
    %2128 = vmatmul.mubr.f32.gmra.mxu0 %v1532
    %v2129 = vpop.f32.mrf.mxu0
    %v2130 = vadd.f32 %v1467, %v2129
    %v2131 = vpop.f32.mrf.mxu0
    %v2132 = vadd.f32 %v1467, %v2131
    %2133 = vmatprep.mubr.f32.mxu0 0.0
    %2134 = vmatmul.mubr.f32.gmra.mxu0 %v1534
    %v2135 = vpop.f32.mrf.mxu0
    %v2136 = vadd.f32 %v1472, %v2135
    %v2137 = vpop.f32.mrf.mxu0
    %v2138 = vadd.f32 %v1472, %v2137
    %2139 = vmatprep.mubr.f32.mxu0 0.0
    %2140 = vmatmul.mubr.f32.gmra.mxu0 %v1536
    %v2141 = vpop.f32.mrf.mxu0
    %v2142 = vadd.f32 %v1477, %v2141
    %v2143 = vpop.f32.mrf.mxu0
    %v2144 = vadd.f32 %v1477, %v2143
    %2145 = vmatprep.mubr.f32.mxu0 0.0
    %2146 = vmatmul.mubr.f32.gmra.mxu0 %v1538
    %v2147 = vpop.f32.mrf.mxu0
    %v2148 = vadd.f32 %v1482, %v2147
    %v2149 = vpop.f32.mrf.mxu0
    %v2150 = vadd.f32 %v1482, %v2149
    %2151 = vmatprep.mubr.f32.mxu0 0.0
    %2152 = vmatmul.mubr.f32.gmra.mxu0 %v1540
    %v2153 = vpop.f32.mrf.mxu0
    %v2154 = vadd.f32 %v1487, %v2153
    %v2155 = vpop.f32.mrf.mxu0
    %v2156 = vadd.f32 %v1487, %v2155
    %2157 = vmatprep.mubr.f32.mxu0 0.0
    %2158 = vmatmul.mubr.f32.gmra.mxu0 %v1542
    %v2159 = vpop.f32.mrf.mxu0
    %v2160 = vadd.f32 %v1492, %v2159
    %v2161 = vpop.f32.mrf.mxu0
    %v2162 = vadd.f32 %v1492, %v2161
    %2163 = vmatprep.mubr.f32.mxu0 0.0
    %2164 = vmatmul.mubr.f32.gmra.mxu0 %v1544
    %v2165 = vpop.f32.mrf.mxu0
    %v2166 = vadd.f32 %v1497, %v2165
    %v2167 = vpop.f32.mrf.mxu0
    %v2168 = vadd.f32 %v1497, %v2167
    %2169 = vmatprep.mubr.f32.mxu0 0.0
    %2170 = vmatmul.mubr.f32.gmra.mxu0 %v1546
    %v2171 = vpop.f32.mrf.mxu0
    %v2172 = vadd.f32 %v1502, %v2171
    %v2173 = vpop.f32.mrf.mxu0
    %v2174 = vadd.f32 %v1502, %v2173
    %2175 = vmatprep.mubr.f32.mxu0 0.0
    %2176 = vmatmul.mubr.f32.gmra.mxu0 %v1548
    %v2177 = vpop.f32.mrf.mxu0
    %v2178 = vadd.f32 %v1507, %v2177
    %v2179 = vpop.f32.mrf.mxu0
    %v2180 = vadd.f32 %v1507, %v2179
    %2181 = vmatprep.mubr.f32.mxu0 0.0
    %2182 = vmatmul.mubr.f32.gmra.mxu0 %v1550
    %v2183 = vpop.f32.mrf.mxu0
    %v2184 = vadd.f32 %v1512, %v2183
    %v2185 = vpop.f32.mrf.mxu0
    %v2186 = vadd.f32 %v1512, %v2185
    %2187 = vmatprep.mubr.f32.mxu0 0.0
    %2188 = vmatmul.mubr.f32.gmra.mxu0 %v1552
    %v2189 = vpop.f32.mrf.mxu0
    %v2190 = vadd.f32 %v1517, %v2189
    %v2191 = vpop.f32.mrf.mxu0
    %v2192 = vadd.f32 %v1517, %v2191
    %2193 = vmatprep.mubr.f32.mxu0 0.0
    %2194 = vmatmul.mubr.f32.gmra.mxu0 %v1554
    %v2195 = vpop.f32.mrf.mxu0
    %v2196 = vadd.f32 %v1522, %v2195
    %v2197 = vpop.f32.mrf.mxu0
    %v2198 = vadd.f32 %v1522, %v2197
    %2199 = vdwg.mxu0
    %2200 = vmatprep.subr.mxu0 0.0
    %2201 = vmatpush1.msra.mxu0 0.0
    %2202 = vmatprep.subr.mxu0 0.0
    %2203 = vmatpush1.msra.mxu0 0.0
    %2204 = vmatprep.subr.mxu0 0.0
    %2205 = vmatpush1.msra.mxu0 0.0
    %2206 = vmatprep.subr.mxu0 0.0
    %2207 = vmatpush1.msra.mxu0 0.0
    %2208 = vmatprep.subr.mxu0 0.0
    %2209 = vmatpush1.msra.mxu0 0.0
    %2210 = vmatprep.subr.mxu0 0.0
    %2211 = vmatpush1.msra.mxu0 0.0
    %2212 = vmatprep.subr.mxu0 0.0
    %2213 = vmatpush1.msra.mxu0 0.0
    %2214 = vmatprep.subr.mxu0 0.0
    %2215 = vmatpush1.msra.mxu0 0.0
    %2216 = vmatprep.subr.mxu0 0.0
    %2217 = vmatpush1.msra.mxu0 0.0
    %2218 = vmatprep.subr.mxu0 0.0
    %2219 = vmatpush1.msra.mxu0 0.0
    %2220 = vmatprep.subr.mxu0 0.0
    %2221 = vmatpush1.msra.mxu0 0.0
    %2222 = vmatprep.subr.mxu0 0.0
    %2223 = vmatpush1.msra.mxu0 0.0
    %2224 = vmatprep.subr.mxu0 0.0
    %2225 = vmatpush1.msra.mxu0 0.0
    %2226 = vmatprep.subr.mxu0 0.0
    %2227 = vmatpush1.msra.mxu0 0.0
    %2228 = vmatprep.subr.mxu0 0.0
    %2229 = vmatpush1.msra.mxu0 0.0
    %2230 = vmatprep.subr.mxu0 %v1336
    %2231 = vmatpush1.msra.mxu0 %v1321
    %2232 = vmatprep.subr.mxu0 0.0
    %2233 = vmatpush2.msra.mxu0 0.0
    %2234 = vmatprep.subr.mxu0 0.0
    %2235 = vmatpush2.msra.mxu0 0.0
    %2236 = vmatprep.subr.mxu0 0.0
    %2237 = vmatpush2.msra.mxu0 0.0
    %2238 = vmatprep.subr.mxu0 0.0
    %2239 = vmatpush2.msra.mxu0 0.0
    %2240 = vmatprep.subr.mxu0 0.0
    %2241 = vmatpush2.msra.mxu0 0.0
    %2242 = vmatprep.subr.mxu0 0.0
    %2243 = vmatpush2.msra.mxu0 0.0
    %2244 = vmatprep.subr.mxu0 0.0
    %2245 = vmatpush2.msra.mxu0 0.0
    %2246 = vmatprep.subr.mxu0 0.0
    %2247 = vmatpush2.msra.mxu0 0.0
    %2248 = vmatprep.subr.mxu0 0.0
    %2249 = vmatpush2.msra.mxu0 0.0
    %2250 = vmatprep.subr.mxu0 0.0
    %2251 = vmatpush2.msra.mxu0 0.0
    %2252 = vmatprep.subr.mxu0 0.0
    %2253 = vmatpush2.msra.mxu0 0.0
    %2254 = vmatprep.subr.mxu0 0.0
    %2255 = vmatpush2.msra.mxu0 0.0
    %2256 = vmatprep.subr.mxu0 0.0
    %2257 = vmatpush2.msra.mxu0 0.0
    %2258 = vmatprep.subr.mxu0 0.0
    %2259 = vmatpush2.msra.mxu0 0.0
    %2260 = vmatprep.subr.mxu0 0.0
    %2261 = vmatpush2.msra.mxu0 0.0
    %2262 = vmatprep.subr.mxu0 0.0
    %2263 = vmatpush2.msra.mxu0 0.0
    %2264 = vmatprep.mubr.f32.mxu0 0.0
    %2265 = vmatmul.mubr.f32.gmra.mxu0 %v1524
    %v2266 = vpop.f32.mrf.mxu0
    %v2267 = vadd.f32 %v1447, %v2266
    %v2268 = vpop.f32.mrf.mxu0
    %v2269 = vadd.f32 %v1447, %v2268
    %2270 = vmatprep.mubr.f32.mxu0 0.0
    %2271 = vmatmul.mubr.f32.gmra.mxu0 %v1526
    %v2272 = vpop.f32.mrf.mxu0
    %v2273 = vadd.f32 %v1452, %v2272
    %v2274 = vpop.f32.mrf.mxu0
    %v2275 = vadd.f32 %v1452, %v2274
    %2276 = vmatprep.mubr.f32.mxu0 0.0
    %2277 = vmatmul.mubr.f32.gmra.mxu0 %v1528
    %v2278 = vpop.f32.mrf.mxu0
    %v2279 = vadd.f32 %v1457, %v2278
    %v2280 = vpop.f32.mrf.mxu0
    %v2281 = vadd.f32 %v1457, %v2280
    %2282 = vmatprep.mubr.f32.mxu0 0.0
    %2283 = vmatmul.mubr.f32.gmra.mxu0 %v1530
    %v2284 = vpop.f32.mrf.mxu0
    %v2285 = vadd.f32 %v1462, %v2284
    %v2286 = vpop.f32.mrf.mxu0
    %v2287 = vadd.f32 %v1462, %v2286
    %2288 = vmatprep.mubr.f32.mxu0 0.0
    %2289 = vmatmul.mubr.f32.gmra.mxu0 %v1532
    %v2290 = vpop.f32.mrf.mxu0
    %v2291 = vadd.f32 %v1467, %v2290
    %v2292 = vpop.f32.mrf.mxu0
    %v2293 = vadd.f32 %v1467, %v2292
    %2294 = vmatprep.mubr.f32.mxu0 0.0
    %2295 = vmatmul.mubr.f32.gmra.mxu0 %v1534
    %v2296 = vpop.f32.mrf.mxu0
    %v2297 = vadd.f32 %v1472, %v2296
    %v2298 = vpop.f32.mrf.mxu0
    %v2299 = vadd.f32 %v1472, %v2298
    %2300 = vmatprep.mubr.f32.mxu0 0.0
    %2301 = vmatmul.mubr.f32.gmra.mxu0 %v1536
    %v2302 = vpop.f32.mrf.mxu0
    %v2303 = vadd.f32 %v1477, %v2302
    %v2304 = vpop.f32.mrf.mxu0
    %v2305 = vadd.f32 %v1477, %v2304
    %2306 = vmatprep.mubr.f32.mxu0 0.0
    %2307 = vmatmul.mubr.f32.gmra.mxu0 %v1538
    %v2308 = vpop.f32.mrf.mxu0
    %v2309 = vadd.f32 %v1482, %v2308
    %v2310 = vpop.f32.mrf.mxu0
    %v2311 = vadd.f32 %v1482, %v2310
    %2312 = vmatprep.mubr.f32.mxu0 0.0
    %2313 = vmatmul.mubr.f32.gmra.mxu0 %v1540
    %v2314 = vpop.f32.mrf.mxu0
    %v2315 = vadd.f32 %v1487, %v2314
    %v2316 = vpop.f32.mrf.mxu0
    %v2317 = vadd.f32 %v1487, %v2316
    %2318 = vmatprep.mubr.f32.mxu0 0.0
    %2319 = vmatmul.mubr.f32.gmra.mxu0 %v1542
    %v2320 = vpop.f32.mrf.mxu0
    %v2321 = vadd.f32 %v1492, %v2320
    %v2322 = vpop.f32.mrf.mxu0
    %v2323 = vadd.f32 %v1492, %v2322
    %2324 = vmatprep.mubr.f32.mxu0 0.0
    %2325 = vmatmul.mubr.f32.gmra.mxu0 %v1544
    %v2326 = vpop.f32.mrf.mxu0
    %v2327 = vadd.f32 %v1497, %v2326
    %v2328 = vpop.f32.mrf.mxu0
    %v2329 = vadd.f32 %v1497, %v2328
    %2330 = vmatprep.mubr.f32.mxu0 0.0
    %2331 = vmatmul.mubr.f32.gmra.mxu0 %v1546
    %v2332 = vpop.f32.mrf.mxu0
    %v2333 = vadd.f32 %v1502, %v2332
    %v2334 = vpop.f32.mrf.mxu0
    %v2335 = vadd.f32 %v1502, %v2334
    %2336 = vmatprep.mubr.f32.mxu0 0.0
    %2337 = vmatmul.mubr.f32.gmra.mxu0 %v1548
    %v2338 = vpop.f32.mrf.mxu0
    %v2339 = vadd.f32 %v1507, %v2338
    %v2340 = vpop.f32.mrf.mxu0
    %v2341 = vadd.f32 %v1507, %v2340
    %2342 = vmatprep.mubr.f32.mxu0 0.0
    %2343 = vmatmul.mubr.f32.gmra.mxu0 %v1550
    %v2344 = vpop.f32.mrf.mxu0
    %v2345 = vadd.f32 %v1512, %v2344
    %v2346 = vpop.f32.mrf.mxu0
    %v2347 = vadd.f32 %v1512, %v2346
    %2348 = vmatprep.mubr.f32.mxu0 0.0
    %2349 = vmatmul.mubr.f32.gmra.mxu0 %v1552
    %v2350 = vpop.f32.mrf.mxu0
    %v2351 = vadd.f32 %v1517, %v2350
    %v2352 = vpop.f32.mrf.mxu0
    %v2353 = vadd.f32 %v1517, %v2352
    %2354 = vmatprep.mubr.f32.mxu0 0.0
    %2355 = vmatmul.mubr.f32.gmra.mxu0 %v1554
    %v2356 = vpop.f32.mrf.mxu0
    %v2357 = vadd.f32 %v1522, %v2356
    %v2358 = vpop.f32.mrf.mxu0
    %v2359 = vadd.f32 %v1522, %v2358
    %2360 = vdwg.mxu0
    %2361 = vmatprep.subr.mxu0 0.0
    %2362 = vmatpush1.msra.mxu0 0.0
    %2363 = vmatprep.subr.mxu0 0.0
    %2364 = vmatpush1.msra.mxu0 0.0
    %2365 = vmatprep.subr.mxu0 0.0
    %2366 = vmatpush1.msra.mxu0 0.0
    %2367 = vmatprep.subr.mxu0 0.0
    %2368 = vmatpush1.msra.mxu0 0.0
    %2369 = vmatprep.subr.mxu0 0.0
    %2370 = vmatpush1.msra.mxu0 0.0
    %2371 = vmatprep.subr.mxu0 0.0
    %2372 = vmatpush1.msra.mxu0 0.0
    %2373 = vmatprep.subr.mxu0 0.0
    %2374 = vmatpush1.msra.mxu0 0.0
    %2375 = vmatprep.subr.mxu0 0.0
    %2376 = vmatpush1.msra.mxu0 0.0
    %2377 = vmatprep.subr.mxu0 0.0
    %2378 = vmatpush1.msra.mxu0 0.0
    %2379 = vmatprep.subr.mxu0 0.0
    %2380 = vmatpush1.msra.mxu0 0.0
    %2381 = vmatprep.subr.mxu0 0.0
    %2382 = vmatpush1.msra.mxu0 0.0
    %2383 = vmatprep.subr.mxu0 0.0
    %2384 = vmatpush1.msra.mxu0 0.0
    %2385 = vmatprep.subr.mxu0 0.0
    %2386 = vmatpush1.msra.mxu0 0.0
    %2387 = vmatprep.subr.mxu0 0.0
    %2388 = vmatpush1.msra.mxu0 0.0
    %2389 = vmatprep.subr.mxu0 0.0
    %2390 = vmatpush1.msra.mxu0 0.0
    %2391 = vmatprep.subr.mxu0 %v1366
    %2392 = vmatpush1.msra.mxu0 %v1351
    %2393 = vmatprep.subr.mxu0 0.0
    %2394 = vmatpush2.msra.mxu0 0.0
    %2395 = vmatprep.subr.mxu0 0.0
    %2396 = vmatpush2.msra.mxu0 0.0
    %2397 = vmatprep.subr.mxu0 0.0
    %2398 = vmatpush2.msra.mxu0 0.0
    %2399 = vmatprep.subr.mxu0 0.0
    %2400 = vmatpush2.msra.mxu0 0.0
    %2401 = vmatprep.subr.mxu0 0.0
    %2402 = vmatpush2.msra.mxu0 0.0
    %2403 = vmatprep.subr.mxu0 0.0
    %2404 = vmatpush2.msra.mxu0 0.0
    %2405 = vmatprep.subr.mxu0 0.0
    %2406 = vmatpush2.msra.mxu0 0.0
    %2407 = vmatprep.subr.mxu0 0.0
    %2408 = vmatpush2.msra.mxu0 0.0
    %2409 = vmatprep.subr.mxu0 0.0
    %2410 = vmatpush2.msra.mxu0 0.0
    %2411 = vmatprep.subr.mxu0 0.0
    %2412 = vmatpush2.msra.mxu0 0.0
    %2413 = vmatprep.subr.mxu0 0.0
    %2414 = vmatpush2.msra.mxu0 0.0
    %2415 = vmatprep.subr.mxu0 0.0
    %2416 = vmatpush2.msra.mxu0 0.0
    %2417 = vmatprep.subr.mxu0 0.0
    %2418 = vmatpush2.msra.mxu0 0.0
    %2419 = vmatprep.subr.mxu0 0.0
    %2420 = vmatpush2.msra.mxu0 0.0
    %2421 = vmatprep.subr.mxu0 0.0
    %2422 = vmatpush2.msra.mxu0 0.0
    %2423 = vmatprep.subr.mxu0 0.0
    %2424 = vmatpush2.msra.mxu0 0.0
    %2425 = vmatprep.mubr.f32.mxu0 0.0
    %2426 = vmatmul.mubr.f32.gmra.mxu0 %v1524
    %v2427 = vpop.f32.mrf.mxu0
    %v2428 = vadd.f32 %v1447, %v2427
    %v2429 = vpop.f32.mrf.mxu0
    %v2430 = vadd.f32 %v1447, %v2429
    %2431 = vmatprep.mubr.f32.mxu0 0.0
    %2432 = vmatmul.mubr.f32.gmra.mxu0 %v1526
    %v2433 = vpop.f32.mrf.mxu0
    %v2434 = vadd.f32 %v1452, %v2433
    %v2435 = vpop.f32.mrf.mxu0
    %v2436 = vadd.f32 %v1452, %v2435
    %2437 = vmatprep.mubr.f32.mxu0 0.0
    %2438 = vmatmul.mubr.f32.gmra.mxu0 %v1528
    %v2439 = vpop.f32.mrf.mxu0
    %v2440 = vadd.f32 %v1457, %v2439
    %v2441 = vpop.f32.mrf.mxu0
    %v2442 = vadd.f32 %v1457, %v2441
    %2443 = vmatprep.mubr.f32.mxu0 0.0
    %2444 = vmatmul.mubr.f32.gmra.mxu0 %v1530
    %v2445 = vpop.f32.mrf.mxu0
    %v2446 = vadd.f32 %v1462, %v2445
    %v2447 = vpop.f32.mrf.mxu0
    %v2448 = vadd.f32 %v1462, %v2447
    %2449 = vmatprep.mubr.f32.mxu0 0.0
    %2450 = vmatmul.mubr.f32.gmra.mxu0 %v1532
    %v2451 = vpop.f32.mrf.mxu0
    %v2452 = vadd.f32 %v1467, %v2451
    %v2453 = vpop.f32.mrf.mxu0
    %v2454 = vadd.f32 %v1467, %v2453
    %2455 = vmatprep.mubr.f32.mxu0 0.0
    %2456 = vmatmul.mubr.f32.gmra.mxu0 %v1534
    %v2457 = vpop.f32.mrf.mxu0
    %v2458 = vadd.f32 %v1472, %v2457
    %v2459 = vpop.f32.mrf.mxu0
    %v2460 = vadd.f32 %v1472, %v2459
    %2461 = vmatprep.mubr.f32.mxu0 0.0
    %2462 = vmatmul.mubr.f32.gmra.mxu0 %v1536
    %v2463 = vpop.f32.mrf.mxu0
    %v2464 = vadd.f32 %v1477, %v2463
    %v2465 = vpop.f32.mrf.mxu0
    %v2466 = vadd.f32 %v1477, %v2465
    %2467 = vmatprep.mubr.f32.mxu0 0.0
    %2468 = vmatmul.mubr.f32.gmra.mxu0 %v1538
    %v2469 = vpop.f32.mrf.mxu0
    %v2470 = vadd.f32 %v1482, %v2469
    %v2471 = vpop.f32.mrf.mxu0
    %v2472 = vadd.f32 %v1482, %v2471
    %2473 = vmatprep.mubr.f32.mxu0 0.0
    %2474 = vmatmul.mubr.f32.gmra.mxu0 %v1540
    %v2475 = vpop.f32.mrf.mxu0
    %v2476 = vadd.f32 %v1487, %v2475
    %v2477 = vpop.f32.mrf.mxu0
    %v2478 = vadd.f32 %v1487, %v2477
    %2479 = vmatprep.mubr.f32.mxu0 0.0
    %2480 = vmatmul.mubr.f32.gmra.mxu0 %v1542
    %v2481 = vpop.f32.mrf.mxu0
    %v2482 = vadd.f32 %v1492, %v2481
    %v2483 = vpop.f32.mrf.mxu0
    %v2484 = vadd.f32 %v1492, %v2483
    %2485 = vmatprep.mubr.f32.mxu0 0.0
    %2486 = vmatmul.mubr.f32.gmra.mxu0 %v1544
    %v2487 = vpop.f32.mrf.mxu0
    %v2488 = vadd.f32 %v1497, %v2487
    %v2489 = vpop.f32.mrf.mxu0
    %v2490 = vadd.f32 %v1497, %v2489
    %2491 = vmatprep.mubr.f32.mxu0 0.0
    %2492 = vmatmul.mubr.f32.gmra.mxu0 %v1546
    %v2493 = vpop.f32.mrf.mxu0
    %v2494 = vadd.f32 %v1502, %v2493
    %v2495 = vpop.f32.mrf.mxu0
    %v2496 = vadd.f32 %v1502, %v2495
    %2497 = vmatprep.mubr.f32.mxu0 0.0
    %2498 = vmatmul.mubr.f32.gmra.mxu0 %v1548
    %v2499 = vpop.f32.mrf.mxu0
    %v2500 = vadd.f32 %v1507, %v2499
    %v2501 = vpop.f32.mrf.mxu0
    %v2502 = vadd.f32 %v1507, %v2501
    %2503 = vmatprep.mubr.f32.mxu0 0.0
    %2504 = vmatmul.mubr.f32.gmra.mxu0 %v1550
    %v2505 = vpop.f32.mrf.mxu0
    %v2506 = vadd.f32 %v1512, %v2505
    %v2507 = vpop.f32.mrf.mxu0
    %v2508 = vadd.f32 %v1512, %v2507
    %2509 = vmatprep.mubr.f32.mxu0 0.0
    %2510 = vmatmul.mubr.f32.gmra.mxu0 %v1552
    %v2511 = vpop.f32.mrf.mxu0
    %v2512 = vadd.f32 %v1517, %v2511
    %v2513 = vpop.f32.mrf.mxu0
    %v2514 = vadd.f32 %v1517, %v2513
    %2515 = vmatprep.mubr.f32.mxu0 0.0
    %2516 = vmatmul.mubr.f32.gmra.mxu0 %v1554
    %v2517 = vpop.f32.mrf.mxu0
    %v2518 = vadd.f32 %v1522, %v2517
    %v2519 = vpop.f32.mrf.mxu0
    %v2520 = vadd.f32 %v1522, %v2519
    %2521 = vdwg.mxu0
    %2522 = vmatprep.subr.mxu0 0.0
    %2523 = vmatpush1.msra.mxu0 0.0
    %2524 = vmatprep.subr.mxu0 0.0
    %2525 = vmatpush1.msra.mxu0 0.0
    %2526 = vmatprep.subr.mxu0 0.0
    %2527 = vmatpush1.msra.mxu0 0.0
    %2528 = vmatprep.subr.mxu0 0.0
    %2529 = vmatpush1.msra.mxu0 0.0
    %2530 = vmatprep.subr.mxu0 0.0
    %2531 = vmatpush1.msra.mxu0 0.0
    %2532 = vmatprep.subr.mxu0 0.0
    %2533 = vmatpush1.msra.mxu0 0.0
    %2534 = vmatprep.subr.mxu0 0.0
    %2535 = vmatpush1.msra.mxu0 0.0
    %2536 = vmatprep.subr.mxu0 0.0
    %2537 = vmatpush1.msra.mxu0 0.0
    %2538 = vmatprep.subr.mxu0 0.0
    %2539 = vmatpush1.msra.mxu0 0.0
    %2540 = vmatprep.subr.mxu0 0.0
    %2541 = vmatpush1.msra.mxu0 0.0
    %2542 = vmatprep.subr.mxu0 0.0
    %2543 = vmatpush1.msra.mxu0 0.0
    %2544 = vmatprep.subr.mxu0 0.0
    %2545 = vmatpush1.msra.mxu0 0.0
    %2546 = vmatprep.subr.mxu0 0.0
    %2547 = vmatpush1.msra.mxu0 0.0
    %2548 = vmatprep.subr.mxu0 0.0
    %2549 = vmatpush1.msra.mxu0 0.0
    %2550 = vmatprep.subr.mxu0 0.0
    %2551 = vmatpush1.msra.mxu0 0.0
    %2552 = vmatprep.subr.mxu0 %v1396
    %2553 = vmatpush1.msra.mxu0 %v1381
    %2554 = vmatprep.subr.mxu0 0.0
    %2555 = vmatpush2.msra.mxu0 0.0
    %2556 = vmatprep.subr.mxu0 0.0
    %2557 = vmatpush2.msra.mxu0 0.0
    %2558 = vmatprep.subr.mxu0 0.0
    %2559 = vmatpush2.msra.mxu0 0.0
    %2560 = vmatprep.subr.mxu0 0.0
    %2561 = vmatpush2.msra.mxu0 0.0
    %2562 = vmatprep.subr.mxu0 0.0
    %2563 = vmatpush2.msra.mxu0 0.0
    %2564 = vmatprep.subr.mxu0 0.0
    %2565 = vmatpush2.msra.mxu0 0.0
    %2566 = vmatprep.subr.mxu0 0.0
    %2567 = vmatpush2.msra.mxu0 0.0
    %2568 = vmatprep.subr.mxu0 0.0
    %2569 = vmatpush2.msra.mxu0 0.0
    %2570 = vmatprep.subr.mxu0 0.0
    %2571 = vmatpush2.msra.mxu0 0.0
    %2572 = vmatprep.subr.mxu0 0.0
    %2573 = vmatpush2.msra.mxu0 0.0
    %2574 = vmatprep.subr.mxu0 0.0
    %2575 = vmatpush2.msra.mxu0 0.0
    %2576 = vmatprep.subr.mxu0 0.0
    %2577 = vmatpush2.msra.mxu0 0.0
    %2578 = vmatprep.subr.mxu0 0.0
    %2579 = vmatpush2.msra.mxu0 0.0
    %2580 = vmatprep.subr.mxu0 0.0
    %2581 = vmatpush2.msra.mxu0 0.0
    %2582 = vmatprep.subr.mxu0 0.0
    %2583 = vmatpush2.msra.mxu0 0.0
    %2584 = vmatprep.subr.mxu0 0.0
    %2585 = vmatpush2.msra.mxu0 0.0
    %2586 = vmatprep.mubr.f32.mxu0 0.0
    %2587 = vmatmul.mubr.f32.gmra.mxu0 %v1524
    %v2588 = vpop.f32.mrf.mxu0
    %v2589 = vadd.f32 %v1447, %v2588
    %v2590 = vpop.f32.mrf.mxu0
    %v2591 = vadd.f32 %v1447, %v2590
    %2592 = vmatprep.mubr.f32.mxu0 0.0
    %2593 = vmatmul.mubr.f32.gmra.mxu0 %v1526
    %v2594 = vpop.f32.mrf.mxu0
    %v2595 = vadd.f32 %v1452, %v2594
    %v2596 = vpop.f32.mrf.mxu0
    %v2597 = vadd.f32 %v1452, %v2596
    %2598 = vmatprep.mubr.f32.mxu0 0.0
    %2599 = vmatmul.mubr.f32.gmra.mxu0 %v1528
    %v2600 = vpop.f32.mrf.mxu0
    %v2601 = vadd.f32 %v1457, %v2600
    %v2602 = vpop.f32.mrf.mxu0
    %v2603 = vadd.f32 %v1457, %v2602
    %2604 = vmatprep.mubr.f32.mxu0 0.0
    %2605 = vmatmul.mubr.f32.gmra.mxu0 %v1530
    %v2606 = vpop.f32.mrf.mxu0
    %v2607 = vadd.f32 %v1462, %v2606
    %v2608 = vpop.f32.mrf.mxu0
    %v2609 = vadd.f32 %v1462, %v2608
    %2610 = vmatprep.mubr.f32.mxu0 0.0
    %2611 = vmatmul.mubr.f32.gmra.mxu0 %v1532
    %v2612 = vpop.f32.mrf.mxu0
    %v2613 = vadd.f32 %v1467, %v2612
    %v2614 = vpop.f32.mrf.mxu0
    %v2615 = vadd.f32 %v1467, %v2614
    %2616 = vmatprep.mubr.f32.mxu0 0.0
    %2617 = vmatmul.mubr.f32.gmra.mxu0 %v1534
    %v2618 = vpop.f32.mrf.mxu0
    %v2619 = vadd.f32 %v1472, %v2618
    %v2620 = vpop.f32.mrf.mxu0
    %v2621 = vadd.f32 %v1472, %v2620
    %2622 = vmatprep.mubr.f32.mxu0 0.0
    %2623 = vmatmul.mubr.f32.gmra.mxu0 %v1536
    %v2624 = vpop.f32.mrf.mxu0
    %v2625 = vadd.f32 %v1477, %v2624
    %v2626 = vpop.f32.mrf.mxu0
    %v2627 = vadd.f32 %v1477, %v2626
    %2628 = vmatprep.mubr.f32.mxu0 0.0
    %2629 = vmatmul.mubr.f32.gmra.mxu0 %v1538
    %v2630 = vpop.f32.mrf.mxu0
    %v2631 = vadd.f32 %v1482, %v2630
    %v2632 = vpop.f32.mrf.mxu0
    %v2633 = vadd.f32 %v1482, %v2632
    %2634 = vmatprep.mubr.f32.mxu0 0.0
    %2635 = vmatmul.mubr.f32.gmra.mxu0 %v1540
    %v2636 = vpop.f32.mrf.mxu0
    %v2637 = vadd.f32 %v1487, %v2636
    %v2638 = vpop.f32.mrf.mxu0
    %v2639 = vadd.f32 %v1487, %v2638
    %2640 = vmatprep.mubr.f32.mxu0 0.0
    %2641 = vmatmul.mubr.f32.gmra.mxu0 %v1542
    %v2642 = vpop.f32.mrf.mxu0
    %v2643 = vadd.f32 %v1492, %v2642
    %v2644 = vpop.f32.mrf.mxu0
    %v2645 = vadd.f32 %v1492, %v2644
    %2646 = vmatprep.mubr.f32.mxu0 0.0
    %2647 = vmatmul.mubr.f32.gmra.mxu0 %v1544
    %v2648 = vpop.f32.mrf.mxu0
    %v2649 = vadd.f32 %v1497, %v2648
    %v2650 = vpop.f32.mrf.mxu0
    %v2651 = vadd.f32 %v1497, %v2650
    %2652 = vmatprep.mubr.f32.mxu0 0.0
    %2653 = vmatmul.mubr.f32.gmra.mxu0 %v1546
    %v2654 = vpop.f32.mrf.mxu0
    %v2655 = vadd.f32 %v1502, %v2654
    %v2656 = vpop.f32.mrf.mxu0
    %v2657 = vadd.f32 %v1502, %v2656
    %2658 = vmatprep.mubr.f32.mxu0 0.0
    %2659 = vmatmul.mubr.f32.gmra.mxu0 %v1548
    %v2660 = vpop.f32.mrf.mxu0
    %v2661 = vadd.f32 %v1507, %v2660
    %v2662 = vpop.f32.mrf.mxu0
    %v2663 = vadd.f32 %v1507, %v2662
    %2664 = vmatprep.mubr.f32.mxu0 0.0
    %2665 = vmatmul.mubr.f32.gmra.mxu0 %v1550
    %v2666 = vpop.f32.mrf.mxu0
    %v2667 = vadd.f32 %v1512, %v2666
    %v2668 = vpop.f32.mrf.mxu0
    %v2669 = vadd.f32 %v1512, %v2668
    %2670 = vmatprep.mubr.f32.mxu0 0.0
    %2671 = vmatmul.mubr.f32.gmra.mxu0 %v1552
    %v2672 = vpop.f32.mrf.mxu0
    %v2673 = vadd.f32 %v1517, %v2672
    %v2674 = vpop.f32.mrf.mxu0
    %v2675 = vadd.f32 %v1517, %v2674
    %2676 = vmatprep.mubr.f32.mxu0 0.0
    %2677 = vmatmul.mubr.f32.gmra.mxu0 %v1554
    %v2678 = vpop.f32.mrf.mxu0
    %v2679 = vadd.f32 %v1522, %v2678
    %v2680 = vpop.f32.mrf.mxu0
    %v2681 = vadd.f32 %v1522, %v2680
    %2682 = vdwg.mxu0
    %2683 = vmatprep.subr.mxu0 0.0
    %2684 = vmatpush1.msra.mxu0 0.0
    %2685 = vmatprep.subr.mxu0 0.0
    %2686 = vmatpush1.msra.mxu0 0.0
    %2687 = vmatprep.subr.mxu0 0.0
    %2688 = vmatpush1.msra.mxu0 0.0
    %2689 = vmatprep.subr.mxu0 0.0
    %2690 = vmatpush1.msra.mxu0 0.0
    %2691 = vmatprep.subr.mxu0 0.0
    %2692 = vmatpush1.msra.mxu0 0.0
    %2693 = vmatprep.subr.mxu0 0.0
    %2694 = vmatpush1.msra.mxu0 0.0
    %2695 = vmatprep.subr.mxu0 0.0
    %2696 = vmatpush1.msra.mxu0 0.0
    %2697 = vmatprep.subr.mxu0 0.0
    %2698 = vmatpush1.msra.mxu0 0.0
    %2699 = vmatprep.subr.mxu0 0.0
    %2700 = vmatpush1.msra.mxu0 0.0
    %2701 = vmatprep.subr.mxu0 0.0
    %2702 = vmatpush1.msra.mxu0 0.0
    %2703 = vmatprep.subr.mxu0 0.0
    %2704 = vmatpush1.msra.mxu0 0.0
    %2705 = vmatprep.subr.mxu0 0.0
    %2706 = vmatpush1.msra.mxu0 0.0
    %2707 = vmatprep.subr.mxu0 0.0
    %2708 = vmatpush1.msra.mxu0 0.0
    %2709 = vmatprep.subr.mxu0 0.0
    %2710 = vmatpush1.msra.mxu0 0.0
    %2711 = vmatprep.subr.mxu0 0.0
    %2712 = vmatpush1.msra.mxu0 0.0
    %2713 = vmatprep.subr.mxu0 %v1426
    %2714 = vmatpush1.msra.mxu0 %v1411
    %2715 = vmatprep.subr.mxu0 0.0
    %2716 = vmatpush2.msra.mxu0 0.0
    %2717 = vmatprep.subr.mxu0 0.0
    %2718 = vmatpush2.msra.mxu0 0.0
    %2719 = vmatprep.subr.mxu0 0.0
    %2720 = vmatpush2.msra.mxu0 0.0
    %2721 = vmatprep.subr.mxu0 0.0
    %2722 = vmatpush2.msra.mxu0 0.0
    %2723 = vmatprep.subr.mxu0 0.0
    %2724 = vmatpush2.msra.mxu0 0.0
    %2725 = vmatprep.subr.mxu0 0.0
    %2726 = vmatpush2.msra.mxu0 0.0
    %2727 = vmatprep.subr.mxu0 0.0
    %2728 = vmatpush2.msra.mxu0 0.0
    %2729 = vmatprep.subr.mxu0 0.0
    %2730 = vmatpush2.msra.mxu0 0.0
    %2731 = vmatprep.subr.mxu0 0.0
    %2732 = vmatpush2.msra.mxu0 0.0
    %2733 = vmatprep.subr.mxu0 0.0
    %2734 = vmatpush2.msra.mxu0 0.0
    %2735 = vmatprep.subr.mxu0 0.0
    %2736 = vmatpush2.msra.mxu0 0.0
    %2737 = vmatprep.subr.mxu0 0.0
    %2738 = vmatpush2.msra.mxu0 0.0
    %2739 = vmatprep.subr.mxu0 0.0
    %2740 = vmatpush2.msra.mxu0 0.0
    %2741 = vmatprep.subr.mxu0 0.0
    %2742 = vmatpush2.msra.mxu0 0.0
    %2743 = vmatprep.subr.mxu0 0.0
    %2744 = vmatpush2.msra.mxu0 0.0
    %2745 = vmatprep.subr.mxu0 0.0
    %2746 = vmatpush2.msra.mxu0 0.0
    %2747 = vmatprep.mubr.f32.mxu0 0.0
    %2748 = vmatmul.mubr.f32.gmra.mxu0 %v1524
    %v2749 = vpop.f32.mrf.mxu0
    %v2750 = vadd.f32 %v1447, %v2749
    %v2751 = vpop.f32.mrf.mxu0
    %v2752 = vadd.f32 %v1447, %v2751
    %2753 = vmatprep.mubr.f32.mxu0 0.0
    %2754 = vmatmul.mubr.f32.gmra.mxu0 %v1526
    %v2755 = vpop.f32.mrf.mxu0
    %v2756 = vadd.f32 %v1452, %v2755
    %v2757 = vpop.f32.mrf.mxu0
    %v2758 = vadd.f32 %v1452, %v2757
    %2759 = vmatprep.mubr.f32.mxu0 0.0
    %2760 = vmatmul.mubr.f32.gmra.mxu0 %v1528
    %v2761 = vpop.f32.mrf.mxu0
    %v2762 = vadd.f32 %v1457, %v2761
    %v2763 = vpop.f32.mrf.mxu0
    %v2764 = vadd.f32 %v1457, %v2763
    %2765 = vmatprep.mubr.f32.mxu0 0.0
    %2766 = vmatmul.mubr.f32.gmra.mxu0 %v1530
    %v2767 = vpop.f32.mrf.mxu0
    %v2768 = vadd.f32 %v1462, %v2767
    %v2769 = vpop.f32.mrf.mxu0
    %v2770 = vadd.f32 %v1462, %v2769
    %2771 = vmatprep.mubr.f32.mxu0 0.0
    %2772 = vmatmul.mubr.f32.gmra.mxu0 %v1532
    %v2773 = vpop.f32.mrf.mxu0
    %v2774 = vadd.f32 %v1467, %v2773
    %v2775 = vpop.f32.mrf.mxu0
    %v2776 = vadd.f32 %v1467, %v2775
    %2777 = vmatprep.mubr.f32.mxu0 0.0
    %2778 = vmatmul.mubr.f32.gmra.mxu0 %v1534
    %v2779 = vpop.f32.mrf.mxu0
    %v2780 = vadd.f32 %v1472, %v2779
    %v2781 = vpop.f32.mrf.mxu0
    %v2782 = vadd.f32 %v1472, %v2781
    %2783 = vmatprep.mubr.f32.mxu0 0.0
    %2784 = vmatmul.mubr.f32.gmra.mxu0 %v1536
    %v2785 = vpop.f32.mrf.mxu0
    %v2786 = vadd.f32 %v1477, %v2785
    %v2787 = vpop.f32.mrf.mxu0
    %v2788 = vadd.f32 %v1477, %v2787
    %2789 = vmatprep.mubr.f32.mxu0 0.0
    %2790 = vmatmul.mubr.f32.gmra.mxu0 %v1538
    %v2791 = vpop.f32.mrf.mxu0
    %v2792 = vadd.f32 %v1482, %v2791
    %v2793 = vpop.f32.mrf.mxu0
    %v2794 = vadd.f32 %v1482, %v2793
    %2795 = vmatprep.mubr.f32.mxu0 0.0
    %2796 = vmatmul.mubr.f32.gmra.mxu0 %v1540
    %v2797 = vpop.f32.mrf.mxu0
    %v2798 = vadd.f32 %v1487, %v2797
    %v2799 = vpop.f32.mrf.mxu0
    %v2800 = vadd.f32 %v1487, %v2799
    %2801 = vmatprep.mubr.f32.mxu0 0.0
    %2802 = vmatmul.mubr.f32.gmra.mxu0 %v1542
    %v2803 = vpop.f32.mrf.mxu0
    %v2804 = vadd.f32 %v1492, %v2803
    %v2805 = vpop.f32.mrf.mxu0
    %v2806 = vadd.f32 %v1492, %v2805
    %2807 = vmatprep.mubr.f32.mxu0 0.0
    %2808 = vmatmul.mubr.f32.gmra.mxu0 %v1544
    %v2809 = vpop.f32.mrf.mxu0
    %v2810 = vadd.f32 %v1497, %v2809
    %v2811 = vpop.f32.mrf.mxu0
    %v2812 = vadd.f32 %v1497, %v2811
    %2813 = vmatprep.mubr.f32.mxu0 0.0
    %2814 = vmatmul.mubr.f32.gmra.mxu0 %v1546
    %v2815 = vpop.f32.mrf.mxu0
    %v2816 = vadd.f32 %v1502, %v2815
    %v2817 = vpop.f32.mrf.mxu0
    %v2818 = vadd.f32 %v1502, %v2817
    %2819 = vmatprep.mubr.f32.mxu0 0.0
    %2820 = vmatmul.mubr.f32.gmra.mxu0 %v1548
    %v2821 = vpop.f32.mrf.mxu0
    %v2822 = vadd.f32 %v1507, %v2821
    %v2823 = vpop.f32.mrf.mxu0
    %v2824 = vadd.f32 %v1507, %v2823
    %2825 = vmatprep.mubr.f32.mxu0 0.0
    %2826 = vmatmul.mubr.f32.gmra.mxu0 %v1550
    %v2827 = vpop.f32.mrf.mxu0
    %v2828 = vadd.f32 %v1512, %v2827
    %v2829 = vpop.f32.mrf.mxu0
    %v2830 = vadd.f32 %v1512, %v2829
    %2831 = vmatprep.mubr.f32.mxu0 0.0
    %2832 = vmatmul.mubr.f32.gmra.mxu0 %v1552
    %v2833 = vpop.f32.mrf.mxu0
    %v2834 = vadd.f32 %v1517, %v2833
    %v2835 = vpop.f32.mrf.mxu0
    %v2836 = vadd.f32 %v1517, %v2835
    %2837 = vmatprep.mubr.f32.mxu0 0.0
    %2838 = vmatmul.mubr.f32.gmra.mxu0 %v1554
    %v2839 = vpop.f32.mrf.mxu0
    %v2840 = vadd.f32 %v1522, %v2839
    %v2841 = vpop.f32.mrf.mxu0
    %v2842 = vadd.f32 %v1522, %v2841
    %2843 = vdwg.mxu0
    %v2844 = vmax.f32 %v1623, 0.0
    %v2845 = vmax.f32 %v1625, 0.0
    %v2846 = vmax.f32 %v1784, 0.0
    %v2847 = vmax.f32 %v1786, 0.0
    %v2848 = vmax.f32 %v1945, 0.0
    %v2849 = vmax.f32 %v1947, 0.0
    %v2850 = vmax.f32 %v2106, 0.0
    %v2851 = vmax.f32 %v2108, 0.0
    %v2852 = vmax.f32 %v2267, 0.0
    %v2853 = vmax.f32 %v2269, 0.0
    %v2854 = vmax.f32 %v2428, 0.0
    %v2855 = vmax.f32 %v2430, 0.0
    %v2856 = vmax.f32 %v2589, 0.0
    %v2857 = vmax.f32 %v2591, 0.0
    %v2858 = vmax.f32 %v2750, 0.0
    %v2859 = vmax.f32 %v2752, 0.0
    %v2860 = vmax.f32 %v1629, 0.0
    %v2861 = vmax.f32 %v1631, 0.0
    %v2862 = vmax.f32 %v1790, 0.0
    %v2863 = vmax.f32 %v1792, 0.0
    %v2864 = vmax.f32 %v1951, 0.0
    %v2865 = vmax.f32 %v1953, 0.0
    %v2866 = vmax.f32 %v2112, 0.0
    %v2867 = vmax.f32 %v2114, 0.0
    %v2868 = vmax.f32 %v2273, 0.0
    %v2869 = vmax.f32 %v2275, 0.0
    %v2870 = vmax.f32 %v2434, 0.0
    %v2871 = vmax.f32 %v2436, 0.0
    %v2872 = vmax.f32 %v2595, 0.0
    %v2873 = vmax.f32 %v2597, 0.0
    %v2874 = vmax.f32 %v2756, 0.0
    %v2875 = vmax.f32 %v2758, 0.0
    %v2876 = vmax.f32 %v1635, 0.0
    %v2877 = vmax.f32 %v1637, 0.0
    %v2878 = vmax.f32 %v1796, 0.0
    %v2879 = vmax.f32 %v1798, 0.0
    %v2880 = vmax.f32 %v1957, 0.0
    %v2881 = vmax.f32 %v1959, 0.0
    %v2882 = vmax.f32 %v2118, 0.0
    %v2883 = vmax.f32 %v2120, 0.0
    %v2884 = vmax.f32 %v2279, 0.0
    %v2885 = vmax.f32 %v2281, 0.0
    %v2886 = vmax.f32 %v2440, 0.0
    %v2887 = vmax.f32 %v2442, 0.0
    %v2888 = vmax.f32 %v2601, 0.0
    %v2889 = vmax.f32 %v2603, 0.0
    %v2890 = vmax.f32 %v2762, 0.0
    %v2891 = vmax.f32 %v2764, 0.0
    %v2892 = vmax.f32 %v1641, 0.0
    %v2893 = vmax.f32 %v1643, 0.0
    %v2894 = vmax.f32 %v1802, 0.0
    %v2895 = vmax.f32 %v1804, 0.0
    %v2896 = vmax.f32 %v1963, 0.0
    %v2897 = vmax.f32 %v1965, 0.0
    %v2898 = vmax.f32 %v2124, 0.0
    %v2899 = vmax.f32 %v2126, 0.0
    %v2900 = vmax.f32 %v2285, 0.0
    %v2901 = vmax.f32 %v2287, 0.0
    %v2902 = vmax.f32 %v2446, 0.0
    %v2903 = vmax.f32 %v2448, 0.0
    %v2904 = vmax.f32 %v2607, 0.0
    %v2905 = vmax.f32 %v2609, 0.0
    %v2906 = vmax.f32 %v2768, 0.0
    %v2907 = vmax.f32 %v2770, 0.0
    %v2908 = vmax.f32 %v1647, 0.0
    %v2909 = vmax.f32 %v1649, 0.0
    %v2910 = vmax.f32 %v1808, 0.0
    %v2911 = vmax.f32 %v1810, 0.0
    %v2912 = vmax.f32 %v1969, 0.0
    %v2913 = vmax.f32 %v1971, 0.0
    %v2914 = vmax.f32 %v2130, 0.0
    %v2915 = vmax.f32 %v2132, 0.0
    %v2916 = vmax.f32 %v2291, 0.0
    %v2917 = vmax.f32 %v2293, 0.0
    %v2918 = vmax.f32 %v2452, 0.0
    %v2919 = vmax.f32 %v2454, 0.0
    %v2920 = vmax.f32 %v2613, 0.0
    %v2921 = vmax.f32 %v2615, 0.0
    %v2922 = vmax.f32 %v2774, 0.0
    %v2923 = vmax.f32 %v2776, 0.0
    %v2924 = vmax.f32 %v1653, 0.0
    %v2925 = vmax.f32 %v1655, 0.0
    %v2926 = vmax.f32 %v1814, 0.0
    %v2927 = vmax.f32 %v1816, 0.0
    %v2928 = vmax.f32 %v1975, 0.0
    %v2929 = vmax.f32 %v1977, 0.0
    %v2930 = vmax.f32 %v2136, 0.0
    %v2931 = vmax.f32 %v2138, 0.0
    %v2932 = vmax.f32 %v2297, 0.0
    %v2933 = vmax.f32 %v2299, 0.0
    %v2934 = vmax.f32 %v2458, 0.0
    %v2935 = vmax.f32 %v2460, 0.0
    %v2936 = vmax.f32 %v2619, 0.0
    %v2937 = vmax.f32 %v2621, 0.0
    %v2938 = vmax.f32 %v2780, 0.0
    %v2939 = vmax.f32 %v2782, 0.0
    %v2940 = vmax.f32 %v1659, 0.0
    %v2941 = vmax.f32 %v1661, 0.0
    %v2942 = vmax.f32 %v1820, 0.0
    %v2943 = vmax.f32 %v1822, 0.0
    %v2944 = vmax.f32 %v1981, 0.0
    %v2945 = vmax.f32 %v1983, 0.0
    %v2946 = vmax.f32 %v2142, 0.0
    %v2947 = vmax.f32 %v2144, 0.0
    %v2948 = vmax.f32 %v2303, 0.0
    %v2949 = vmax.f32 %v2305, 0.0
    %v2950 = vmax.f32 %v2464, 0.0
    %v2951 = vmax.f32 %v2466, 0.0
    %v2952 = vmax.f32 %v2625, 0.0
    %v2953 = vmax.f32 %v2627, 0.0
    %v2954 = vmax.f32 %v2786, 0.0
    %v2955 = vmax.f32 %v2788, 0.0
    %v2956 = vmax.f32 %v1665, 0.0
    %v2957 = vmax.f32 %v1667, 0.0
    %v2958 = vmax.f32 %v1826, 0.0
    %v2959 = vmax.f32 %v1828, 0.0
    %v2960 = vmax.f32 %v1987, 0.0
    %v2961 = vmax.f32 %v1989, 0.0
    %v2962 = vmax.f32 %v2148, 0.0
    %v2963 = vmax.f32 %v2150, 0.0
    %v2964 = vmax.f32 %v2309, 0.0
    %v2965 = vmax.f32 %v2311, 0.0
    %v2966 = vmax.f32 %v2470, 0.0
    %v2967 = vmax.f32 %v2472, 0.0
    %v2968 = vmax.f32 %v2631, 0.0
    %v2969 = vmax.f32 %v2633, 0.0
    %v2970 = vmax.f32 %v2792, 0.0
    %v2971 = vmax.f32 %v2794, 0.0
    %v2972 = vmax.f32 %v1671, 0.0
    %v2973 = vmax.f32 %v1673, 0.0
    %v2974 = vmax.f32 %v1832, 0.0
    %v2975 = vmax.f32 %v1834, 0.0
    %v2976 = vmax.f32 %v1993, 0.0
    %v2977 = vmax.f32 %v1995, 0.0
    %v2978 = vmax.f32 %v2154, 0.0
    %v2979 = vmax.f32 %v2156, 0.0
    %v2980 = vmax.f32 %v2315, 0.0
    %v2981 = vmax.f32 %v2317, 0.0
    %v2982 = vmax.f32 %v2476, 0.0
    %v2983 = vmax.f32 %v2478, 0.0
    %v2984 = vmax.f32 %v2637, 0.0
    %v2985 = vmax.f32 %v2639, 0.0
    %v2986 = vmax.f32 %v2798, 0.0
    %v2987 = vmax.f32 %v2800, 0.0
    %v2988 = vmax.f32 %v1677, 0.0
    %v2989 = vmax.f32 %v1679, 0.0
    %v2990 = vmax.f32 %v1838, 0.0
    %v2991 = vmax.f32 %v1840, 0.0
    %v2992 = vmax.f32 %v1999, 0.0
    %v2993 = vmax.f32 %v2001, 0.0
    %v2994 = vmax.f32 %v2160, 0.0
    %v2995 = vmax.f32 %v2162, 0.0
    %v2996 = vmax.f32 %v2321, 0.0
    %v2997 = vmax.f32 %v2323, 0.0
    %v2998 = vmax.f32 %v2482, 0.0
    %v2999 = vmax.f32 %v2484, 0.0
    %v3000 = vmax.f32 %v2643, 0.0
    %v3001 = vmax.f32 %v2645, 0.0
    %v3002 = vmax.f32 %v2804, 0.0
    %v3003 = vmax.f32 %v2806, 0.0
    %v3004 = vmax.f32 %v1683, 0.0
    %v3005 = vmax.f32 %v1685, 0.0
    %v3006 = vmax.f32 %v1844, 0.0
    %v3007 = vmax.f32 %v1846, 0.0
    %v3008 = vmax.f32 %v2005, 0.0
    %v3009 = vmax.f32 %v2007, 0.0
    %v3010 = vmax.f32 %v2166, 0.0
    %v3011 = vmax.f32 %v2168, 0.0
    %v3012 = vmax.f32 %v2327, 0.0
    %v3013 = vmax.f32 %v2329, 0.0
    %v3014 = vmax.f32 %v2488, 0.0
    %v3015 = vmax.f32 %v2490, 0.0
    %v3016 = vmax.f32 %v2649, 0.0
    %v3017 = vmax.f32 %v2651, 0.0
    %v3018 = vmax.f32 %v2810, 0.0
    %v3019 = vmax.f32 %v2812, 0.0
    %v3020 = vmax.f32 %v1689, 0.0
    %v3021 = vmax.f32 %v1691, 0.0
    %v3022 = vmax.f32 %v1850, 0.0
    %v3023 = vmax.f32 %v1852, 0.0
    %v3024 = vmax.f32 %v2011, 0.0
    %v3025 = vmax.f32 %v2013, 0.0
    %v3026 = vmax.f32 %v2172, 0.0
    %v3027 = vmax.f32 %v2174, 0.0
    %v3028 = vmax.f32 %v2333, 0.0
    %v3029 = vmax.f32 %v2335, 0.0
    %v3030 = vmax.f32 %v2494, 0.0
    %v3031 = vmax.f32 %v2496, 0.0
    %v3032 = vmax.f32 %v2655, 0.0
    %v3033 = vmax.f32 %v2657, 0.0
    %v3034 = vmax.f32 %v2816, 0.0
    %v3035 = vmax.f32 %v2818, 0.0
    %v3036 = vmax.f32 %v1695, 0.0
    %v3037 = vmax.f32 %v1697, 0.0
    %v3038 = vmax.f32 %v1856, 0.0
    %v3039 = vmax.f32 %v1858, 0.0
    %v3040 = vmax.f32 %v2017, 0.0
    %v3041 = vmax.f32 %v2019, 0.0
    %v3042 = vmax.f32 %v2178, 0.0
    %v3043 = vmax.f32 %v2180, 0.0
    %v3044 = vmax.f32 %v2339, 0.0
    %v3045 = vmax.f32 %v2341, 0.0
    %v3046 = vmax.f32 %v2500, 0.0
    %v3047 = vmax.f32 %v2502, 0.0
    %v3048 = vmax.f32 %v2661, 0.0
    %v3049 = vmax.f32 %v2663, 0.0
    %v3050 = vmax.f32 %v2822, 0.0
    %v3051 = vmax.f32 %v2824, 0.0
    %v3052 = vmax.f32 %v1701, 0.0
    %v3053 = vmax.f32 %v1703, 0.0
    %v3054 = vmax.f32 %v1862, 0.0
    %v3055 = vmax.f32 %v1864, 0.0
    %v3056 = vmax.f32 %v2023, 0.0
    %v3057 = vmax.f32 %v2025, 0.0
    %v3058 = vmax.f32 %v2184, 0.0
    %v3059 = vmax.f32 %v2186, 0.0
    %v3060 = vmax.f32 %v2345, 0.0
    %v3061 = vmax.f32 %v2347, 0.0
    %v3062 = vmax.f32 %v2506, 0.0
    %v3063 = vmax.f32 %v2508, 0.0
    %v3064 = vmax.f32 %v2667, 0.0
    %v3065 = vmax.f32 %v2669, 0.0
    %v3066 = vmax.f32 %v2828, 0.0
    %v3067 = vmax.f32 %v2830, 0.0
    %v3068 = vmax.f32 %v1707, 0.0
    %v3069 = vmax.f32 %v1709, 0.0
    %v3070 = vmax.f32 %v1868, 0.0
    %v3071 = vmax.f32 %v1870, 0.0
    %v3072 = vmax.f32 %v2029, 0.0
    %v3073 = vmax.f32 %v2031, 0.0
    %v3074 = vmax.f32 %v2190, 0.0
    %v3075 = vmax.f32 %v2192, 0.0
    %v3076 = vmax.f32 %v2351, 0.0
    %v3077 = vmax.f32 %v2353, 0.0
    %v3078 = vmax.f32 %v2512, 0.0
    %v3079 = vmax.f32 %v2514, 0.0
    %v3080 = vmax.f32 %v2673, 0.0
    %v3081 = vmax.f32 %v2675, 0.0
    %v3082 = vmax.f32 %v2834, 0.0
    %v3083 = vmax.f32 %v2836, 0.0
    %v3084 = vmax.f32 %v1713, 0.0
    %v3085 = vmax.f32 %v1715, 0.0
    %v3086 = vmax.f32 %v1874, 0.0
    %v3087 = vmax.f32 %v1876, 0.0
    %v3088 = vmax.f32 %v2035, 0.0
    %v3089 = vmax.f32 %v2037, 0.0
    %v3090 = vmax.f32 %v2196, 0.0
    %v3091 = vmax.f32 %v2198, 0.0
    %v3092 = vmax.f32 %v2357, 0.0
    %v3093 = vmax.f32 %v2359, 0.0
    %v3094 = vmax.f32 %v2518, 0.0
    %v3095 = vmax.f32 %v2520, 0.0
    %v3096 = vmax.f32 %v2679, 0.0
    %v3097 = vmax.f32 %v2681, 0.0
    %v3098 = vmax.f32 %v2840, 0.0
    %v3099 = vmax.f32 %v2842, 0.0
    %v3100 = vld [vmem:[%s5] sm:$0x1]
    %v3101 = vld [vmem:[%s5 + $0x1] sm:$0x1]
    %3103 = vset.pattern.permute.xlu0 0
    %3104 = vperm.xlu0 %3103, %v3101
    %v3105 = vpop.permute.xlu0 %3104
    %v3107 = vlaneseq
    %v3108 = vshrl.u32 %v3107, 7
    %v3109 = vsub.s32 0, %v3108
    %v3110 = vrot.slane %v3105, %v3109
    %3111 = vmatprep.subr.mxu0 %v3085
    %3112 = vmatpush1.msra.mxu0 %v3084
    %3113 = vmatprep.subr.mxu0 %v3069
    %3114 = vmatpush1.msra.mxu0 %v3068
    %3115 = vmatprep.subr.mxu0 %v3053
    %3116 = vmatpush1.msra.mxu0 %v3052
    %3117 = vmatprep.subr.mxu0 %v3037
    %3118 = vmatpush1.msra.mxu0 %v3036
    %3119 = vmatprep.subr.mxu0 %v3021
    %3120 = vmatpush1.msra.mxu0 %v3020
    %3121 = vmatprep.subr.mxu0 %v3005
    %3122 = vmatpush1.msra.mxu0 %v3004
    %3123 = vmatprep.subr.mxu0 %v2989
    %3124 = vmatpush1.msra.mxu0 %v2988
    %3125 = vmatprep.subr.mxu0 %v2973
    %3126 = vmatpush1.msra.mxu0 %v2972
    %3127 = vmatprep.subr.mxu0 %v2957
    %3128 = vmatpush1.msra.mxu0 %v2956
    %3129 = vmatprep.subr.mxu0 %v2941
    %3130 = vmatpush1.msra.mxu0 %v2940
    %3131 = vmatprep.subr.mxu0 %v2925
    %3132 = vmatpush1.msra.mxu0 %v2924
    %3133 = vmatprep.subr.mxu0 %v2909
    %3134 = vmatpush1.msra.mxu0 %v2908
    %3135 = vmatprep.subr.mxu0 %v2893
    %3136 = vmatpush1.msra.mxu0 %v2892
    %3137 = vmatprep.subr.mxu0 %v2877
    %3138 = vmatpush1.msra.mxu0 %v2876
    %3139 = vmatprep.subr.mxu0 %v2861
    %3140 = vmatpush1.msra.mxu0 %v2860
    %3141 = vmatprep.subr.mxu0 %v2845
    %3142 = vmatpush1.msra.mxu0 %v2844
    %3143 = vmatprep.subr.mxu0 0.0
    %3144 = vmatpush2.msra.mxu0 0.0
    %3145 = vmatprep.subr.mxu0 0.0
    %3146 = vmatpush2.msra.mxu0 0.0
    %3147 = vmatprep.subr.mxu0 0.0
    %3148 = vmatpush2.msra.mxu0 0.0
    %3149 = vmatprep.subr.mxu0 0.0
    %3150 = vmatpush2.msra.mxu0 0.0
    %3151 = vmatprep.subr.mxu0 0.0
    %3152 = vmatpush2.msra.mxu0 0.0
    %3153 = vmatprep.subr.mxu0 0.0
    %3154 = vmatpush2.msra.mxu0 0.0
    %3155 = vmatprep.subr.mxu0 0.0
    %3156 = vmatpush2.msra.mxu0 0.0
    %3157 = vmatprep.subr.mxu0 0.0
    %3158 = vmatpush2.msra.mxu0 0.0
    %3159 = vmatprep.subr.mxu0 0.0
    %3160 = vmatpush2.msra.mxu0 0.0
    %3161 = vmatprep.subr.mxu0 0.0
    %3162 = vmatpush2.msra.mxu0 0.0
    %3163 = vmatprep.subr.mxu0 0.0
    %3164 = vmatpush2.msra.mxu0 0.0
    %3165 = vmatprep.subr.mxu0 0.0
    %3166 = vmatpush2.msra.mxu0 0.0
    %3167 = vmatprep.subr.mxu0 0.0
    %3168 = vmatpush2.msra.mxu0 0.0
    %3169 = vmatprep.subr.mxu0 0.0
    %3170 = vmatpush2.msra.mxu0 0.0
    %3171 = vmatprep.subr.mxu0 0.0
    %3172 = vmatpush2.msra.mxu0 0.0
    %3173 = vmatprep.subr.mxu0 0.0
    %3174 = vmatpush2.msra.mxu0 0.0
    %3175 = vmatprep.mubr.f32.mxu0 0.0
    %3176 = vmatmul.mubr.f32.gmra.mxu0 %v3100
    %v3177 = vpop.f32.mrf.mxu0
    %v3178 = vadd.f32 %v3110, %v3177
    %v3179 = vpop.f32.mrf.mxu0
    %v3180 = vadd.f32 %v3110, %v3179
    %3181 = vdwg.mxu0
    %3182 = vmatprep.subr.mxu0 %v3087
    %3183 = vmatpush1.msra.mxu0 %v3086
    %3184 = vmatprep.subr.mxu0 %v3071
    %3185 = vmatpush1.msra.mxu0 %v3070
    %3186 = vmatprep.subr.mxu0 %v3055
    %3187 = vmatpush1.msra.mxu0 %v3054
    %3188 = vmatprep.subr.mxu0 %v3039
    %3189 = vmatpush1.msra.mxu0 %v3038
    %3190 = vmatprep.subr.mxu0 %v3023
    %3191 = vmatpush1.msra.mxu0 %v3022
    %3192 = vmatprep.subr.mxu0 %v3007
    %3193 = vmatpush1.msra.mxu0 %v3006
    %3194 = vmatprep.subr.mxu0 %v2991
    %3195 = vmatpush1.msra.mxu0 %v2990
    %3196 = vmatprep.subr.mxu0 %v2975
    %3197 = vmatpush1.msra.mxu0 %v2974
    %3198 = vmatprep.subr.mxu0 %v2959
    %3199 = vmatpush1.msra.mxu0 %v2958
    %3200 = vmatprep.subr.mxu0 %v2943
    %3201 = vmatpush1.msra.mxu0 %v2942
    %3202 = vmatprep.subr.mxu0 %v2927
    %3203 = vmatpush1.msra.mxu0 %v2926
    %3204 = vmatprep.subr.mxu0 %v2911
    %3205 = vmatpush1.msra.mxu0 %v2910
    %3206 = vmatprep.subr.mxu0 %v2895
    %3207 = vmatpush1.msra.mxu0 %v2894
    %3208 = vmatprep.subr.mxu0 %v2879
    %3209 = vmatpush1.msra.mxu0 %v2878
    %3210 = vmatprep.subr.mxu0 %v2863
    %3211 = vmatpush1.msra.mxu0 %v2862
    %3212 = vmatprep.subr.mxu0 %v2847
    %3213 = vmatpush1.msra.mxu0 %v2846
    %3214 = vmatprep.subr.mxu0 0.0
    %3215 = vmatpush2.msra.mxu0 0.0
    %3216 = vmatprep.subr.mxu0 0.0
    %3217 = vmatpush2.msra.mxu0 0.0
    %3218 = vmatprep.subr.mxu0 0.0
    %3219 = vmatpush2.msra.mxu0 0.0
    %3220 = vmatprep.subr.mxu0 0.0
    %3221 = vmatpush2.msra.mxu0 0.0
    %3222 = vmatprep.subr.mxu0 0.0
    %3223 = vmatpush2.msra.mxu0 0.0
    %3224 = vmatprep.subr.mxu0 0.0
    %3225 = vmatpush2.msra.mxu0 0.0
    %3226 = vmatprep.subr.mxu0 0.0
    %3227 = vmatpush2.msra.mxu0 0.0
    %3228 = vmatprep.subr.mxu0 0.0
    %3229 = vmatpush2.msra.mxu0 0.0
    %3230 = vmatprep.subr.mxu0 0.0
    %3231 = vmatpush2.msra.mxu0 0.0
    %3232 = vmatprep.subr.mxu0 0.0
    %3233 = vmatpush2.msra.mxu0 0.0
    %3234 = vmatprep.subr.mxu0 0.0
    %3235 = vmatpush2.msra.mxu0 0.0
    %3236 = vmatprep.subr.mxu0 0.0
    %3237 = vmatpush2.msra.mxu0 0.0
    %3238 = vmatprep.subr.mxu0 0.0
    %3239 = vmatpush2.msra.mxu0 0.0
    %3240 = vmatprep.subr.mxu0 0.0
    %3241 = vmatpush2.msra.mxu0 0.0
    %3242 = vmatprep.subr.mxu0 0.0
    %3243 = vmatpush2.msra.mxu0 0.0
    %3244 = vmatprep.subr.mxu0 0.0
    %3245 = vmatpush2.msra.mxu0 0.0
    %3246 = vmatprep.mubr.f32.mxu0 0.0
    %3247 = vmatmul.mubr.f32.gmra.mxu0 %v3100
    %v3248 = vpop.f32.mrf.mxu0
    %v3249 = vadd.f32 %v3110, %v3248
    %v3250 = vpop.f32.mrf.mxu0
    %v3251 = vadd.f32 %v3110, %v3250
    %3252 = vdwg.mxu0
    %3253 = vmatprep.subr.mxu0 %v3089
    %3254 = vmatpush1.msra.mxu0 %v3088
    %3255 = vmatprep.subr.mxu0 %v3073
    %3256 = vmatpush1.msra.mxu0 %v3072
    %3257 = vmatprep.subr.mxu0 %v3057
    %3258 = vmatpush1.msra.mxu0 %v3056
    %3259 = vmatprep.subr.mxu0 %v3041
    %3260 = vmatpush1.msra.mxu0 %v3040
    %3261 = vmatprep.subr.mxu0 %v3025
    %3262 = vmatpush1.msra.mxu0 %v3024
    %3263 = vmatprep.subr.mxu0 %v3009
    %3264 = vmatpush1.msra.mxu0 %v3008
    %3265 = vmatprep.subr.mxu0 %v2993
    %3266 = vmatpush1.msra.mxu0 %v2992
    %3267 = vmatprep.subr.mxu0 %v2977
    %3268 = vmatpush1.msra.mxu0 %v2976
    %3269 = vmatprep.subr.mxu0 %v2961
    %3270 = vmatpush1.msra.mxu0 %v2960
    %3271 = vmatprep.subr.mxu0 %v2945
    %3272 = vmatpush1.msra.mxu0 %v2944
    %3273 = vmatprep.subr.mxu0 %v2929
    %3274 = vmatpush1.msra.mxu0 %v2928
    %3275 = vmatprep.subr.mxu0 %v2913
    %3276 = vmatpush1.msra.mxu0 %v2912
    %3277 = vmatprep.subr.mxu0 %v2897
    %3278 = vmatpush1.msra.mxu0 %v2896
    %3279 = vmatprep.subr.mxu0 %v2881
    %3280 = vmatpush1.msra.mxu0 %v2880
    %3281 = vmatprep.subr.mxu0 %v2865
    %3282 = vmatpush1.msra.mxu0 %v2864
    %3283 = vmatprep.subr.mxu0 %v2849
    %3284 = vmatpush1.msra.mxu0 %v2848
    %3285 = vmatprep.subr.mxu0 0.0
    %3286 = vmatpush2.msra.mxu0 0.0
    %3287 = vmatprep.subr.mxu0 0.0
    %3288 = vmatpush2.msra.mxu0 0.0
    %3289 = vmatprep.subr.mxu0 0.0
    %3290 = vmatpush2.msra.mxu0 0.0
    %3291 = vmatprep.subr.mxu0 0.0
    %3292 = vmatpush2.msra.mxu0 0.0
    %3293 = vmatprep.subr.mxu0 0.0
    %3294 = vmatpush2.msra.mxu0 0.0
    %3295 = vmatprep.subr.mxu0 0.0
    %3296 = vmatpush2.msra.mxu0 0.0
    %3297 = vmatprep.subr.mxu0 0.0
    %3298 = vmatpush2.msra.mxu0 0.0
    %3299 = vmatprep.subr.mxu0 0.0
    %3300 = vmatpush2.msra.mxu0 0.0
    %3301 = vmatprep.subr.mxu0 0.0
    %3302 = vmatpush2.msra.mxu0 0.0
    %3303 = vmatprep.subr.mxu0 0.0
    %3304 = vmatpush2.msra.mxu0 0.0
    %3305 = vmatprep.subr.mxu0 0.0
    %3306 = vmatpush2.msra.mxu0 0.0
    %3307 = vmatprep.subr.mxu0 0.0
    %3308 = vmatpush2.msra.mxu0 0.0
    %3309 = vmatprep.subr.mxu0 0.0
    %3310 = vmatpush2.msra.mxu0 0.0
    %3311 = vmatprep.subr.mxu0 0.0
    %3312 = vmatpush2.msra.mxu0 0.0
    %3313 = vmatprep.subr.mxu0 0.0
    %3314 = vmatpush2.msra.mxu0 0.0
    %3315 = vmatprep.subr.mxu0 0.0
    %3316 = vmatpush2.msra.mxu0 0.0
    %3317 = vmatprep.mubr.f32.mxu0 0.0
    %3318 = vmatmul.mubr.f32.gmra.mxu0 %v3100
    %v3319 = vpop.f32.mrf.mxu0
    %v3320 = vadd.f32 %v3110, %v3319
    %v3321 = vpop.f32.mrf.mxu0
    %v3322 = vadd.f32 %v3110, %v3321
    %3323 = vdwg.mxu0
    %3324 = vmatprep.subr.mxu0 %v3091
    %3325 = vmatpush1.msra.mxu0 %v3090
    %3326 = vmatprep.subr.mxu0 %v3075
    %3327 = vmatpush1.msra.mxu0 %v3074
    %3328 = vmatprep.subr.mxu0 %v3059
    %3329 = vmatpush1.msra.mxu0 %v3058
    %3330 = vmatprep.subr.mxu0 %v3043
    %3331 = vmatpush1.msra.mxu0 %v3042
    %3332 = vmatprep.subr.mxu0 %v3027
    %3333 = vmatpush1.msra.mxu0 %v3026
    %3334 = vmatprep.subr.mxu0 %v3011
    %3335 = vmatpush1.msra.mxu0 %v3010
    %3336 = vmatprep.subr.mxu0 %v2995
    %3337 = vmatpush1.msra.mxu0 %v2994
    %3338 = vmatprep.subr.mxu0 %v2979
    %3339 = vmatpush1.msra.mxu0 %v2978
    %3340 = vmatprep.subr.mxu0 %v2963
    %3341 = vmatpush1.msra.mxu0 %v2962
    %3342 = vmatprep.subr.mxu0 %v2947
    %3343 = vmatpush1.msra.mxu0 %v2946
    %3344 = vmatprep.subr.mxu0 %v2931
    %3345 = vmatpush1.msra.mxu0 %v2930
    %3346 = vmatprep.subr.mxu0 %v2915
    %3347 = vmatpush1.msra.mxu0 %v2914
    %3348 = vmatprep.subr.mxu0 %v2899
    %3349 = vmatpush1.msra.mxu0 %v2898
    %3350 = vmatprep.subr.mxu0 %v2883
    %3351 = vmatpush1.msra.mxu0 %v2882
    %3352 = vmatprep.subr.mxu0 %v2867
    %3353 = vmatpush1.msra.mxu0 %v2866
    %3354 = vmatprep.subr.mxu0 %v2851
    %3355 = vmatpush1.msra.mxu0 %v2850
    %3356 = vmatprep.subr.mxu0 0.0
    %3357 = vmatpush2.msra.mxu0 0.0
    %3358 = vmatprep.subr.mxu0 0.0
    %3359 = vmatpush2.msra.mxu0 0.0
    %3360 = vmatprep.subr.mxu0 0.0
    %3361 = vmatpush2.msra.mxu0 0.0
    %3362 = vmatprep.subr.mxu0 0.0
    %3363 = vmatpush2.msra.mxu0 0.0
    %3364 = vmatprep.subr.mxu0 0.0
    %3365 = vmatpush2.msra.mxu0 0.0
    %3366 = vmatprep.subr.mxu0 0.0
    %3367 = vmatpush2.msra.mxu0 0.0
    %3368 = vmatprep.subr.mxu0 0.0
    %3369 = vmatpush2.msra.mxu0 0.0
    %3370 = vmatprep.subr.mxu0 0.0
    %3371 = vmatpush2.msra.mxu0 0.0
    %3372 = vmatprep.subr.mxu0 0.0
    %3373 = vmatpush2.msra.mxu0 0.0
    %3374 = vmatprep.subr.mxu0 0.0
    %3375 = vmatpush2.msra.mxu0 0.0
    %3376 = vmatprep.subr.mxu0 0.0
    %3377 = vmatpush2.msra.mxu0 0.0
    %3378 = vmatprep.subr.mxu0 0.0
    %3379 = vmatpush2.msra.mxu0 0.0
    %3380 = vmatprep.subr.mxu0 0.0
    %3381 = vmatpush2.msra.mxu0 0.0
    %3382 = vmatprep.subr.mxu0 0.0
    %3383 = vmatpush2.msra.mxu0 0.0
    %3384 = vmatprep.subr.mxu0 0.0
    %3385 = vmatpush2.msra.mxu0 0.0
    %3386 = vmatprep.subr.mxu0 0.0
    %3387 = vmatpush2.msra.mxu0 0.0
    %3388 = vmatprep.mubr.f32.mxu0 0.0
    %3389 = vmatmul.mubr.f32.gmra.mxu0 %v3100
    %v3390 = vpop.f32.mrf.mxu0
    %v3391 = vadd.f32 %v3110, %v3390
    %v3392 = vpop.f32.mrf.mxu0
    %v3393 = vadd.f32 %v3110, %v3392
    %3394 = vdwg.mxu0
    %3395 = vmatprep.subr.mxu0 %v3093
    %3396 = vmatpush1.msra.mxu0 %v3092
    %3397 = vmatprep.subr.mxu0 %v3077
    %3398 = vmatpush1.msra.mxu0 %v3076
    %3399 = vmatprep.subr.mxu0 %v3061
    %3400 = vmatpush1.msra.mxu0 %v3060
    %3401 = vmatprep.subr.mxu0 %v3045
    %3402 = vmatpush1.msra.mxu0 %v3044
    %3403 = vmatprep.subr.mxu0 %v3029
    %3404 = vmatpush1.msra.mxu0 %v3028
    %3405 = vmatprep.subr.mxu0 %v3013
    %3406 = vmatpush1.msra.mxu0 %v3012
    %3407 = vmatprep.subr.mxu0 %v2997
    %3408 = vmatpush1.msra.mxu0 %v2996
    %3409 = vmatprep.subr.mxu0 %v2981
    %3410 = vmatpush1.msra.mxu0 %v2980
    %3411 = vmatprep.subr.mxu0 %v2965
    %3412 = vmatpush1.msra.mxu0 %v2964
    %3413 = vmatprep.subr.mxu0 %v2949
    %3414 = vmatpush1.msra.mxu0 %v2948
    %3415 = vmatprep.subr.mxu0 %v2933
    %3416 = vmatpush1.msra.mxu0 %v2932
    %3417 = vmatprep.subr.mxu0 %v2917
    %3418 = vmatpush1.msra.mxu0 %v2916
    %3419 = vmatprep.subr.mxu0 %v2901
    %3420 = vmatpush1.msra.mxu0 %v2900
    %3421 = vmatprep.subr.mxu0 %v2885
    %3422 = vmatpush1.msra.mxu0 %v2884
    %3423 = vmatprep.subr.mxu0 %v2869
    %3424 = vmatpush1.msra.mxu0 %v2868
    %3425 = vmatprep.subr.mxu0 %v2853
    %3426 = vmatpush1.msra.mxu0 %v2852
    %3427 = vmatprep.subr.mxu0 0.0
    %3428 = vmatpush2.msra.mxu0 0.0
    %3429 = vmatprep.subr.mxu0 0.0
    %3430 = vmatpush2.msra.mxu0 0.0
    %3431 = vmatprep.subr.mxu0 0.0
    %3432 = vmatpush2.msra.mxu0 0.0
    %3433 = vmatprep.subr.mxu0 0.0
    %3434 = vmatpush2.msra.mxu0 0.0
    %3435 = vmatprep.subr.mxu0 0.0
    %3436 = vmatpush2.msra.mxu0 0.0
    %3437 = vmatprep.subr.mxu0 0.0
    %3438 = vmatpush2.msra.mxu0 0.0
    %3439 = vmatprep.subr.mxu0 0.0
    %3440 = vmatpush2.msra.mxu0 0.0
    %3441 = vmatprep.subr.mxu0 0.0
    %3442 = vmatpush2.msra.mxu0 0.0
    %3443 = vmatprep.subr.mxu0 0.0
    %3444 = vmatpush2.msra.mxu0 0.0
    %3445 = vmatprep.subr.mxu0 0.0
    %3446 = vmatpush2.msra.mxu0 0.0
    %3447 = vmatprep.subr.mxu0 0.0
    %3448 = vmatpush2.msra.mxu0 0.0
    %3449 = vmatprep.subr.mxu0 0.0
    %3450 = vmatpush2.msra.mxu0 0.0
    %3451 = vmatprep.subr.mxu0 0.0
    %3452 = vmatpush2.msra.mxu0 0.0
    %3453 = vmatprep.subr.mxu0 0.0
    %3454 = vmatpush2.msra.mxu0 0.0
    %3455 = vmatprep.subr.mxu0 0.0
    %3456 = vmatpush2.msra.mxu0 0.0
    %3457 = vmatprep.subr.mxu0 0.0
    %3458 = vmatpush2.msra.mxu0 0.0
    %3459 = vmatprep.mubr.f32.mxu0 0.0
    %3460 = vmatmul.mubr.f32.gmra.mxu0 %v3100
    %v3461 = vpop.f32.mrf.mxu0
    %v3462 = vadd.f32 %v3110, %v3461
    %v3463 = vpop.f32.mrf.mxu0
    %v3464 = vadd.f32 %v3110, %v3463
    %3465 = vdwg.mxu0
    %3466 = vmatprep.subr.mxu0 %v3095
    %3467 = vmatpush1.msra.mxu0 %v3094
    %3468 = vmatprep.subr.mxu0 %v3079
    %3469 = vmatpush1.msra.mxu0 %v3078
    %3470 = vmatprep.subr.mxu0 %v3063
    %3471 = vmatpush1.msra.mxu0 %v3062
    %3472 = vmatprep.subr.mxu0 %v3047
    %3473 = vmatpush1.msra.mxu0 %v3046
    %3474 = vmatprep.subr.mxu0 %v3031
    %3475 = vmatpush1.msra.mxu0 %v3030
    %3476 = vmatprep.subr.mxu0 %v3015
    %3477 = vmatpush1.msra.mxu0 %v3014
    %3478 = vmatprep.subr.mxu0 %v2999
    %3479 = vmatpush1.msra.mxu0 %v2998
    %3480 = vmatprep.subr.mxu0 %v2983
    %3481 = vmatpush1.msra.mxu0 %v2982
    %3482 = vmatprep.subr.mxu0 %v2967
    %3483 = vmatpush1.msra.mxu0 %v2966
    %3484 = vmatprep.subr.mxu0 %v2951
    %3485 = vmatpush1.msra.mxu0 %v2950
    %3486 = vmatprep.subr.mxu0 %v2935
    %3487 = vmatpush1.msra.mxu0 %v2934
    %3488 = vmatprep.subr.mxu0 %v2919
    %3489 = vmatpush1.msra.mxu0 %v2918
    %3490 = vmatprep.subr.mxu0 %v2903
    %3491 = vmatpush1.msra.mxu0 %v2902
    %3492 = vmatprep.subr.mxu0 %v2887
    %3493 = vmatpush1.msra.mxu0 %v2886
    %3494 = vmatprep.subr.mxu0 %v2871
    %3495 = vmatpush1.msra.mxu0 %v2870
    %3496 = vmatprep.subr.mxu0 %v2855
    %3497 = vmatpush1.msra.mxu0 %v2854
    %3498 = vmatprep.subr.mxu0 0.0
    %3499 = vmatpush2.msra.mxu0 0.0
    %3500 = vmatprep.subr.mxu0 0.0
    %3501 = vmatpush2.msra.mxu0 0.0
    %3502 = vmatprep.subr.mxu0 0.0
    %3503 = vmatpush2.msra.mxu0 0.0
    %3504 = vmatprep.subr.mxu0 0.0
    %3505 = vmatpush2.msra.mxu0 0.0
    %3506 = vmatprep.subr.mxu0 0.0
    %3507 = vmatpush2.msra.mxu0 0.0
    %3508 = vmatprep.subr.mxu0 0.0
    %3509 = vmatpush2.msra.mxu0 0.0
    %3510 = vmatprep.subr.mxu0 0.0
    %3511 = vmatpush2.msra.mxu0 0.0
    %3512 = vmatprep.subr.mxu0 0.0
    %3513 = vmatpush2.msra.mxu0 0.0
    %3514 = vmatprep.subr.mxu0 0.0
    %3515 = vmatpush2.msra.mxu0 0.0
    %3516 = vmatprep.subr.mxu0 0.0
    %3517 = vmatpush2.msra.mxu0 0.0
    %3518 = vmatprep.subr.mxu0 0.0
    %3519 = vmatpush2.msra.mxu0 0.0
    %3520 = vmatprep.subr.mxu0 0.0
    %3521 = vmatpush2.msra.mxu0 0.0
    %3522 = vmatprep.subr.mxu0 0.0
    %3523 = vmatpush2.msra.mxu0 0.0
    %3524 = vmatprep.subr.mxu0 0.0
    %3525 = vmatpush2.msra.mxu0 0.0
    %3526 = vmatprep.subr.mxu0 0.0
    %3527 = vmatpush2.msra.mxu0 0.0
    %3528 = vmatprep.subr.mxu0 0.0
    %3529 = vmatpush2.msra.mxu0 0.0
    %3530 = vmatprep.mubr.f32.mxu0 0.0
    %3531 = vmatmul.mubr.f32.gmra.mxu0 %v3100
    %v3532 = vpop.f32.mrf.mxu0
    %v3533 = vadd.f32 %v3110, %v3532
    %v3534 = vpop.f32.mrf.mxu0
    %v3535 = vadd.f32 %v3110, %v3534
    %3536 = vdwg.mxu0
    %3537 = vmatprep.subr.mxu0 %v3097
    %3538 = vmatpush1.msra.mxu0 %v3096
    %3539 = vmatprep.subr.mxu0 %v3081
    %3540 = vmatpush1.msra.mxu0 %v3080
    %3541 = vmatprep.subr.mxu0 %v3065
    %3542 = vmatpush1.msra.mxu0 %v3064
    %3543 = vmatprep.subr.mxu0 %v3049
    %3544 = vmatpush1.msra.mxu0 %v3048
    %3545 = vmatprep.subr.mxu0 %v3033
    %3546 = vmatpush1.msra.mxu0 %v3032
    %3547 = vmatprep.subr.mxu0 %v3017
    %3548 = vmatpush1.msra.mxu0 %v3016
    %3549 = vmatprep.subr.mxu0 %v3001
    %3550 = vmatpush1.msra.mxu0 %v3000
    %3551 = vmatprep.subr.mxu0 %v2985
    %3552 = vmatpush1.msra.mxu0 %v2984
    %3553 = vmatprep.subr.mxu0 %v2969
    %3554 = vmatpush1.msra.mxu0 %v2968
    %3555 = vmatprep.subr.mxu0 %v2953
    %3556 = vmatpush1.msra.mxu0 %v2952
    %3557 = vmatprep.subr.mxu0 %v2937
    %3558 = vmatpush1.msra.mxu0 %v2936
    %3559 = vmatprep.subr.mxu0 %v2921
    %3560 = vmatpush1.msra.mxu0 %v2920
    %3561 = vmatprep.subr.mxu0 %v2905
    %3562 = vmatpush1.msra.mxu0 %v2904
    %3563 = vmatprep.subr.mxu0 %v2889
    %3564 = vmatpush1.msra.mxu0 %v2888
    %3565 = vmatprep.subr.mxu0 %v2873
    %3566 = vmatpush1.msra.mxu0 %v2872
    %3567 = vmatprep.subr.mxu0 %v2857
    %3568 = vmatpush1.msra.mxu0 %v2856
    %3569 = vmatprep.subr.mxu0 0.0
    %3570 = vmatpush2.msra.mxu0 0.0
    %3571 = vmatprep.subr.mxu0 0.0
    %3572 = vmatpush2.msra.mxu0 0.0
    %3573 = vmatprep.subr.mxu0 0.0
    %3574 = vmatpush2.msra.mxu0 0.0
    %3575 = vmatprep.subr.mxu0 0.0
    %3576 = vmatpush2.msra.mxu0 0.0
    %3577 = vmatprep.subr.mxu0 0.0
    %3578 = vmatpush2.msra.mxu0 0.0
    %3579 = vmatprep.subr.mxu0 0.0
    %3580 = vmatpush2.msra.mxu0 0.0
    %3581 = vmatprep.subr.mxu0 0.0
    %3582 = vmatpush2.msra.mxu0 0.0
    %3583 = vmatprep.subr.mxu0 0.0
    %3584 = vmatpush2.msra.mxu0 0.0
    %3585 = vmatprep.subr.mxu0 0.0
    %3586 = vmatpush2.msra.mxu0 0.0
    %3587 = vmatprep.subr.mxu0 0.0
    %3588 = vmatpush2.msra.mxu0 0.0
    %3589 = vmatprep.subr.mxu0 0.0
    %3590 = vmatpush2.msra.mxu0 0.0
    %3591 = vmatprep.subr.mxu0 0.0
    %3592 = vmatpush2.msra.mxu0 0.0
    %3593 = vmatprep.subr.mxu0 0.0
    %3594 = vmatpush2.msra.mxu0 0.0
    %3595 = vmatprep.subr.mxu0 0.0
    %3596 = vmatpush2.msra.mxu0 0.0
    %3597 = vmatprep.subr.mxu0 0.0
    %3598 = vmatpush2.msra.mxu0 0.0
    %3599 = vmatprep.subr.mxu0 0.0
    %3600 = vmatpush2.msra.mxu0 0.0
    %3601 = vmatprep.mubr.f32.mxu0 0.0
    %3602 = vmatmul.mubr.f32.gmra.mxu0 %v3100
    %v3603 = vpop.f32.mrf.mxu0
    %v3604 = vadd.f32 %v3110, %v3603
    %v3605 = vpop.f32.mrf.mxu0
    %v3606 = vadd.f32 %v3110, %v3605
    %3607 = vdwg.mxu0
    %3608 = vmatprep.subr.mxu0 %v3099
    %3609 = vmatpush1.msra.mxu0 %v3098
    %3610 = vmatprep.subr.mxu0 %v3083
    %3611 = vmatpush1.msra.mxu0 %v3082
    %3612 = vmatprep.subr.mxu0 %v3067
    %3613 = vmatpush1.msra.mxu0 %v3066
    %3614 = vmatprep.subr.mxu0 %v3051
    %3615 = vmatpush1.msra.mxu0 %v3050
    %3616 = vmatprep.subr.mxu0 %v3035
    %3617 = vmatpush1.msra.mxu0 %v3034
    %3618 = vmatprep.subr.mxu0 %v3019
    %3619 = vmatpush1.msra.mxu0 %v3018
    %3620 = vmatprep.subr.mxu0 %v3003
    %3621 = vmatpush1.msra.mxu0 %v3002
    %3622 = vmatprep.subr.mxu0 %v2987
    %3623 = vmatpush1.msra.mxu0 %v2986
    %3624 = vmatprep.subr.mxu0 %v2971
    %3625 = vmatpush1.msra.mxu0 %v2970
    %3626 = vmatprep.subr.mxu0 %v2955
    %3627 = vmatpush1.msra.mxu0 %v2954
    %3628 = vmatprep.subr.mxu0 %v2939
    %3629 = vmatpush1.msra.mxu0 %v2938
    %3630 = vmatprep.subr.mxu0 %v2923
    %3631 = vmatpush1.msra.mxu0 %v2922
    %3632 = vmatprep.subr.mxu0 %v2907
    %3633 = vmatpush1.msra.mxu0 %v2906
    %3634 = vmatprep.subr.mxu0 %v2891
    %3635 = vmatpush1.msra.mxu0 %v2890
    %3636 = vmatprep.subr.mxu0 %v2875
    %3637 = vmatpush1.msra.mxu0 %v2874
    %3638 = vmatprep.subr.mxu0 %v2859
    %3639 = vmatpush1.msra.mxu0 %v2858
    %3640 = vmatprep.subr.mxu0 0.0
    %3641 = vmatpush2.msra.mxu0 0.0
    %3642 = vmatprep.subr.mxu0 0.0
    %3643 = vmatpush2.msra.mxu0 0.0
    %3644 = vmatprep.subr.mxu0 0.0
    %3645 = vmatpush2.msra.mxu0 0.0
    %3646 = vmatprep.subr.mxu0 0.0
    %3647 = vmatpush2.msra.mxu0 0.0
    %3648 = vmatprep.subr.mxu0 0.0
    %3649 = vmatpush2.msra.mxu0 0.0
    %3650 = vmatprep.subr.mxu0 0.0
    %3651 = vmatpush2.msra.mxu0 0.0
    %3652 = vmatprep.subr.mxu0 0.0
    %3653 = vmatpush2.msra.mxu0 0.0
    %3654 = vmatprep.subr.mxu0 0.0
    %3655 = vmatpush2.msra.mxu0 0.0
    %3656 = vmatprep.subr.mxu0 0.0
    %3657 = vmatpush2.msra.mxu0 0.0
    %3658 = vmatprep.subr.mxu0 0.0
    %3659 = vmatpush2.msra.mxu0 0.0
    %3660 = vmatprep.subr.mxu0 0.0
    %3661 = vmatpush2.msra.mxu0 0.0
    %3662 = vmatprep.subr.mxu0 0.0
    %3663 = vmatpush2.msra.mxu0 0.0
    %3664 = vmatprep.subr.mxu0 0.0
    %3665 = vmatpush2.msra.mxu0 0.0
    %3666 = vmatprep.subr.mxu0 0.0
    %3667 = vmatpush2.msra.mxu0 0.0
    %3668 = vmatprep.subr.mxu0 0.0
    %3669 = vmatpush2.msra.mxu0 0.0
    %3670 = vmatprep.subr.mxu0 0.0
    %3671 = vmatpush2.msra.mxu0 0.0
    %3672 = vmatprep.mubr.f32.mxu0 0.0
    %3673 = vmatmul.mubr.f32.gmra.mxu0 %v3100
    %v3674 = vpop.f32.mrf.mxu0
    %v3675 = vadd.f32 %v3110, %v3674
    %v3676 = vpop.f32.mrf.mxu0
    %v3677 = vadd.f32 %v3110, %v3676
    %3678 = vdwg.mxu0
    %3679 = vst [vmem:[#allocation2] sm:$0x1] %v3178
    %3680 = vst [vmem:[#allocation2 + $0x1] sm:$0x1] %v3180
    %3681 = vst [vmem:[#allocation2 + $0x2] sm:$0x1] %v3249
    %3682 = vst [vmem:[#allocation2 + $0x3] sm:$0x1] %v3251
    %3683 = vst [vmem:[#allocation2 + $0x4] sm:$0x1] %v3320
    %3684 = vst [vmem:[#allocation2 + $0x5] sm:$0x1] %v3322
    %3685 = vst [vmem:[#allocation2 + $0x6] sm:$0x1] %v3391
    %3686 = vst [vmem:[#allocation2 + $0x7] sm:$0x1] %v3393
    %3687 = vst [vmem:[#allocation2 + $0x8] sm:$0x1] %v3462
    %3688 = vst [vmem:[#allocation2 + $0x9] sm:$0x1] %v3464
    %3689 = vst [vmem:[#allocation2 + $0xa] sm:$0x1] %v3533
    %3690 = vst [vmem:[#allocation2 + $0xb] sm:$0x1] %v3535
    %3691 = vst [vmem:[#allocation2 + $0xc] sm:$0x1] %v3604
    %3692 = vst [vmem:[#allocation2 + $0xd] sm:$0x1] %v3606
    %3693 = vst [vmem:[#allocation2 + $0xe] sm:$0x1] %v3675
    %3694 = vst [vmem:[#allocation2 + $0xf] sm:$0x1] %v3677
    // Predicated region
    $region26: #{tpu_custom_call.1} parent=1 // pred_check
      _
    $region27: #{tpu_custom_call.1} parent=1 // pred_check_branch
      %3696 = sbr.rel (0) target = $region29
    $region28: #{tpu_custom_call.1} parent=1 // pred_region
      %s3698 = ssub.s32 256, 256
      %3699 = vsyncadd [#allocation3], %s3698
      %s3700 = sshll.u32 [#allocation2], 4
      %s3701 = int_to_ptr.vmem [resolvable:$true] %s3700
      %3706 = dma.vmem_to_hbm [thread:$0]  %s3701, 256, %s6, [#allocation3], 128, 128, 8
    $region29: #{tpu_custom_call.1} parent=1 // pred_fallthru
      _
    // Predicated region
    $region30: #{tpu_custom_call.1} parent=1 // pred_check
      _
    $region31: #{tpu_custom_call.1} parent=1 // pred_check_branch
      %3708 = sbr.rel (0) target = $region33
    $region32: #{tpu_custom_call.1} parent=1 // pred_region
      %3709 = dma.done [#allocation3], 256
    $region33: #{tpu_custom_call.1} parent=1 // pred_fallthru
      _
    %3710 = vsyncpa [#allocation3], 1

</llo_original>
